<compile_context>
chip_gen: v7x
topology: tpu7x:2x2x1
jax: 0.10.0
libtpu: 0.0.40
codegen_flags: <defaults>
</compile_context>

<pallas_src>
import functools
import math

import jax
import jax.numpy as jnp
from jax.experimental import pallas as pl
from jax.experimental.pallas import tpu as pltpu

LANES = 128


def _vmem_config():
    """Generation-aware VMEM limits (v7x: 64 MiB/TC, v5e/v6e: 128 MiB)."""
    cap = 64 << 20
    try:
        info_fn = getattr(pltpu, "get_tpu_info", None)
        if info_fn is not None:
            cap = int(getattr(info_fn(), "vmem_capacity_bytes", cap)) or cap
    except Exception:
        pass
    limit = max(32 << 20, min((cap * 3) // 4, cap - (8 << 20)))
    tile_budget = max(8 << 20, cap // 4)
    return limit, tile_budget


# ---------------------------------------------------------------------------
# Pallas kernel 1: multi-head self-attention (+ fused residual + BN partial
# stats) over super-sequences.  grid = (Bsup // Bt,), each step does a
# [Bt, Ssup, Dp] slab with a block-diagonal (per-graph) attention mask.
# ---------------------------------------------------------------------------
def _mha_kernel(x_ref, gq_ref, gk_ref, wqkv_ref, bqkv_ref, wo_ref, bo_ref,
                out_ref, sum_ref, sq_ref, o_buf, *, num_heads, dim_h):
    Bt, S, Dp = x_ref.shape          # S == Ssup (packed super-sequence length)
    D = dim_h
    H = num_heads
    dh = D // H

    x = x_ref[...]                                   # [Bt, S, Dp] f32 (padded lanes = 0)
    x2 = x.reshape(Bt * S, Dp)

    # fused QKV projection: one bf16 MXU matmul + one bias add
    # (1/sqrt(dh) already folded into the Q columns of the weight/bias)
    qkv = jnp.dot(x2.astype(jnp.bfloat16), wqkv_ref[...],
                  preferred_element_type=jnp.float32) + bqkv_ref[...]   # [Bt*S, 3D]

    q = qkv[:, 0 * D:1 * D].reshape(Bt, S, D).astype(jnp.bfloat16)
    k = qkv[:, 1 * D:2 * D].reshape(Bt, S, D).astype(jnp.bfloat16)
    v = qkv[:, 2 * D:3 * D].reshape(Bt, S, D).astype(jnp.bfloat16)

    # block-diagonal attention bias from per-slot graph ids
    # (valid nodes keep their graph id >= 0; padded slots carry -1)
    gq = gq_ref[...]                                 # [Bt, S, 1] f32
    gk = gk_ref[...]                                 # [Bt, 1, S] f32
    bias = jnp.where(gq == gk, 0.0, -1e9)            # [Bt, S, S]

    for h in range(H):                               # static unroll, H small
        lo = h * dh
        qh = q[:, :, lo:lo + dh]                     # [Bt, S, dh]
        kh = k[:, :, lo:lo + dh]
        vh = v[:, :, lo:lo + dh]

        s = jnp.einsum('bqd,bkd->bqk', qh, kh,
                       preferred_element_type=jnp.float32)              # [Bt, S, S]
        s = s + bias
        s = s - jnp.max(s, axis=-1, keepdims=True)
        p = jnp.exp(s)
        # divide on the EUP (otherwise idle) instead of the VALU
        p = p * pl.reciprocal(jnp.sum(p, axis=-1, keepdims=True), approx=True)

        # heads land in contiguous dh-wide slices of the VMEM scratch
        o_buf[:, :, lo:lo + dh] = jnp.einsum(
            'bqk,bkd->bqd', p.astype(jnp.bfloat16), vh,
            preferred_element_type=jnp.float32)                         # [Bt, S, dh]

    # one consolidated out-projection (single K=D MXU pass) + fused residual
    o = o_buf[...].reshape(Bt * S, D)
    out = x2 + bo_ref[...] + jnp.dot(o.astype(jnp.bfloat16), wo_ref[...],
                                     preferred_element_type=jnp.float32)  # [Bt*S, Dp]
    out_ref[...] = out.reshape(Bt, S, Dp).astype(out_ref.dtype)

    # BN partial statistics over the valid rows only (fused epilogue)
    valid = (gq >= 0.0).astype(jnp.float32).reshape(Bt * S, 1)
    mo = out * valid
    sum_ref[...] = jnp.sum(mo, axis=0, keepdims=True).reshape(1, 1, Dp)
    sq_ref[...] = jnp.sum(mo * mo, axis=0, keepdims=True).reshape(1, 1, Dp)


def _choose_bt(bsup, ssup, dp, d, budget_bytes):
    """Pick super-sequences per grid step: target ~1024 resident rows while
    keeping the estimated resident set inside the generation-aware budget."""
    rows = ssup
    per = (4 * rows * dp * 4          # in + out blocks, double-buffered, f32
           + rows * 3 * d * 6         # qkv f32 + bf16 q/k/v copies
           + 3 * rows * rows * 4      # scores / exp / probs (f32, conservative)
           + rows * d * 4             # per-head output scratch (f32)
           + rows * dp * 4)           # out accumulator (f32)
    best = 1
    for bt in range(1, bsup + 1):
        if bsup % bt:
            continue
        if bt * per > budget_bytes:
            break
        best = bt
        if bt * ssup >= 1024:
            break
    return best


def mha_residual_dense(h_sup_p, gid_sup, params, num_heads, dim_h,
                       vmem_limit, tile_budget):
    """h_sup_p: [Bsup, Ssup, Dp] packed/padded features.  gid_sup: [Bsup, Ssup]
    per-slot graph id (f32, -1 for padded slots).  Returns (x + attn(x) dense,
    per-step BN partial sums, per-step BN partial sums of squares)."""
    Bsup, Ssup, Dp = h_sup_p.shape
    D = dim_h
    H = num_heads
    dh = D // H
    scale = 1.0 / math.sqrt(dh)

    # fold 1/sqrt(dh) into the Q rows of the in-projection (weight-side fold)
    in_w = params["in_proj_w"].at[:D].multiply(scale)          # [3D, D]
    in_b = params["in_proj_b"].at[:D].multiply(scale)          # [3D]
    w_qkv = jnp.pad(in_w.T, ((0, Dp - D), (0, 0))).astype(jnp.bfloat16)      # [Dp, 3D]
    b_qkv = in_b[None, :].astype(jnp.float32)                                # [1, 3D]
    w_o = jnp.pad(params["out_proj_w"].T, ((0, 0), (0, Dp - D))).astype(jnp.bfloat16)  # [D, Dp]
    b_o = jnp.pad(params["out_proj_b"], (0, Dp - D))[None, :].astype(jnp.float32)      # [1, Dp]

    gq = gid_sup[:, :, None]                                   # [Bsup, Ssup, 1]
    gk = gid_sup[:, None, :]                                   # [Bsup, 1, Ssup]

    Bt = _choose_bt(Bsup, Ssup, Dp, D, tile_budget)
    nsteps = Bsup // Bt

    kernel = functools.partial(_mha_kernel, num_heads=H, dim_h=D)
    return pl.pallas_call(
        kernel,
        out_shape=(
            jax.ShapeDtypeStruct((Bsup, Ssup, Dp), jnp.float32),
            jax.ShapeDtypeStruct((nsteps, 1, Dp), jnp.float32),
            jax.ShapeDtypeStruct((nsteps, 1, Dp), jnp.float32),
        ),
        grid_spec=pltpu.PrefetchScalarGridSpec(
            num_scalar_prefetch=0,
            grid=(nsteps,),
            in_specs=[
                pl.BlockSpec((Bt, Ssup, Dp), lambda b: (b, 0, 0)),   # x (packed, padded)
                pl.BlockSpec((Bt, Ssup, 1), lambda b: (b, 0, 0)),    # graph id (query axis)
                pl.BlockSpec((Bt, 1, Ssup), lambda b: (b, 0, 0)),    # graph id (key axis)
                pl.BlockSpec((Dp, 3 * D), lambda b: (0, 0)),         # W_qkv (fused, Q-scaled)
                pl.BlockSpec((1, 3 * D), lambda b: (0, 0)),          # b_qkv
                pl.BlockSpec((D, Dp), lambda b: (0, 0)),             # W_o
                pl.BlockSpec((1, Dp), lambda b: (0, 0)),             # b_o
            ],
            out_specs=(
                pl.BlockSpec((Bt, Ssup, Dp), lambda b: (b, 0, 0)),   # x + attn(x)
                pl.BlockSpec((1, 1, Dp), lambda b: (b, 0, 0)),       # BN partial sum
                pl.BlockSpec((1, 1, Dp), lambda b: (b, 0, 0)),       # BN partial sum of squares
            ),
            scratch_shapes=[pltpu.VMEM((Bt, Ssup, D), jnp.float32)], # per-head output buffer
        ),
        compiler_params=pltpu.CompilerParams(
            dimension_semantics=("parallel",),   # independent super-graphs -> both TCs on v7x
            vmem_limit_bytes=vmem_limit,
        ),
    )(h_sup_p, gq, gk, w_qkv, b_qkv, w_o, b_o)


# ---------------------------------------------------------------------------
# Pallas kernel 2: BatchNorm apply (precomputed scale/shift) + ReLU, tiled
# over (row tiles, 128-lane feature tiles), both "parallel".
# ---------------------------------------------------------------------------
def _bn_apply_kernel(h_ref, scale_ref, shift_ref, out_ref):
    out_ref[...] = jnp.maximum(
        h_ref[...] * scale_ref[...] + shift_ref[...], 0.0).astype(out_ref.dtype)


def bn_apply_relu(h, bn_scale, bn_shift, vmem_limit):
    """h: [N, Dp].  Returns relu(h * bn_scale + bn_shift), same shape."""
    N, Dp = h.shape
    tn = min(1024, 8 * pl.cdiv(N, 8))
    Np = tn * pl.cdiv(N, tn)
    if Np != N:
        h = jnp.pad(h, ((0, Np - N), (0, 0)))
    out = pl.pallas_call(
        _bn_apply_kernel,
        out_shape=jax.ShapeDtypeStruct((Np, Dp), jnp.float32),
        grid=(Np // tn, Dp // LANES),
        in_specs=[
            pl.BlockSpec((tn, LANES), lambda i, j: (i, j)),
            pl.BlockSpec((1, LANES), lambda i, j: (0, j)),
            pl.BlockSpec((1, LANES), lambda i, j: (0, j)),
        ],
        out_specs=pl.BlockSpec((tn, LANES), lambda i, j: (i, j)),
        compiler_params=pltpu.CompilerParams(
            dimension_semantics=("parallel", "parallel"),
            vmem_limit_bytes=vmem_limit,
        ),
    )(h, bn_scale[None, :], bn_shift[None, :])
    return out[:N]


# ---------------------------------------------------------------------------
# Glue: to_dense_batch + super-sequence packing + full SingleLayer forward
# ---------------------------------------------------------------------------
def to_dense_batch(x, batch_ids, num_graphs, max_nodes):
    # assumes batch_ids are sorted (PyG convention: each graph's nodes contiguous)
    N = x.shape[0]
    counts = jnp.bincount(batch_ids, length=num_graphs)
    offsets = jnp.concatenate(
        [jnp.zeros((1,), jnp.int32), jnp.cumsum(counts)[:-1].astype(jnp.int32)])
    pos = jnp.arange(N, dtype=jnp.int32) - offsets[batch_ids]
    dense = jnp.zeros((num_graphs, max_nodes, x.shape[1]), x.dtype)
    dense = dense.at[batch_ids, pos].set(x)
    mask = jnp.zeros((num_graphs, max_nodes), bool).at[batch_ids, pos].set(True)
    return dense, mask, pos


def single_layer_forward(x, batch_ids, params, *, num_heads, num_graphs, max_nodes):
    N, D = x.shape
    Dp = LANES * pl.cdiv(D, LANES)            # lane-dense padded feature width
    S = max_nodes
    B = num_graphs

    vmem_limit, tile_budget = _vmem_config()

    h_dense, mask, pos = to_dense_batch(x, batch_ids, B, S)      # [B,S,D], [B,S]

    # pack G graphs along the sequence axis into lane-dense super-sequences
    G = max(1, LANES // S) if S < LANES else 1
    Bp = G * pl.cdiv(B, G)
    Bsup = Bp // G
    Ssup = G * S
    if Bp != B:
        h_dense = jnp.pad(h_dense, ((0, Bp - B), (0, 0), (0, 0)))
        mask = jnp.pad(mask, ((0, Bp - B), (0, 0)))
    gid = jnp.where(mask, jnp.arange(Bp, dtype=jnp.float32)[:, None], -1.0)   # [Bp, S]
    h_sup = h_dense.reshape(Bsup, Ssup, D)
    gid_sup = gid.reshape(Bsup, Ssup)
    h_sup_p = jnp.pad(h_sup, ((0, 0), (0, 0), (0, Dp - D)))                   # [Bsup,Ssup,Dp]

    # attention with fused residual + fused BN partial statistics
    res_dense, psum, psq = mha_residual_dense(
        h_sup_p, gid_sup, params, num_heads, D, vmem_limit, tile_budget)

    # BatchNorm batch statistics (train-mode forward, biased variance)
    total_sum = jnp.sum(psum, axis=(0, 1))                   # [Dp]
    total_sq = jnp.sum(psq, axis=(0, 1))
    mean = total_sum / N
    var = jnp.maximum(total_sq / N - mean * mean, 0.0)
    inv_std = jax.lax.rsqrt(var + 1e-5)
    gamma_p = jnp.pad(params["bn_gamma"], (0, Dp - D), constant_values=1.0)
    beta_p = jnp.pad(params["bn_beta"], (0, Dp - D))
    bn_scale = gamma_p * inv_std
    bn_shift = beta_p - mean * bn_scale

    # gather valid node rows back to compact [N, Dp]; dropout(p=0) is identity
    # TODO(synk): a scalar-prefetch compact-output MHA kernel would avoid this
    # dense HBM write + XLA gather roundtrip entirely.
    h = res_dense.reshape(Bp * S, Dp)[batch_ids * S + pos]

    out_p = bn_apply_relu(h, bn_scale, bn_shift, vmem_limit)                 # [N, Dp]
    return out_p[:, :D]
    # TODO(synk): BatchNorm running_mean/running_var state update is not modeled
    # (forward uses batch statistics, matching train-mode forward).


# ---------------------------------------------------------------------------
# Deterministic parameter init (shapes per nn.MultiheadAttention / BatchNorm1d)
# ---------------------------------------------------------------------------
def init_params(key, dim_h):
    k1, k2 = jax.random.split(key)
    bound = math.sqrt(6.0 / (dim_h + 3 * dim_h))   # xavier-uniform for in_proj
    in_proj_w = jax.random.uniform(k1, (3 * dim_h, dim_h), jnp.float32, -bound, bound)
    in_proj_b = jnp.zeros((3 * dim_h,), jnp.float32)
    ob = 1.0 / math.sqrt(dim_h)
    out_proj_w = jax.random.uniform(k2, (dim_h, dim_h), jnp.float32, -ob, ob)
    out_proj_b = jnp.zeros((dim_h,), jnp.float32)
    return dict(
        in_proj_w=in_proj_w, in_proj_b=in_proj_b,
        out_proj_w=out_proj_w, out_proj_b=out_proj_b,
        bn_gamma=jnp.ones((dim_h,), jnp.float32),
        bn_beta=jnp.zeros((dim_h,), jnp.float32),
    )


if __name__ == "__main__":
    dim_h = 32
    num_heads = 4
    graph_sizes = [8, 6]          # two graphs, padded dense seq-len = 8
    num_graphs = len(graph_sizes)
    max_nodes = max(graph_sizes)
    N = sum(graph_sizes)

    key = jax.random.PRNGKey(0)
    kx, kp = jax.random.split(key)
    x = jax.random.normal(kx, (N, dim_h), jnp.float32)
    batch_ids = jnp.concatenate(
        [jnp.full((s,), i, jnp.int32) for i, s in enumerate(graph_sizes)])
    params = init_params(kp, dim_h)

    out = single_layer_forward(
        x, batch_ids, params,
        num_heads=num_heads, num_graphs=num_graphs, max_nodes=max_nodes)
    out = jax.block_until_ready(out)
    assert out.shape == (N, dim_h)
    assert bool(jnp.all(jnp.isfinite(out)))
    print("KERNEL_OK")
</pallas_src>

<mosaic_0001>
module attributes {stable_mosaic.version = 11 : i64} {
  func.func @_mha_kernel(%arg0: i32, %arg1: memref<1x128x128xf32, #tpu.memory_space<vmem>>, %arg2: memref<1x128x1xf32, #tpu.memory_space<vmem>>, %arg3: memref<1x1x128xf32, #tpu.memory_space<vmem>>, %arg4: memref<128x96xbf16, #tpu.memory_space<vmem>>, %arg5: memref<1x96xf32, #tpu.memory_space<vmem>>, %arg6: memref<32x128xbf16, #tpu.memory_space<vmem>>, %arg7: memref<1x128xf32, #tpu.memory_space<vmem>>, %arg8: memref<1x128x128xf32, #tpu.memory_space<vmem>>, %arg9: memref<1x1x128xf32, #tpu.memory_space<vmem>>, %arg10: memref<1x1x128xf32, #tpu.memory_space<vmem>>, %arg11: memref<1x128x32xf32, #tpu.memory_space<vmem>>) attributes {dimension_semantics = [#tpu.dimension_semantics<parallel>], iteration_bounds = array<i64: 1>, scalar_prefetch = 0 : i64, scratch_operands = 1 : i64, tpu.core_type = #tpu.core_type<tc>, window_params = [{transform_indices = @transform_0, window_bounds = array<i64: 1, 128, 128>}, {transform_indices = @transform_1, window_bounds = array<i64: 1, 128, 1>}, {transform_indices = @transform_2, window_bounds = array<i64: 1, 1, 128>}, {pipeline_mode = #tpu.pipeline_mode<synchronous>, transform_indices = @transform_3, window_bounds = array<i64: 128, 96>}, {pipeline_mode = #tpu.pipeline_mode<synchronous>, transform_indices = @transform_4, window_bounds = array<i64: 1, 96>}, {pipeline_mode = #tpu.pipeline_mode<synchronous>, transform_indices = @transform_5, window_bounds = array<i64: 32, 128>}, {pipeline_mode = #tpu.pipeline_mode<synchronous>, transform_indices = @transform_6, window_bounds = array<i64: 1, 128>}, {transform_indices = @transform_7, window_bounds = array<i64: 1, 128, 128>}, {transform_indices = @transform_8, window_bounds = array<i64: 1, 1, 128>}, {transform_indices = @transform_9, window_bounds = array<i64: 1, 1, 128>}]} {
    %c0 = arith.constant 0 : index
    %c0_0 = arith.constant 0 : index
    %c0_1 = arith.constant 0 : index
    %0 = vector.load %arg1[%c0, %c0_0, %c0_1] : memref<1x128x128xf32, #tpu.memory_space<vmem>>, vector<1x128x128xf32>
    %1 = vector.shape_cast %0 : vector<1x128x128xf32> to vector<128x128xf32>
    %2 = arith.truncf %1 : vector<128x128xf32> to vector<128x128xbf16>
    %c0_2 = arith.constant 0 : index
    %c0_3 = arith.constant 0 : index
    %3 = vector.load %arg4[%c0_2, %c0_3] : memref<128x96xbf16, #tpu.memory_space<vmem>>, vector<128x96xbf16>
    %cst = arith.constant dense<0.000000e+00> : vector<128x96xf32>
    %4 = tpu.matmul %2, %3, %cst {dimension_numbers = #tpu.dot_dimension_numbers<[1], [0], [0], [1], [0, 0, 1, 1], [], []>} : vector<128x128xbf16>, vector<128x96xbf16>, vector<128x96xf32> -> vector<128x96xf32>
    %c0_4 = arith.constant 0 : index
    %c0_5 = arith.constant 0 : index
    %5 = vector.load %arg5[%c0_4, %c0_5] : memref<1x96xf32, #tpu.memory_space<vmem>>, vector<1x96xf32>
    %6 = vector.broadcast %5 : vector<1x96xf32> to vector<128x96xf32>
    %7 = arith.addf %4, %6 : vector<128x96xf32>
    %8 = vector.extract_strided_slice %7 {offsets = [0, 0], sizes = [128, 32], strides = [1, 1]} : vector<128x96xf32> to vector<128x32xf32>
    %9 = vector.shape_cast %8 : vector<128x32xf32> to vector<1x128x32xf32>
    %10 = arith.truncf %9 : vector<1x128x32xf32> to vector<1x128x32xbf16>
    %11 = vector.extract_strided_slice %7 {offsets = [0, 32], sizes = [128, 32], strides = [1, 1]} : vector<128x96xf32> to vector<128x32xf32>
    %12 = vector.shape_cast %11 : vector<128x32xf32> to vector<1x128x32xf32>
    %13 = arith.truncf %12 : vector<1x128x32xf32> to vector<1x128x32xbf16>
    %14 = vector.extract_strided_slice %7 {offsets = [0, 64], sizes = [128, 32], strides = [1, 1]} : vector<128x96xf32> to vector<128x32xf32>
    %15 = vector.shape_cast %14 : vector<128x32xf32> to vector<1x128x32xf32>
    %16 = arith.truncf %15 : vector<1x128x32xf32> to vector<1x128x32xbf16>
    %c0_6 = arith.constant 0 : index
    %c0_7 = arith.constant 0 : index
    %c0_8 = arith.constant 0 : index
    %17 = vector.load %arg2[%c0_6, %c0_7, %c0_8] : memref<1x128x1xf32, #tpu.memory_space<vmem>>, vector<1x128x1xf32>
    %c0_9 = arith.constant 0 : index
    %c0_10 = arith.constant 0 : index
    %c0_11 = arith.constant 0 : index
    %18 = vector.load %arg3[%c0_9, %c0_10, %c0_11] : memref<1x1x128xf32, #tpu.memory_space<vmem>>, vector<1x1x128xf32>
    %19 = vector.broadcast %17 : vector<1x128x1xf32> to vector<1x128x128xf32>
    %20 = vector.broadcast %18 : vector<1x1x128xf32> to vector<1x128x128xf32>
    %21 = arith.cmpf oeq, %19, %20 : vector<1x128x128xf32>
    %cst_12 = arith.constant 0.000000e+00 : f32
    %cst_13 = arith.constant -1.000000e+09 : f32
    %22 = vector.broadcast %cst_12 : f32 to vector<1x128x128xf32>
    %23 = vector.broadcast %cst_13 : f32 to vector<1x128x128xf32>
    %24 = arith.select %21, %22, %23 : vector<1x128x128xi1>, vector<1x128x128xf32>
    %25 = vector.extract_strided_slice %10 {offsets = [0, 0, 0], sizes = [1, 128, 8], strides = [1, 1, 1]} : vector<1x128x32xbf16> to vector<1x128x8xbf16>
    %26 = vector.extract_strided_slice %13 {offsets = [0, 0, 0], sizes = [1, 128, 8], strides = [1, 1, 1]} : vector<1x128x32xbf16> to vector<1x128x8xbf16>
    %27 = vector.extract_strided_slice %16 {offsets = [0, 0, 0], sizes = [1, 128, 8], strides = [1, 1, 1]} : vector<1x128x32xbf16> to vector<1x128x8xbf16>
    "tpu.trace_start"() <{level = 10 : i32, message = "bqd,bkd->bqk"}> : () -> ()
    %cst_14 = arith.constant dense<0.000000e+00> : vector<1x128x128xf32>
    %28 = tpu.matmul %25, %26, %cst_14 {dimension_numbers = #tpu.dot_dimension_numbers<[2], [2], [1], [1], [0, 0, 0, 1, 1, 1], [0], [0]>} : vector<1x128x8xbf16>, vector<1x128x8xbf16>, vector<1x128x128xf32> -> vector<1x128x128xf32>
    "tpu.trace_stop"() : () -> ()
    %29 = arith.addf %28, %24 : vector<1x128x128xf32>
    %cst_15 = arith.constant dense<0xFF800000> : vector<1x128xf32>
    %30 = vector.multi_reduction <maximumf>, %29, %cst_15 [2] : vector<1x128x128xf32> to vector<1x128xf32>
    %31 = vector.shape_cast %30 : vector<1x128xf32> to vector<1x128x1xf32>
    %32 = vector.broadcast %31 : vector<1x128x1xf32> to vector<1x128x128xf32>
    %33 = arith.subf %29, %32 : vector<1x128x128xf32>
    %34 = math.exp %33 : vector<1x128x128xf32>
    %cst_16 = arith.constant dense<0.000000e+00> : vector<1x128xf32>
    %35 = vector.multi_reduction <add>, %34, %cst_16 [2] : vector<1x128x128xf32> to vector<1x128xf32>
    %36 = vector.shape_cast %35 : vector<1x128xf32> to vector<1x128x1xf32>
    %37 = tpu.reciprocal %36 {approx = true} : vector<1x128x1xf32> -> vector<1x128x1xf32>
    %38 = vector.broadcast %37 : vector<1x128x1xf32> to vector<1x128x128xf32>
    %39 = arith.mulf %34, %38 : vector<1x128x128xf32>
    %40 = arith.truncf %39 : vector<1x128x128xf32> to vector<1x128x128xbf16>
    "tpu.trace_start"() <{level = 10 : i32, message = "bqk,bkd->bqd"}> : () -> ()
    %cst_17 = arith.constant dense<0.000000e+00> : vector<1x128x8xf32>
    %41 = tpu.matmul %40, %27, %cst_17 {dimension_numbers = #tpu.dot_dimension_numbers<[2], [1], [1], [2], [0, 0, 0, 1, 1, 2], [0], [0]>} : vector<1x128x128xbf16>, vector<1x128x8xbf16>, vector<1x128x8xf32> -> vector<1x128x8xf32>
    "tpu.trace_stop"() : () -> ()
    %c0_18 = arith.constant 0 : index
    %c0_19 = arith.constant 0 : index
    %c0_20 = arith.constant 0 : index
    %42 = vector.load %arg11[%c0_18, %c0_19, %c0_20] : memref<1x128x32xf32, #tpu.memory_space<vmem>>, vector<1x128x8xf32>
    tpu.vector_store %arg11[%c0_18, %c0_19, %c0_20], %41 {strides = array<i32>} : memref<1x128x32xf32, #tpu.memory_space<vmem>>, vector<1x128x8xf32>,
    %43 = vector.extract_strided_slice %10 {offsets = [0, 0, 8], sizes = [1, 128, 8], strides = [1, 1, 1]} : vector<1x128x32xbf16> to vector<1x128x8xbf16>
    %44 = vector.extract_strided_slice %13 {offsets = [0, 0, 8], sizes = [1, 128, 8], strides = [1, 1, 1]} : vector<1x128x32xbf16> to vector<1x128x8xbf16>
    %45 = vector.extract_strided_slice %16 {offsets = [0, 0, 8], sizes = [1, 128, 8], strides = [1, 1, 1]} : vector<1x128x32xbf16> to vector<1x128x8xbf16>
    "tpu.trace_start"() <{level = 10 : i32, message = "bqd,bkd->bqk"}> : () -> ()
    %cst_21 = arith.constant dense<0.000000e+00> : vector<1x128x128xf32>
    %46 = tpu.matmul %43, %44, %cst_21 {dimension_numbers = #tpu.dot_dimension_numbers<[2], [2], [1], [1], [0, 0, 0, 1, 1, 1], [0], [0]>} : vector<1x128x8xbf16>, vector<1x128x8xbf16>, vector<1x128x128xf32> -> vector<1x128x128xf32>
    "tpu.trace_stop"() : () -> ()
    %47 = arith.addf %46, %24 : vector<1x128x128xf32>
    %cst_22 = arith.constant dense<0xFF800000> : vector<1x128xf32>
    %48 = vector.multi_reduction <maximumf>, %47, %cst_22 [2] : vector<1x128x128xf32> to vector<1x128xf32>
    %49 = vector.shape_cast %48 : vector<1x128xf32> to vector<1x128x1xf32>
    %50 = vector.broadcast %49 : vector<1x128x1xf32> to vector<1x128x128xf32>
    %51 = arith.subf %47, %50 : vector<1x128x128xf32>
    %52 = math.exp %51 : vector<1x128x128xf32>
    %cst_23 = arith.constant dense<0.000000e+00> : vector<1x128xf32>
    %53 = vector.multi_reduction <add>, %52, %cst_23 [2] : vector<1x128x128xf32> to vector<1x128xf32>
    %54 = vector.shape_cast %53 : vector<1x128xf32> to vector<1x128x1xf32>
    %55 = tpu.reciprocal %54 {approx = true} : vector<1x128x1xf32> -> vector<1x128x1xf32>
    %56 = vector.broadcast %55 : vector<1x128x1xf32> to vector<1x128x128xf32>
    %57 = arith.mulf %52, %56 : vector<1x128x128xf32>
    %58 = arith.truncf %57 : vector<1x128x128xf32> to vector<1x128x128xbf16>
    "tpu.trace_start"() <{level = 10 : i32, message = "bqk,bkd->bqd"}> : () -> ()
    %cst_24 = arith.constant dense<0.000000e+00> : vector<1x128x8xf32>
    %59 = tpu.matmul %58, %45, %cst_24 {dimension_numbers = #tpu.dot_dimension_numbers<[2], [1], [1], [2], [0, 0, 0, 1, 1, 2], [0], [0]>} : vector<1x128x128xbf16>, vector<1x128x8xbf16>, vector<1x128x8xf32> -> vector<1x128x8xf32>
    "tpu.trace_stop"() : () -> ()
    %c0_25 = arith.constant 0 : index
    %c0_26 = arith.constant 0 : index
    %c8 = arith.constant 8 : index
    %60 = vector.load %arg11[%c0_25, %c0_26, %c8] : memref<1x128x32xf32, #tpu.memory_space<vmem>>, vector<1x128x8xf32>
    tpu.vector_store %arg11[%c0_25, %c0_26, %c8], %59 {strides = array<i32>} : memref<1x128x32xf32, #tpu.memory_space<vmem>>, vector<1x128x8xf32>,
    %61 = vector.extract_strided_slice %10 {offsets = [0, 0, 16], sizes = [1, 128, 8], strides = [1, 1, 1]} : vector<1x128x32xbf16> to vector<1x128x8xbf16>
    %62 = vector.extract_strided_slice %13 {offsets = [0, 0, 16], sizes = [1, 128, 8], strides = [1, 1, 1]} : vector<1x128x32xbf16> to vector<1x128x8xbf16>
    %63 = vector.extract_strided_slice %16 {offsets = [0, 0, 16], sizes = [1, 128, 8], strides = [1, 1, 1]} : vector<1x128x32xbf16> to vector<1x128x8xbf16>
    "tpu.trace_start"() <{level = 10 : i32, message = "bqd,bkd->bqk"}> : () -> ()
    %cst_27 = arith.constant dense<0.000000e+00> : vector<1x128x128xf32>
    %64 = tpu.matmul %61, %62, %cst_27 {dimension_numbers = #tpu.dot_dimension_numbers<[2], [2], [1], [1], [0, 0, 0, 1, 1, 1], [0], [0]>} : vector<1x128x8xbf16>, vector<1x128x8xbf16>, vector<1x128x128xf32> -> vector<1x128x128xf32>
    "tpu.trace_stop"() : () -> ()
    %65 = arith.addf %64, %24 : vector<1x128x128xf32>
    %cst_28 = arith.constant dense<0xFF800000> : vector<1x128xf32>
    %66 = vector.multi_reduction <maximumf>, %65, %cst_28 [2] : vector<1x128x128xf32> to vector<1x128xf32>
    %67 = vector.shape_cast %66 : vector<1x128xf32> to vector<1x128x1xf32>
    %68 = vector.broadcast %67 : vector<1x128x1xf32> to vector<1x128x128xf32>
    %69 = arith.subf %65, %68 : vector<1x128x128xf32>
    %70 = math.exp %69 : vector<1x128x128xf32>
    %cst_29 = arith.constant dense<0.000000e+00> : vector<1x128xf32>
    %71 = vector.multi_reduction <add>, %70, %cst_29 [2] : vector<1x128x128xf32> to vector<1x128xf32>
    %72 = vector.shape_cast %71 : vector<1x128xf32> to vector<1x128x1xf32>
    %73 = tpu.reciprocal %72 {approx = true} : vector<1x128x1xf32> -> vector<1x128x1xf32>
    %74 = vector.broadcast %73 : vector<1x128x1xf32> to vector<1x128x128xf32>
    %75 = arith.mulf %70, %74 : vector<1x128x128xf32>
    %76 = arith.truncf %75 : vector<1x128x128xf32> to vector<1x128x128xbf16>
    "tpu.trace_start"() <{level = 10 : i32, message = "bqk,bkd->bqd"}> : () -> ()
    %cst_30 = arith.constant dense<0.000000e+00> : vector<1x128x8xf32>
    %77 = tpu.matmul %76, %63, %cst_30 {dimension_numbers = #tpu.dot_dimension_numbers<[2], [1], [1], [2], [0, 0, 0, 1, 1, 2], [0], [0]>} : vector<1x128x128xbf16>, vector<1x128x8xbf16>, vector<1x128x8xf32> -> vector<1x128x8xf32>
    "tpu.trace_stop"() : () -> ()
    %c0_31 = arith.constant 0 : index
    %c0_32 = arith.constant 0 : index
    %c16 = arith.constant 16 : index
    %78 = vector.load %arg11[%c0_31, %c0_32, %c16] : memref<1x128x32xf32, #tpu.memory_space<vmem>>, vector<1x128x8xf32>
    tpu.vector_store %arg11[%c0_31, %c0_32, %c16], %77 {strides = array<i32>} : memref<1x128x32xf32, #tpu.memory_space<vmem>>, vector<1x128x8xf32>,
    %79 = vector.extract_strided_slice %10 {offsets = [0, 0, 24], sizes = [1, 128, 8], strides = [1, 1, 1]} : vector<1x128x32xbf16> to vector<1x128x8xbf16>
    %80 = vector.extract_strided_slice %13 {offsets = [0, 0, 24], sizes = [1, 128, 8], strides = [1, 1, 1]} : vector<1x128x32xbf16> to vector<1x128x8xbf16>
    %81 = vector.extract_strided_slice %16 {offsets = [0, 0, 24], sizes = [1, 128, 8], strides = [1, 1, 1]} : vector<1x128x32xbf16> to vector<1x128x8xbf16>
    "tpu.trace_start"() <{level = 10 : i32, message = "bqd,bkd->bqk"}> : () -> ()
    %cst_33 = arith.constant dense<0.000000e+00> : vector<1x128x128xf32>
    %82 = tpu.matmul %79, %80, %cst_33 {dimension_numbers = #tpu.dot_dimension_numbers<[2], [2], [1], [1], [0, 0, 0, 1, 1, 1], [0], [0]>} : vector<1x128x8xbf16>, vector<1x128x8xbf16>, vector<1x128x128xf32> -> vector<1x128x128xf32>
    "tpu.trace_stop"() : () -> ()
    %83 = arith.addf %82, %24 : vector<1x128x128xf32>
    %cst_34 = arith.constant dense<0xFF800000> : vector<1x128xf32>
    %84 = vector.multi_reduction <maximumf>, %83, %cst_34 [2] : vector<1x128x128xf32> to vector<1x128xf32>
    %85 = vector.shape_cast %84 : vector<1x128xf32> to vector<1x128x1xf32>
    %86 = vector.broadcast %85 : vector<1x128x1xf32> to vector<1x128x128xf32>
    %87 = arith.subf %83, %86 : vector<1x128x128xf32>
    %88 = math.exp %87 : vector<1x128x128xf32>
    %cst_35 = arith.constant dense<0.000000e+00> : vector<1x128xf32>
    %89 = vector.multi_reduction <add>, %88, %cst_35 [2] : vector<1x128x128xf32> to vector<1x128xf32>
    %90 = vector.shape_cast %89 : vector<1x128xf32> to vector<1x128x1xf32>
    %91 = tpu.reciprocal %90 {approx = true} : vector<1x128x1xf32> -> vector<1x128x1xf32>
    %92 = vector.broadcast %91 : vector<1x128x1xf32> to vector<1x128x128xf32>
    %93 = arith.mulf %88, %92 : vector<1x128x128xf32>
    %94 = arith.truncf %93 : vector<1x128x128xf32> to vector<1x128x128xbf16>
    "tpu.trace_start"() <{level = 10 : i32, message = "bqk,bkd->bqd"}> : () -> ()
    %cst_36 = arith.constant dense<0.000000e+00> : vector<1x128x8xf32>
    %95 = tpu.matmul %94, %81, %cst_36 {dimension_numbers = #tpu.dot_dimension_numbers<[2], [1], [1], [2], [0, 0, 0, 1, 1, 2], [0], [0]>} : vector<1x128x128xbf16>, vector<1x128x8xbf16>, vector<1x128x8xf32> -> vector<1x128x8xf32>
    "tpu.trace_stop"() : () -> ()
    %c0_37 = arith.constant 0 : index
    %c0_38 = arith.constant 0 : index
    %c24 = arith.constant 24 : index
    %96 = vector.load %arg11[%c0_37, %c0_38, %c24] : memref<1x128x32xf32, #tpu.memory_space<vmem>>, vector<1x128x8xf32>
    tpu.vector_store %arg11[%c0_37, %c0_38, %c24], %95 {strides = array<i32>} : memref<1x128x32xf32, #tpu.memory_space<vmem>>, vector<1x128x8xf32>,
    %c0_39 = arith.constant 0 : index
    %c0_40 = arith.constant 0 : index
    %c0_41 = arith.constant 0 : index
    %97 = vector.load %arg11[%c0_39, %c0_40, %c0_41] : memref<1x128x32xf32, #tpu.memory_space<vmem>>, vector<1x128x32xf32>
    %98 = vector.shape_cast %97 : vector<1x128x32xf32> to vector<128x32xf32>
    %c0_42 = arith.constant 0 : index
    %c0_43 = arith.constant 0 : index
    %99 = vector.load %arg7[%c0_42, %c0_43] : memref<1x128xf32, #tpu.memory_space<vmem>>, vector<1x128xf32>
    %100 = vector.broadcast %99 : vector<1x128xf32> to vector<128x128xf32>
    %101 = arith.addf %1, %100 : vector<128x128xf32>
    %102 = arith.truncf %98 : vector<128x32xf32> to vector<128x32xbf16>
    %c0_44 = arith.constant 0 : index
    %c0_45 = arith.constant 0 : index
    %103 = vector.load %arg6[%c0_44, %c0_45] : memref<32x128xbf16, #tpu.memory_space<vmem>>, vector<32x128xbf16>
    %cst_46 = arith.constant dense<0.000000e+00> : vector<128x128xf32>
    %104 = tpu.matmul %102, %103, %cst_46 {dimension_numbers = #tpu.dot_dimension_numbers<[1], [0], [0], [1], [0, 0, 1, 1], [], []>} : vector<128x32xbf16>, vector<32x128xbf16>, vector<128x128xf32> -> vector<128x128xf32>
    %105 = arith.addf %101, %104 : vector<128x128xf32>
    %106 = vector.shape_cast %105 : vector<128x128xf32> to vector<1x128x128xf32>
    %c0_47 = arith.constant 0 : index
    %c0_48 = arith.constant 0 : index
    %c0_49 = arith.constant 0 : index
    %107 = vector.load %arg8[%c0_47, %c0_48, %c0_49] : memref<1x128x128xf32, #tpu.memory_space<vmem>>, vector<1x128x128xf32>
    tpu.vector_store %arg8[%c0_47, %c0_48, %c0_49], %106 {strides = array<i32>} : memref<1x128x128xf32, #tpu.memory_space<vmem>>, vector<1x128x128xf32>,
    %cst_50 = arith.constant 0.000000e+00 : f32
    %108 = vector.broadcast %cst_50 : f32 to vector<1x128x1xf32>
    %109 = arith.cmpf oge, %17, %108 : vector<1x128x1xf32>
    %110 = arith.extui %109 : vector<1x128x1xi1> to vector<1x128x1xi32>
    %111 = arith.sitofp %110 : vector<1x128x1xi32> to vector<1x128x1xf32>
    %112 = vector.shape_cast %111 : vector<1x128x1xf32> to vector<128x1xf32>
    %113 = vector.broadcast %112 : vector<128x1xf32> to vector<128x128xf32>
    %114 = arith.mulf %105, %113 : vector<128x128xf32>
    %cst_51 = arith.constant dense<0.000000e+00> : vector<128xf32>
    %115 = vector.multi_reduction <add>, %114, %cst_51 [0] : vector<128x128xf32> to vector<128xf32>
    %116 = vector.shape_cast %115 : vector<128xf32> to vector<1x128xf32>
    %117 = vector.shape_cast %116 : vector<1x128xf32> to vector<1x1x128xf32>
    %c0_52 = arith.constant 0 : index
    %c0_53 = arith.constant 0 : index
    %c0_54 = arith.constant 0 : index
    %118 = vector.load %arg9[%c0_52, %c0_53, %c0_54] : memref<1x1x128xf32, #tpu.memory_space<vmem>>, vector<1x1x128xf32>
    tpu.vector_store %arg9[%c0_52, %c0_53, %c0_54], %117 {strides = array<i32>} : memref<1x1x128xf32, #tpu.memory_space<vmem>>, vector<1x1x128xf32>,
    %119 = arith.mulf %114, %114 : vector<128x128xf32>
    %cst_55 = arith.constant dense<0.000000e+00> : vector<128xf32>
    %120 = vector.multi_reduction <add>, %119, %cst_55 [0] : vector<128x128xf32> to vector<128xf32>
    %121 = vector.shape_cast %120 : vector<128xf32> to vector<1x128xf32>
    %122 = vector.shape_cast %121 : vector<1x128xf32> to vector<1x1x128xf32>
    %c0_56 = arith.constant 0 : index
    %c0_57 = arith.constant 0 : index
    %c0_58 = arith.constant 0 : index
    %123 = vector.load %arg10[%c0_56, %c0_57, %c0_58] : memref<1x1x128xf32, #tpu.memory_space<vmem>>, vector<1x1x128xf32>
    tpu.vector_store %arg10[%c0_56, %c0_57, %c0_58], %122 {strides = array<i32>} : memref<1x1x128xf32, #tpu.memory_space<vmem>>, vector<1x1x128xf32>,
    return
  }
  func.func @transform_0(%arg0: i32) -> (i32, i32, i32) {
    %c0_i32 = arith.constant 0 : i32
    %c0_i32_0 = arith.constant 0 : i32
    %c0_i32_1 = arith.constant 0 : i32
    return %arg0, %c0_i32, %c0_i32_0 : i32, i32, i32
  }
  func.func @transform_1(%arg0: i32) -> (i32, i32, i32) {
    %c0_i32 = arith.constant 0 : i32
    %c0_i32_0 = arith.constant 0 : i32
    %c0_i32_1 = arith.constant 0 : i32
    return %arg0, %c0_i32, %c0_i32_0 : i32, i32, i32
  }
  func.func @transform_2(%arg0: i32) -> (i32, i32, i32) {
    %c0_i32 = arith.constant 0 : i32
    %c0_i32_0 = arith.constant 0 : i32
    %c0_i32_1 = arith.constant 0 : i32
    return %arg0, %c0_i32, %c0_i32_0 : i32, i32, i32
  }
  func.func @transform_3(%arg0: i32) -> (i32, i32) {
    %c0_i32 = arith.constant 0 : i32
    %c0_i32_0 = arith.constant 0 : i32
    %c0_i32_1 = arith.constant 0 : i32
    return %c0_i32, %c0_i32_0 : i32, i32
  }
  func.func @transform_4(%arg0: i32) -> (i32, i32) {
    %c0_i32 = arith.constant 0 : i32
    %c0_i32_0 = arith.constant 0 : i32
    %c0_i32_1 = arith.constant 0 : i32
    return %c0_i32, %c0_i32_0 : i32, i32
  }
  func.func @transform_5(%arg0: i32) -> (i32, i32) {
    %c0_i32 = arith.constant 0 : i32
    %c0_i32_0 = arith.constant 0 : i32
    %c0_i32_1 = arith.constant 0 : i32
    return %c0_i32, %c0_i32_0 : i32, i32
  }
  func.func @transform_6(%arg0: i32) -> (i32, i32) {
    %c0_i32 = arith.constant 0 : i32
    %c0_i32_0 = arith.constant 0 : i32
    %c0_i32_1 = arith.constant 0 : i32
    return %c0_i32, %c0_i32_0 : i32, i32
  }
  func.func @transform_7(%arg0: i32) -> (i32, i32, i32) {
    %c0_i32 = arith.constant 0 : i32
    %c0_i32_0 = arith.constant 0 : i32
    %c0_i32_1 = arith.constant 0 : i32
    return %arg0, %c0_i32, %c0_i32_0 : i32, i32, i32
  }
  func.func @transform_8(%arg0: i32) -> (i32, i32, i32) {
    %c0_i32 = arith.constant 0 : i32
    %c0_i32_0 = arith.constant 0 : i32
    %c0_i32_1 = arith.constant 0 : i32
    return %arg0, %c0_i32, %c0_i32_0 : i32, i32, i32
  }
  func.func @transform_9(%arg0: i32) -> (i32, i32, i32) {
    %c0_i32 = arith.constant 0 : i32
    %c0_i32_0 = arith.constant 0 : i32
    %c0_i32_1 = arith.constant 0 : i32
    return %arg0, %c0_i32, %c0_i32_0 : i32, i32, i32
  }
}

</mosaic_0001>

<llo_original>
// kernel: tpu_custom_call.1
$region0: #{tpu_custom_call.1}
  #allocation0 [shape = 'u32[]', space=smem, size = 0x4, offset = 0x4, fixed_abs, tag = 'smem constant byte address 0x4 - core index']
  #allocation1 [shape = 'u32[144,128]{1,0:T(1,128)}', space=vmem, size = 0x12000, scoped, tag = 'internal scratch']
  #allocation2 [shape = 'f32[1,128,32]{2,1,0:T(8,128)}', space=vmem, size = 0x10000, scoped, tag = 'scratch operand']
  %s0 = inlined_call_operand.vmem [shape: f32[1,128,128], index: 0, kind: input, shape index: {}]
  %s1 = inlined_call_operand.vmem [shape: f32[1,128,1], index: 1, kind: input, shape index: {}]
  %s2 = inlined_call_operand.vmem [shape: f32[1,1,128], index: 2, kind: input, shape index: {}]
  %s3 = inlined_call_operand.vmem [shape: bf16[128,96], index: 3, kind: input, shape index: {}]
  %s4 = inlined_call_operand.vmem [shape: f32[1,96], index: 4, kind: input, shape index: {}]
  %s5 = inlined_call_operand.vmem [shape: bf16[32,128], index: 5, kind: input, shape index: {}]
  %s6 = inlined_call_operand.vmem [shape: f32[1,128], index: 6, kind: input, shape index: {}]
  %s7 = inlined_call_operand.hbm [shape: f32[1,128,128], index: 7, kind: output, shape index: {0}]
  %s8 = inlined_call_operand.hbm [shape: f32[1,1,128], index: 8, kind: output, shape index: {1}]
  %s9 = inlined_call_operand.hbm [shape: f32[1,1,128], index: 9, kind: output, shape index: {2}]
  %10 = xla_tuple %s7, %s8, %s9
  %s11 = sld [smem:[#allocation0]]
  $region54: #{tpu_custom_call.1} parent=0
    _
  %s13 = ssub.s32 1, %s11
  %s14 = scalar_select 0, %s13, %s11
  $region1: #{tpu_custom_call.1} parent=0
    #allocation3 [shape = 'u8[65536]{0}', space=vmem, size = 0x10000, scoped, tag = 'output window, operand 0, single buffered']
    #allocation4 [shape = 's32[1]{0}', space=sflag, size = 0x4, scoped, tag = 'scoped memory for tpu_custom_call.1']
    #allocation5 [shape = 'u8[512]{0}', space=vmem, size = 0x400, scoped, tag = 'output window, operand 1, single buffered']
    #allocation6 [shape = 's32[1]{0}', space=sflag, size = 0x4, scoped, tag = 'scoped memory for tpu_custom_call.1']
    #allocation7 [shape = 'u8[512]{0}', space=vmem, size = 0x400, scoped, tag = 'output window, operand 2, single buffered']
    %15 = vsyncpa [#allocation4], 0
    %16 = vsyncpa [#allocation6], 0
    // Predicated region
    $region2: #{tpu_custom_call.1} parent=1 // pred_check
      _
    $region3: #{tpu_custom_call.1} parent=1 // pred_check_branch
      %18 = sbr.rel (0) target = $region5
    $region4: #{tpu_custom_call.1} parent=1 // pred_region
      _
    $region5: #{tpu_custom_call.1} parent=1 // pred_fallthru
      _
    // Predicated region
    $region6: #{tpu_custom_call.1} parent=1 // pred_check
      _
    $region7: #{tpu_custom_call.1} parent=1 // pred_check_branch
      %20 = sbr.rel (0) target = $region9
    $region8: #{tpu_custom_call.1} parent=1 // pred_region
      _
    $region9: #{tpu_custom_call.1} parent=1 // pred_fallthru
      _
    // Predicated region
    $region10: #{tpu_custom_call.1} parent=1 // pred_check
      _
    $region11: #{tpu_custom_call.1} parent=1 // pred_check_branch
      %22 = sbr.rel (0) target = $region13
    $region12: #{tpu_custom_call.1} parent=1 // pred_region
      _
    $region13: #{tpu_custom_call.1} parent=1 // pred_fallthru
      _
    // Predicated region
    $region14: #{tpu_custom_call.1} parent=1 // pred_check
      _
    $region15: #{tpu_custom_call.1} parent=1 // pred_check_branch
      %24 = sbr.rel (0) target = $region17
    $region16: #{tpu_custom_call.1} parent=1 // pred_region
      _
    $region17: #{tpu_custom_call.1} parent=1 // pred_fallthru
      _
    // Predicated region
    $region18: #{tpu_custom_call.1} parent=1 // pred_check
      _
    $region19: #{tpu_custom_call.1} parent=1 // pred_check_branch
      %26 = sbr.rel (0) target = $region21
    $region20: #{tpu_custom_call.1} parent=1 // pred_region
      _
    $region21: #{tpu_custom_call.1} parent=1 // pred_fallthru
      _
    // Predicated region
    $region22: #{tpu_custom_call.1} parent=1 // pred_check
      _
    $region23: #{tpu_custom_call.1} parent=1 // pred_check_branch
      %28 = sbr.rel (0) target = $region25
    $region24: #{tpu_custom_call.1} parent=1 // pred_region
      _
    $region25: #{tpu_custom_call.1} parent=1 // pred_fallthru
      _
    // Predicated region
    $region26: #{tpu_custom_call.1} parent=1 // pred_check
      _
    $region27: #{tpu_custom_call.1} parent=1 // pred_check_branch
      %30 = sbr.rel (0) target = $region29
    $region28: #{tpu_custom_call.1} parent=1 // pred_region
      _
    $region29: #{tpu_custom_call.1} parent=1 // pred_fallthru
      _
    %v32 = vld [vmem:[%s0] sm:$0xff]
    %v33 = vld [vmem:[%s0 + $0x8] sm:$0xff]
    %v34 = vld [vmem:[%s0 + $0x10] sm:$0xff]
    %v35 = vld [vmem:[%s0 + $0x18] sm:$0xff]
    %v36 = vld [vmem:[%s0 + $0x20] sm:$0xff]
    %v37 = vld [vmem:[%s0 + $0x28] sm:$0xff]
    %v38 = vld [vmem:[%s0 + $0x30] sm:$0xff]
    %v39 = vld [vmem:[%s0 + $0x38] sm:$0xff]
    %v40 = vld [vmem:[%s0 + $0x40] sm:$0xff]
    %v41 = vld [vmem:[%s0 + $0x48] sm:$0xff]
    %v42 = vld [vmem:[%s0 + $0x50] sm:$0xff]
    %v43 = vld [vmem:[%s0 + $0x58] sm:$0xff]
    %v44 = vld [vmem:[%s0 + $0x60] sm:$0xff]
    %v45 = vld [vmem:[%s0 + $0x68] sm:$0xff]
    %v46 = vld [vmem:[%s0 + $0x70] sm:$0xff]
    %v47 = vld [vmem:[%s0 + $0x78] sm:$0xff]
    %v48 = vpack.c.bf16 %v33, %v32
    %v49 = vpack.c.bf16 %v35, %v34
    %v50 = vpack.c.bf16 %v37, %v36
    %v51 = vpack.c.bf16 %v39, %v38
    %v52 = vpack.c.bf16 %v41, %v40
    %v53 = vpack.c.bf16 %v43, %v42
    %v54 = vpack.c.bf16 %v45, %v44
    %v55 = vpack.c.bf16 %v47, %v46
    %v56 = vld [vmem:[%s3] sm:$0xf]
    %v57 = vld [vmem:[%s3 + $0x4] sm:$0xf]
    %v58 = vld [vmem:[%s3 + $0x8] sm:$0xf]
    %v59 = vld [vmem:[%s3 + $0xc] sm:$0xf]
    %v60 = vld [vmem:[%s3 + $0x10] sm:$0xf]
    %v61 = vld [vmem:[%s3 + $0x14] sm:$0xf]
    %v62 = vld [vmem:[%s3 + $0x18] sm:$0xf]
    %v63 = vld [vmem:[%s3 + $0x1c] sm:$0xf]
    %v64 = vld [vmem:[%s3 + $0x20] sm:$0xf]
    %v65 = vld [vmem:[%s3 + $0x24] sm:$0xf]
    %v66 = vld [vmem:[%s3 + $0x28] sm:$0xf]
    %v67 = vld [vmem:[%s3 + $0x2c] sm:$0xf]
    %v68 = vld [vmem:[%s3 + $0x30] sm:$0xf]
    %v69 = vld [vmem:[%s3 + $0x34] sm:$0xf]
    %v70 = vld [vmem:[%s3 + $0x38] sm:$0xf]
    %v71 = vld [vmem:[%s3 + $0x3c] sm:$0xf]
    %v72 = vld [vmem:[%s4] sm:$0x1]
    %v74 = vlaneseq
    %v75 = vshrl.u32 %v74, 7
    %v76 = vsub.s32 0, %v75
    %v77 = vrot.slane %v72, %v76
    %v95 = vunpack.c.l.b16 %v56
    %v96 = vunpack.c.l.b16 %v57
    %v97 = vunpack.c.l.b16 %v58
    %v98 = vunpack.c.l.b16 %v59
    %v99 = vunpack.c.l.b16 %v60
    %v100 = vunpack.c.l.b16 %v61
    %v101 = vunpack.c.l.b16 %v62
    %v102 = vunpack.c.l.b16 %v63
    %v103 = vunpack.c.l.b16 %v64
    %v104 = vunpack.c.l.b16 %v65
    %v105 = vunpack.c.l.b16 %v66
    %v106 = vunpack.c.l.b16 %v67
    %v107 = vunpack.c.l.b16 %v68
    %v108 = vunpack.c.l.b16 %v69
    %v109 = vunpack.c.l.b16 %v70
    %v110 = vunpack.c.l.b16 %v71
    %v111 = vpack.c.b16 %v96, %v95
    %v112 = vpack.c.b16 %v98, %v97
    %v113 = vpack.c.b16 %v100, %v99
    %v114 = vpack.c.b16 %v102, %v101
    %v115 = vpack.c.b16 %v104, %v103
    %v116 = vpack.c.b16 %v106, %v105
    %v117 = vpack.c.b16 %v108, %v107
    %v118 = vpack.c.b16 %v110, %v109
    %127 = vmatprep.subr.bf16.mxu0 0
    %128 = vmatpush1.bf16.msra.mxu0 %v111
    %129 = vmatprep.subr.bf16.mxu0 0
    %130 = vmatpush1.bf16.msra.mxu0 %v112
    %131 = vmatprep.subr.bf16.mxu0 0
    %132 = vmatpush1.bf16.msra.mxu0 %v113
    %133 = vmatprep.subr.bf16.mxu0 0
    %134 = vmatpush1.bf16.msra.mxu0 %v114
    %135 = vmatprep.subr.bf16.mxu0 0
    %136 = vmatpush1.bf16.msra.mxu0 %v115
    %137 = vmatprep.subr.bf16.mxu0 0
    %138 = vmatpush1.bf16.msra.mxu0 %v116
    %139 = vmatprep.subr.bf16.mxu0 0
    %140 = vmatpush1.bf16.msra.mxu0 %v117
    %141 = vmatprep.subr.bf16.mxu0 0
    %142 = vmatpush1.bf16.msra.mxu0 %v118
    %143 = vmatprep.subr.bf16.mxu0 0
    %144 = vmatpush1.bf16.msra.mxu0 0
    %145 = vmatprep.subr.bf16.mxu0 0
    %146 = vmatpush1.bf16.msra.mxu0 0
    %147 = vmatprep.subr.bf16.mxu0 0
    %148 = vmatpush1.bf16.msra.mxu0 0
    %149 = vmatprep.subr.bf16.mxu0 0
    %150 = vmatpush1.bf16.msra.mxu0 0
    %151 = vmatprep.subr.bf16.mxu0 0
    %152 = vmatpush1.bf16.msra.mxu0 0
    %153 = vmatprep.subr.bf16.mxu0 0
    %154 = vmatpush1.bf16.msra.mxu0 0
    %155 = vmatprep.subr.bf16.mxu0 0
    %156 = vmatpush1.bf16.msra.mxu0 0
    %157 = vmatprep.subr.bf16.mxu0 0
    %158 = vmatpush1.bf16.msra.mxu0 0
    %159 = vmatprep.mubr.bf16.mxu0 0
    %160 = vmatmul.mubr.bf16.gmra.mrb[0].mxu0 %v48
    %v161 = vpop.f32.mrb[0].mxu0
    %v162 = vadd.f32 %v77, %v161
    %v163 = vpop.f32.mrb[0].mxu0
    %v164 = vpop.f32.mrb[0].mxu0
    %v165 = vadd.f32 %v77, %v164
    %v166 = vpop.f32.mrb[0].mxu0
    %167 = vmatprep.mubr.bf16.mxu0 0
    %168 = vmatmul.mubr.bf16.gmra.mrb[0].mxu0 %v49
    %v169 = vpop.f32.mrb[0].mxu0
    %v170 = vadd.f32 %v77, %v169
    %v171 = vpop.f32.mrb[0].mxu0
    %v172 = vpop.f32.mrb[0].mxu0
    %v173 = vadd.f32 %v77, %v172
    %v174 = vpop.f32.mrb[0].mxu0
    %175 = vmatprep.mubr.bf16.mxu0 0
    %176 = vmatmul.mubr.bf16.gmra.mrb[0].mxu0 %v50
    %v177 = vpop.f32.mrb[0].mxu0
    %v178 = vadd.f32 %v77, %v177
    %v179 = vpop.f32.mrb[0].mxu0
    %v180 = vpop.f32.mrb[0].mxu0
    %v181 = vadd.f32 %v77, %v180
    %v182 = vpop.f32.mrb[0].mxu0
    %183 = vmatprep.mubr.bf16.mxu0 0
    %184 = vmatmul.mubr.bf16.gmra.mrb[0].mxu0 %v51
    %v185 = vpop.f32.mrb[0].mxu0
    %v186 = vadd.f32 %v77, %v185
    %v187 = vpop.f32.mrb[0].mxu0
    %v188 = vpop.f32.mrb[0].mxu0
    %v189 = vadd.f32 %v77, %v188
    %v190 = vpop.f32.mrb[0].mxu0
    %191 = vmatprep.mubr.bf16.mxu0 0
    %192 = vmatmul.mubr.bf16.gmra.mrb[0].mxu0 %v52
    %v193 = vpop.f32.mrb[0].mxu0
    %v194 = vadd.f32 %v77, %v193
    %v195 = vpop.f32.mrb[0].mxu0
    %v196 = vpop.f32.mrb[0].mxu0
    %v197 = vadd.f32 %v77, %v196
    %v198 = vpop.f32.mrb[0].mxu0
    %199 = vmatprep.mubr.bf16.mxu0 0
    %200 = vmatmul.mubr.bf16.gmra.mrb[0].mxu0 %v53
    %v201 = vpop.f32.mrb[0].mxu0
    %v202 = vadd.f32 %v77, %v201
    %v203 = vpop.f32.mrb[0].mxu0
    %v204 = vpop.f32.mrb[0].mxu0
    %v205 = vadd.f32 %v77, %v204
    %v206 = vpop.f32.mrb[0].mxu0
    %207 = vmatprep.mubr.bf16.mxu0 0
    %208 = vmatmul.mubr.bf16.gmra.mrb[0].mxu0 %v54
    %v209 = vpop.f32.mrb[0].mxu0
    %v210 = vadd.f32 %v77, %v209
    %v211 = vpop.f32.mrb[0].mxu0
    %v212 = vpop.f32.mrb[0].mxu0
    %v213 = vadd.f32 %v77, %v212
    %v214 = vpop.f32.mrb[0].mxu0
    %215 = vmatprep.mubr.bf16.mxu0 0
    %216 = vmatmul.mubr.bf16.gmra.mrb[0].mxu0 %v55
    %v217 = vpop.f32.mrb[0].mxu0
    %v218 = vadd.f32 %v77, %v217
    %v219 = vpop.f32.mrb[0].mxu0
    %v220 = vpop.f32.mrb[0].mxu0
    %v221 = vadd.f32 %v77, %v220
    %v222 = vpop.f32.mrb[0].mxu0
    %223 = vdwg.mxu0
    %v224 = vpack.c.bf16 %v165, %v162
    %v225 = vpack.c.bf16 %v173, %v170
    %v226 = vpack.c.bf16 %v181, %v178
    %v227 = vpack.c.bf16 %v189, %v186
    %v228 = vpack.c.bf16 %v197, %v194
    %v229 = vpack.c.bf16 %v205, %v202
    %v230 = vpack.c.bf16 %v213, %v210
    %v231 = vpack.c.bf16 %v221, %v218
    %v232 = vld [vmem:[%s1] sm:$0xff]
    %v233 = vld [vmem:[%s1 + $0x8] sm:$0xff]
    %v234 = vld [vmem:[%s1 + $0x10] sm:$0xff]
    %v235 = vld [vmem:[%s1 + $0x18] sm:$0xff]
    %v236 = vld [vmem:[%s1 + $0x20] sm:$0xff]
    %v237 = vld [vmem:[%s1 + $0x28] sm:$0xff]
    %v238 = vld [vmem:[%s1 + $0x30] sm:$0xff]
    %v239 = vld [vmem:[%s1 + $0x38] sm:$0xff]
    %v240 = vld [vmem:[%s1 + $0x40] sm:$0xff]
    %v241 = vld [vmem:[%s1 + $0x48] sm:$0xff]
    %v242 = vld [vmem:[%s1 + $0x50] sm:$0xff]
    %v243 = vld [vmem:[%s1 + $0x58] sm:$0xff]
    %v244 = vld [vmem:[%s1 + $0x60] sm:$0xff]
    %v245 = vld [vmem:[%s1 + $0x68] sm:$0xff]
    %v246 = vld [vmem:[%s1 + $0x70] sm:$0xff]
    %v247 = vld [vmem:[%s1 + $0x78] sm:$0xff]
    %v248 = vld [vmem:[%s2] sm:$0x1]
    %250 = vset.pattern.permute.xlu0 0
    %251 = vperm.xlu0 %250, %v232
    %v252 = vpop.permute.xlu0 %251
    %255 = vset.pattern.permute.xlu0 0
    %256 = vperm.xlu0 %255, %v233
    %v257 = vpop.permute.xlu0 %256
    %260 = vset.pattern.permute.xlu0 0
    %261 = vperm.xlu0 %260, %v234
    %v262 = vpop.permute.xlu0 %261
    %265 = vset.pattern.permute.xlu0 0
    %266 = vperm.xlu0 %265, %v235
    %v267 = vpop.permute.xlu0 %266
    %270 = vset.pattern.permute.xlu0 0
    %271 = vperm.xlu0 %270, %v236
    %v272 = vpop.permute.xlu0 %271
    %275 = vset.pattern.permute.xlu0 0
    %276 = vperm.xlu0 %275, %v237
    %v277 = vpop.permute.xlu0 %276
    %280 = vset.pattern.permute.xlu0 0
    %281 = vperm.xlu0 %280, %v238
    %v282 = vpop.permute.xlu0 %281
    %285 = vset.pattern.permute.xlu0 0
    %286 = vperm.xlu0 %285, %v239
    %v287 = vpop.permute.xlu0 %286
    %290 = vset.pattern.permute.xlu0 0
    %291 = vperm.xlu0 %290, %v240
    %v292 = vpop.permute.xlu0 %291
    %295 = vset.pattern.permute.xlu0 0
    %296 = vperm.xlu0 %295, %v241
    %v297 = vpop.permute.xlu0 %296
    %300 = vset.pattern.permute.xlu0 0
    %301 = vperm.xlu0 %300, %v242
    %v302 = vpop.permute.xlu0 %301
    %305 = vset.pattern.permute.xlu0 0
    %306 = vperm.xlu0 %305, %v243
    %v307 = vpop.permute.xlu0 %306
    %310 = vset.pattern.permute.xlu0 0
    %311 = vperm.xlu0 %310, %v244
    %v312 = vpop.permute.xlu0 %311
    %315 = vset.pattern.permute.xlu0 0
    %316 = vperm.xlu0 %315, %v245
    %v317 = vpop.permute.xlu0 %316
    %320 = vset.pattern.permute.xlu0 0
    %321 = vperm.xlu0 %320, %v246
    %v322 = vpop.permute.xlu0 %321
    %325 = vset.pattern.permute.xlu0 0
    %326 = vperm.xlu0 %325, %v247
    %v327 = vpop.permute.xlu0 %326
    %v330 = vlaneseq
    %v331 = vshrl.u32 %v330, 7
    %v332 = vsub.s32 0, %v331
    %v333 = vrot.slane %v248, %v332
    %vm335 = vcmp.eq.f32.partialorder %v252, %v333
    %vm336 = vcmp.eq.f32.partialorder %v257, %v333
    %vm337 = vcmp.eq.f32.partialorder %v262, %v333
    %vm338 = vcmp.eq.f32.partialorder %v267, %v333
    %vm339 = vcmp.eq.f32.partialorder %v272, %v333
    %vm340 = vcmp.eq.f32.partialorder %v277, %v333
    %vm341 = vcmp.eq.f32.partialorder %v282, %v333
    %vm342 = vcmp.eq.f32.partialorder %v287, %v333
    %vm343 = vcmp.eq.f32.partialorder %v292, %v333
    %vm344 = vcmp.eq.f32.partialorder %v297, %v333
    %vm345 = vcmp.eq.f32.partialorder %v302, %v333
    %vm346 = vcmp.eq.f32.partialorder %v307, %v333
    %vm347 = vcmp.eq.f32.partialorder %v312, %v333
    %vm348 = vcmp.eq.f32.partialorder %v317, %v333
    %vm349 = vcmp.eq.f32.partialorder %v322, %v333
    %vm350 = vcmp.eq.f32.partialorder %v327, %v333
    %v351 = vsel %vm335, 0.0, -1e+09
    %v352 = vsel %vm336, 0.0, -1e+09
    %v353 = vsel %vm337, 0.0, -1e+09
    %v354 = vsel %vm338, 0.0, -1e+09
    %v355 = vsel %vm339, 0.0, -1e+09
    %v356 = vsel %vm340, 0.0, -1e+09
    %v357 = vsel %vm341, 0.0, -1e+09
    %v358 = vsel %vm342, 0.0, -1e+09
    %v359 = vsel %vm343, 0.0, -1e+09
    %v360 = vsel %vm344, 0.0, -1e+09
    %v361 = vsel %vm345, 0.0, -1e+09
    %v362 = vsel %vm346, 0.0, -1e+09
    %v363 = vsel %vm347, 0.0, -1e+09
    %v364 = vsel %vm348, 0.0, -1e+09
    %v365 = vsel %vm349, 0.0, -1e+09
    %v366 = vsel %vm350, 0.0, -1e+09
    %375 = vrot.lane.b32.xlu0 %v224, 96
    %v376 = vpop.permute.xlu0 %375
    %377 = vrot.lane.b32.xlu0 %v225, 96
    %v378 = vpop.permute.xlu0 %377
    %379 = vrot.lane.b32.xlu0 %v226, 96
    %v380 = vpop.permute.xlu0 %379
    %381 = vrot.lane.b32.xlu0 %v227, 96
    %v382 = vpop.permute.xlu0 %381
    %383 = vrot.lane.b32.xlu0 %v228, 96
    %v384 = vpop.permute.xlu0 %383
    %385 = vrot.lane.b32.xlu0 %v229, 96
    %v386 = vpop.permute.xlu0 %385
    %387 = vrot.lane.b32.xlu0 %v230, 96
    %v388 = vpop.permute.xlu0 %387
    %389 = vrot.lane.b32.xlu0 %v231, 96
    %v390 = vpop.permute.xlu0 %389
    %vm391 = vcmask 64512
    %v393 = vsel %vm391, %v224, 0
    %v396 = vsel %vm391, %v225, 0
    %v399 = vsel %vm391, %v226, 0
    %v402 = vsel %vm391, %v227, 0
    %v405 = vsel %vm391, %v228, 0
    %v408 = vsel %vm391, %v229, 0
    %v411 = vsel %vm391, %v230, 0
    %v414 = vsel %vm391, %v231, 0
    %v417 = vsel %vm391, %v376, 0
    %v420 = vsel %vm391, %v378, 0
    %v423 = vsel %vm391, %v380, 0
    %v426 = vsel %vm391, %v382, 0
    %v429 = vsel %vm391, %v384, 0
    %v432 = vsel %vm391, %v386, 0
    %v435 = vsel %vm391, %v388, 0
    %v438 = vsel %vm391, %v390, 0
    %440 = vmatprep.subr.bf16.mxu0 0
    %441 = vmatpush1.bf16.xpose.msra.mxu0 %v417
    %442 = vmatprep.subr.bf16.mxu0 0
    %443 = vmatpush1.bf16.xpose.msra.mxu0 %v420
    %444 = vmatprep.subr.bf16.mxu0 0
    %445 = vmatpush1.bf16.xpose.msra.mxu0 %v423
    %446 = vmatprep.subr.bf16.mxu0 0
    %447 = vmatpush1.bf16.xpose.msra.mxu0 %v426
    %448 = vmatprep.subr.bf16.mxu0 0
    %449 = vmatpush1.bf16.xpose.msra.mxu0 %v429
    %450 = vmatprep.subr.bf16.mxu0 0
    %451 = vmatpush1.bf16.xpose.msra.mxu0 %v432
    %452 = vmatprep.subr.bf16.mxu0 0
    %453 = vmatpush1.bf16.xpose.msra.mxu0 %v435
    %454 = vmatprep.subr.bf16.mxu0 0
    %455 = vmatpush1.bf16.xpose.msra.mxu0 %v438
    %456 = vmatprep.subr.bf16.mxu0 0
    %457 = vmatpush1.bf16.xpose.msra.mxu0 0
    %458 = vmatprep.subr.bf16.mxu0 0
    %459 = vmatpush1.bf16.xpose.msra.mxu0 0
    %460 = vmatprep.subr.bf16.mxu0 0
    %461 = vmatpush1.bf16.xpose.msra.mxu0 0
    %462 = vmatprep.subr.bf16.mxu0 0
    %463 = vmatpush1.bf16.xpose.msra.mxu0 0
    %464 = vmatprep.subr.bf16.mxu0 0
    %465 = vmatpush1.bf16.xpose.msra.mxu0 0
    %466 = vmatprep.subr.bf16.mxu0 0
    %467 = vmatpush1.bf16.xpose.msra.mxu0 0
    %468 = vmatprep.subr.bf16.mxu0 0
    %469 = vmatpush1.bf16.xpose.msra.mxu0 0
    %470 = vmatprep.subr.bf16.mxu0 0
    %471 = vmatpush1.bf16.xpose.msra.mxu0 0
    %472 = vmatprep.mubr.bf16.mxu0 0
    %473 = vmatmul.mubr.bf16.gmra.mrb[0].mxu0 %v393
    %v474 = vpop.f32.mrb[0].mxu0
    %v475 = vadd.f32 %v351, %v474
    %v476 = vpop.f32.mrb[0].mxu0
    %v477 = vpop.f32.mrb[0].mxu0
    %v478 = vadd.f32 %v352, %v477
    %v479 = vpop.f32.mrb[0].mxu0
    %480 = vmatprep.mubr.bf16.mxu0 0
    %481 = vmatmul.mubr.bf16.gmra.mrb[0].mxu0 %v396
    %v482 = vpop.f32.mrb[0].mxu0
    %v483 = vadd.f32 %v353, %v482
    %v484 = vpop.f32.mrb[0].mxu0
    %v485 = vpop.f32.mrb[0].mxu0
    %v486 = vadd.f32 %v354, %v485
    %v487 = vpop.f32.mrb[0].mxu0
    %488 = vmatprep.mubr.bf16.mxu0 0
    %489 = vmatmul.mubr.bf16.gmra.mrb[0].mxu0 %v399
    %v490 = vpop.f32.mrb[0].mxu0
    %v491 = vadd.f32 %v355, %v490
    %v492 = vpop.f32.mrb[0].mxu0
    %v493 = vpop.f32.mrb[0].mxu0
    %v494 = vadd.f32 %v356, %v493
    %v495 = vpop.f32.mrb[0].mxu0
    %496 = vmatprep.mubr.bf16.mxu0 0
    %497 = vmatmul.mubr.bf16.gmra.mrb[0].mxu0 %v402
    %v498 = vpop.f32.mrb[0].mxu0
    %v499 = vadd.f32 %v357, %v498
    %v500 = vpop.f32.mrb[0].mxu0
    %v501 = vpop.f32.mrb[0].mxu0
    %v502 = vadd.f32 %v358, %v501
    %v503 = vpop.f32.mrb[0].mxu0
    %504 = vmatprep.mubr.bf16.mxu0 0
    %505 = vmatmul.mubr.bf16.gmra.mrb[0].mxu0 %v405
    %v506 = vpop.f32.mrb[0].mxu0
    %v507 = vadd.f32 %v359, %v506
    %v508 = vpop.f32.mrb[0].mxu0
    %v509 = vpop.f32.mrb[0].mxu0
    %v510 = vadd.f32 %v360, %v509
    %v511 = vpop.f32.mrb[0].mxu0
    %512 = vmatprep.mubr.bf16.mxu0 0
    %513 = vmatmul.mubr.bf16.gmra.mrb[0].mxu0 %v408
    %v514 = vpop.f32.mrb[0].mxu0
    %v515 = vadd.f32 %v361, %v514
    %v516 = vpop.f32.mrb[0].mxu0
    %v517 = vpop.f32.mrb[0].mxu0
    %v518 = vadd.f32 %v362, %v517
    %v519 = vpop.f32.mrb[0].mxu0
    %520 = vmatprep.mubr.bf16.mxu0 0
    %521 = vmatmul.mubr.bf16.gmra.mrb[0].mxu0 %v411
    %v522 = vpop.f32.mrb[0].mxu0
    %v523 = vadd.f32 %v363, %v522
    %v524 = vpop.f32.mrb[0].mxu0
    %v525 = vpop.f32.mrb[0].mxu0
    %v526 = vadd.f32 %v364, %v525
    %v527 = vpop.f32.mrb[0].mxu0
    %528 = vmatprep.mubr.bf16.mxu0 0
    %529 = vmatmul.mubr.bf16.gmra.mrb[0].mxu0 %v414
    %v530 = vpop.f32.mrb[0].mxu0
    %v531 = vadd.f32 %v365, %v530
    %v532 = vpop.f32.mrb[0].mxu0
    %v533 = vpop.f32.mrb[0].mxu0
    %v534 = vadd.f32 %v366, %v533
    %v535 = vpop.f32.mrb[0].mxu0
    %536 = vdwg.mxu0
    %537 = vmax.xlane.f32.xlu0 %v475
    %v538 = vpop.xlane.xlu0 %537
    %539 = vmax.xlane.f32.xlu0 %v478
    %v540 = vpop.xlane.xlu0 %539
    %541 = vmax.xlane.f32.xlu0 %v483
    %v542 = vpop.xlane.xlu0 %541
    %543 = vmax.xlane.f32.xlu0 %v486
    %v544 = vpop.xlane.xlu0 %543
    %545 = vmax.xlane.f32.xlu0 %v491
    %v546 = vpop.xlane.xlu0 %545
    %547 = vmax.xlane.f32.xlu0 %v494
    %v548 = vpop.xlane.xlu0 %547
    %549 = vmax.xlane.f32.xlu0 %v499
    %v550 = vpop.xlane.xlu0 %549
    %551 = vmax.xlane.f32.xlu0 %v502
    %v552 = vpop.xlane.xlu0 %551
    %553 = vmax.xlane.f32.xlu0 %v507
    %v554 = vpop.xlane.xlu0 %553
    %555 = vmax.xlane.f32.xlu0 %v510
    %v556 = vpop.xlane.xlu0 %555
    %557 = vmax.xlane.f32.xlu0 %v515
    %v558 = vpop.xlane.xlu0 %557
    %559 = vmax.xlane.f32.xlu0 %v518
    %v560 = vpop.xlane.xlu0 %559
    %561 = vmax.xlane.f32.xlu0 %v523
    %v562 = vpop.xlane.xlu0 %561
    %563 = vmax.xlane.f32.xlu0 %v526
    %v564 = vpop.xlane.xlu0 %563
    %565 = vmax.xlane.f32.xlu0 %v531
    %v566 = vpop.xlane.xlu0 %565
    %567 = vmax.xlane.f32.xlu0 %v534
    %v568 = vpop.xlane.xlu0 %567
    %v569 = vsub.f32 %v475, %v538
    %v570 = vsub.f32 %v478, %v540
    %v571 = vsub.f32 %v483, %v542
    %v572 = vsub.f32 %v486, %v544
    %v573 = vsub.f32 %v491, %v546
    %v574 = vsub.f32 %v494, %v548
    %v575 = vsub.f32 %v499, %v550
    %v576 = vsub.f32 %v502, %v552
    %v577 = vsub.f32 %v507, %v554
    %v578 = vsub.f32 %v510, %v556
    %v579 = vsub.f32 %v515, %v558
    %v580 = vsub.f32 %v518, %v560
    %v581 = vsub.f32 %v523, %v562
    %v582 = vsub.f32 %v526, %v564
    %v583 = vsub.f32 %v531, %v566
    %v584 = vsub.f32 %v534, %v568
    %v585 = vmul.f32 %v569, 1.442695
    %v586 = vpow.pop %v585
    %v587 = vmul.f32 %v570, 1.442695
    %v588 = vpow.pop %v587
    %v589 = vmul.f32 %v571, 1.442695
    %v590 = vpow.pop %v589
    %v591 = vmul.f32 %v572, 1.442695
    %v592 = vpow.pop %v591
    %v593 = vmul.f32 %v573, 1.442695
    %v594 = vpow.pop %v593
    %v595 = vmul.f32 %v574, 1.442695
    %v596 = vpow.pop %v595
    %v597 = vmul.f32 %v575, 1.442695
    %v598 = vpow.pop %v597
    %v599 = vmul.f32 %v576, 1.442695
    %v600 = vpow.pop %v599
    %v601 = vmul.f32 %v577, 1.442695
    %v602 = vpow.pop %v601
    %v603 = vmul.f32 %v578, 1.442695
    %v604 = vpow.pop %v603
    %v605 = vmul.f32 %v579, 1.442695
    %v606 = vpow.pop %v605
    %v607 = vmul.f32 %v580, 1.442695
    %v608 = vpow.pop %v607
    %v609 = vmul.f32 %v581, 1.442695
    %v610 = vpow.pop %v609
    %v611 = vmul.f32 %v582, 1.442695
    %v612 = vpow.pop %v611
    %v613 = vmul.f32 %v583, 1.442695
    %v614 = vpow.pop %v613
    %v615 = vmul.f32 %v584, 1.442695
    %v616 = vpow.pop %v615
    %617 = vadd.xlane.f32.xlu0 %v586
    %v618 = vpop.xlane.xlu0 %617
    %619 = vadd.xlane.f32.xlu0 %v588
    %v620 = vpop.xlane.xlu0 %619
    %621 = vadd.xlane.f32.xlu0 %v590
    %v622 = vpop.xlane.xlu0 %621
    %623 = vadd.xlane.f32.xlu0 %v592
    %v624 = vpop.xlane.xlu0 %623
    %625 = vadd.xlane.f32.xlu0 %v594
    %v626 = vpop.xlane.xlu0 %625
    %627 = vadd.xlane.f32.xlu0 %v596
    %v628 = vpop.xlane.xlu0 %627
    %629 = vadd.xlane.f32.xlu0 %v598
    %v630 = vpop.xlane.xlu0 %629
    %631 = vadd.xlane.f32.xlu0 %v600
    %v632 = vpop.xlane.xlu0 %631
    %633 = vadd.xlane.f32.xlu0 %v602
    %v634 = vpop.xlane.xlu0 %633
    %635 = vadd.xlane.f32.xlu0 %v604
    %v636 = vpop.xlane.xlu0 %635
    %637 = vadd.xlane.f32.xlu0 %v606
    %v638 = vpop.xlane.xlu0 %637
    %639 = vadd.xlane.f32.xlu0 %v608
    %v640 = vpop.xlane.xlu0 %639
    %641 = vadd.xlane.f32.xlu0 %v610
    %v642 = vpop.xlane.xlu0 %641
    %643 = vadd.xlane.f32.xlu0 %v612
    %v644 = vpop.xlane.xlu0 %643
    %645 = vadd.xlane.f32.xlu0 %v614
    %v646 = vpop.xlane.xlu0 %645
    %647 = vadd.xlane.f32.xlu0 %v616
    %v648 = vpop.xlane.xlu0 %647
    %v649 = vrcp.pop %v618
    %v650 = vrcp.pop %v620
    %v651 = vrcp.pop %v622
    %v652 = vrcp.pop %v624
    %v653 = vrcp.pop %v626
    %v654 = vrcp.pop %v628
    %v655 = vrcp.pop %v630
    %v656 = vrcp.pop %v632
    %v657 = vrcp.pop %v634
    %v658 = vrcp.pop %v636
    %v659 = vrcp.pop %v638
    %v660 = vrcp.pop %v640
    %v661 = vrcp.pop %v642
    %v662 = vrcp.pop %v644
    %v663 = vrcp.pop %v646
    %v664 = vrcp.pop %v648
    %v665 = vmul.f32 %v586, %v649
    %v666 = vmul.f32 %v588, %v650
    %v667 = vmul.f32 %v590, %v651
    %v668 = vmul.f32 %v592, %v652
    %v669 = vmul.f32 %v594, %v653
    %v670 = vmul.f32 %v596, %v654
    %v671 = vmul.f32 %v598, %v655
    %v672 = vmul.f32 %v600, %v656
    %v673 = vmul.f32 %v602, %v657
    %v674 = vmul.f32 %v604, %v658
    %v675 = vmul.f32 %v606, %v659
    %v676 = vmul.f32 %v608, %v660
    %v677 = vmul.f32 %v610, %v661
    %v678 = vmul.f32 %v612, %v662
    %v679 = vmul.f32 %v614, %v663
    %v680 = vmul.f32 %v616, %v664
    %v681 = vpack.c.bf16 %v666, %v665
    %v682 = vpack.c.bf16 %v668, %v667
    %v683 = vpack.c.bf16 %v670, %v669
    %v684 = vpack.c.bf16 %v672, %v671
    %v685 = vpack.c.bf16 %v674, %v673
    %v686 = vpack.c.bf16 %v676, %v675
    %v687 = vpack.c.bf16 %v678, %v677
    %v688 = vpack.c.bf16 %v680, %v679
    %689 = vrot.lane.b32.xlu0 %v224, 64
    %v690 = vpop.permute.xlu0 %689
    %691 = vrot.lane.b32.xlu0 %v225, 64
    %v692 = vpop.permute.xlu0 %691
    %693 = vrot.lane.b32.xlu0 %v226, 64
    %v694 = vpop.permute.xlu0 %693
    %695 = vrot.lane.b32.xlu0 %v227, 64
    %v696 = vpop.permute.xlu0 %695
    %697 = vrot.lane.b32.xlu0 %v228, 64
    %v698 = vpop.permute.xlu0 %697
    %699 = vrot.lane.b32.xlu0 %v229, 64
    %v700 = vpop.permute.xlu0 %699
    %701 = vrot.lane.b32.xlu0 %v230, 64
    %v702 = vpop.permute.xlu0 %701
    %703 = vrot.lane.b32.xlu0 %v231, 64
    %v704 = vpop.permute.xlu0 %703
    %713 = vmatprep.subr.bf16.mxu0 0
    %714 = vmatpush1.bf16.msra.mxu0 %v690
    %715 = vmatprep.subr.bf16.mxu0 0
    %716 = vmatpush1.bf16.msra.mxu0 %v692
    %717 = vmatprep.subr.bf16.mxu0 0
    %718 = vmatpush1.bf16.msra.mxu0 %v694
    %719 = vmatprep.subr.bf16.mxu0 0
    %720 = vmatpush1.bf16.msra.mxu0 %v696
    %721 = vmatprep.subr.bf16.mxu0 0
    %722 = vmatpush1.bf16.msra.mxu0 %v698
    %723 = vmatprep.subr.bf16.mxu0 0
    %724 = vmatpush1.bf16.msra.mxu0 %v700
    %725 = vmatprep.subr.bf16.mxu0 0
    %726 = vmatpush1.bf16.msra.mxu0 %v702
    %727 = vmatprep.subr.bf16.mxu0 0
    %728 = vmatpush1.bf16.msra.mxu0 %v704
    %729 = vmatprep.subr.bf16.mxu0 0
    %730 = vmatpush1.bf16.msra.mxu0 0
    %731 = vmatprep.subr.bf16.mxu0 0
    %732 = vmatpush1.bf16.msra.mxu0 0
    %733 = vmatprep.subr.bf16.mxu0 0
    %734 = vmatpush1.bf16.msra.mxu0 0
    %735 = vmatprep.subr.bf16.mxu0 0
    %736 = vmatpush1.bf16.msra.mxu0 0
    %737 = vmatprep.subr.bf16.mxu0 0
    %738 = vmatpush1.bf16.msra.mxu0 0
    %739 = vmatprep.subr.bf16.mxu0 0
    %740 = vmatpush1.bf16.msra.mxu0 0
    %741 = vmatprep.subr.bf16.mxu0 0
    %742 = vmatpush1.bf16.msra.mxu0 0
    %743 = vmatprep.subr.bf16.mxu0 0
    %744 = vmatpush1.bf16.msra.mxu0 0
    %745 = vmatprep.mubr.bf16.mxu0 0
    %746 = vmatmul.mubr.bf16.gmra.mrb[0].mxu0 %v681
    %v747 = vpop.f32.mrb[0].mxu0
    %v748 = vadd.f32 0.0, %v747
    %v749 = vpop.f32.mrb[0].mxu0
    %v750 = vpop.f32.mrb[0].mxu0
    %v751 = vadd.f32 0.0, %v750
    %v752 = vpop.f32.mrb[0].mxu0
    %753 = vmatprep.mubr.bf16.mxu0 0
    %754 = vmatmul.mubr.bf16.gmra.mrb[0].mxu0 %v682
    %v755 = vpop.f32.mrb[0].mxu0
    %v756 = vadd.f32 0.0, %v755
    %v757 = vpop.f32.mrb[0].mxu0
    %v758 = vpop.f32.mrb[0].mxu0
    %v759 = vadd.f32 0.0, %v758
    %v760 = vpop.f32.mrb[0].mxu0
    %761 = vmatprep.mubr.bf16.mxu0 0
    %762 = vmatmul.mubr.bf16.gmra.mrb[0].mxu0 %v683
    %v763 = vpop.f32.mrb[0].mxu0
    %v764 = vadd.f32 0.0, %v763
    %v765 = vpop.f32.mrb[0].mxu0
    %v766 = vpop.f32.mrb[0].mxu0
    %v767 = vadd.f32 0.0, %v766
    %v768 = vpop.f32.mrb[0].mxu0
    %769 = vmatprep.mubr.bf16.mxu0 0
    %770 = vmatmul.mubr.bf16.gmra.mrb[0].mxu0 %v684
    %v771 = vpop.f32.mrb[0].mxu0
    %v772 = vadd.f32 0.0, %v771
    %v773 = vpop.f32.mrb[0].mxu0
    %v774 = vpop.f32.mrb[0].mxu0
    %v775 = vadd.f32 0.0, %v774
    %v776 = vpop.f32.mrb[0].mxu0
    %777 = vmatprep.mubr.bf16.mxu0 0
    %778 = vmatmul.mubr.bf16.gmra.mrb[0].mxu0 %v685
    %v779 = vpop.f32.mrb[0].mxu0
    %v780 = vadd.f32 0.0, %v779
    %v781 = vpop.f32.mrb[0].mxu0
    %v782 = vpop.f32.mrb[0].mxu0
    %v783 = vadd.f32 0.0, %v782
    %v784 = vpop.f32.mrb[0].mxu0
    %785 = vmatprep.mubr.bf16.mxu0 0
    %786 = vmatmul.mubr.bf16.gmra.mrb[0].mxu0 %v686
    %v787 = vpop.f32.mrb[0].mxu0
    %v788 = vadd.f32 0.0, %v787
    %v789 = vpop.f32.mrb[0].mxu0
    %v790 = vpop.f32.mrb[0].mxu0
    %v791 = vadd.f32 0.0, %v790
    %v792 = vpop.f32.mrb[0].mxu0
    %793 = vmatprep.mubr.bf16.mxu0 0
    %794 = vmatmul.mubr.bf16.gmra.mrb[0].mxu0 %v687
    %v795 = vpop.f32.mrb[0].mxu0
    %v796 = vadd.f32 0.0, %v795
    %v797 = vpop.f32.mrb[0].mxu0
    %v798 = vpop.f32.mrb[0].mxu0
    %v799 = vadd.f32 0.0, %v798
    %v800 = vpop.f32.mrb[0].mxu0
    %801 = vmatprep.mubr.bf16.mxu0 0
    %802 = vmatmul.mubr.bf16.gmra.mrb[0].mxu0 %v688
    %v803 = vpop.f32.mrb[0].mxu0
    %v804 = vadd.f32 0.0, %v803
    %v805 = vpop.f32.mrb[0].mxu0
    %v806 = vpop.f32.mrb[0].mxu0
    %v807 = vadd.f32 0.0, %v806
    %v808 = vpop.f32.mrb[0].mxu0
    %809 = vdwg.mxu0
    %810 = vst.msk [vmem:[#allocation2] sm:$0xff] %vm391, %v748
    %811 = vst.msk [vmem:[#allocation2 + $0x8] sm:$0xff] %vm391, %v751
    %812 = vst.msk [vmem:[#allocation2 + $0x10] sm:$0xff] %vm391, %v756
    %813 = vst.msk [vmem:[#allocation2 + $0x18] sm:$0xff] %vm391, %v759
    %814 = vst.msk [vmem:[#allocation2 + $0x20] sm:$0xff] %vm391, %v764
    %815 = vst.msk [vmem:[#allocation2 + $0x28] sm:$0xff] %vm391, %v767
    %816 = vst.msk [vmem:[#allocation2 + $0x30] sm:$0xff] %vm391, %v772
    %817 = vst.msk [vmem:[#allocation2 + $0x38] sm:$0xff] %vm391, %v775
    %818 = vst.msk [vmem:[#allocation2 + $0x40] sm:$0xff] %vm391, %v780
    %819 = vst.msk [vmem:[#allocation2 + $0x48] sm:$0xff] %vm391, %v783
    %820 = vst.msk [vmem:[#allocation2 + $0x50] sm:$0xff] %vm391, %v788
    %821 = vst.msk [vmem:[#allocation2 + $0x58] sm:$0xff] %vm391, %v791
    %822 = vst.msk [vmem:[#allocation2 + $0x60] sm:$0xff] %vm391, %v796
    %823 = vst.msk [vmem:[#allocation2 + $0x68] sm:$0xff] %vm391, %v799
    %824 = vst.msk [vmem:[#allocation2 + $0x70] sm:$0xff] %vm391, %v804
    %825 = vst.msk [vmem:[#allocation2 + $0x78] sm:$0xff] %vm391, %v807
    %826 = vrot.lane.b32.xlu0 %v224, 120
    %v827 = vpop.permute.xlu0 %826
    %828 = vrot.lane.b32.xlu0 %v225, 120
    %v829 = vpop.permute.xlu0 %828
    %830 = vrot.lane.b32.xlu0 %v226, 120
    %v831 = vpop.permute.xlu0 %830
    %832 = vrot.lane.b32.xlu0 %v227, 120
    %v833 = vpop.permute.xlu0 %832
    %834 = vrot.lane.b32.xlu0 %v228, 120
    %v835 = vpop.permute.xlu0 %834
    %836 = vrot.lane.b32.xlu0 %v229, 120
    %v837 = vpop.permute.xlu0 %836
    %838 = vrot.lane.b32.xlu0 %v230, 120
    %v839 = vpop.permute.xlu0 %838
    %840 = vrot.lane.b32.xlu0 %v231, 120
    %v841 = vpop.permute.xlu0 %840
    %842 = vrot.lane.b32.xlu0 %v224, 88
    %v843 = vpop.permute.xlu0 %842
    %844 = vrot.lane.b32.xlu0 %v225, 88
    %v845 = vpop.permute.xlu0 %844
    %846 = vrot.lane.b32.xlu0 %v226, 88
    %v847 = vpop.permute.xlu0 %846
    %848 = vrot.lane.b32.xlu0 %v227, 88
    %v849 = vpop.permute.xlu0 %848
    %850 = vrot.lane.b32.xlu0 %v228, 88
    %v851 = vpop.permute.xlu0 %850
    %852 = vrot.lane.b32.xlu0 %v229, 88
    %v853 = vpop.permute.xlu0 %852
    %854 = vrot.lane.b32.xlu0 %v230, 88
    %v855 = vpop.permute.xlu0 %854
    %856 = vrot.lane.b32.xlu0 %v231, 88
    %v857 = vpop.permute.xlu0 %856
    %v859 = vsel %vm391, %v827, 0
    %v862 = vsel %vm391, %v829, 0
    %v865 = vsel %vm391, %v831, 0
    %v868 = vsel %vm391, %v833, 0
    %v871 = vsel %vm391, %v835, 0
    %v874 = vsel %vm391, %v837, 0
    %v877 = vsel %vm391, %v839, 0
    %v880 = vsel %vm391, %v841, 0
    %v883 = vsel %vm391, %v843, 0
    %v886 = vsel %vm391, %v845, 0
    %v889 = vsel %vm391, %v847, 0
    %v892 = vsel %vm391, %v849, 0
    %v895 = vsel %vm391, %v851, 0
    %v898 = vsel %vm391, %v853, 0
    %v901 = vsel %vm391, %v855, 0
    %v904 = vsel %vm391, %v857, 0
    %906 = vmatprep.subr.bf16.mxu0 0
    %907 = vmatpush1.bf16.xpose.msra.mxu0 %v883
    %908 = vmatprep.subr.bf16.mxu0 0
    %909 = vmatpush1.bf16.xpose.msra.mxu0 %v886
    %910 = vmatprep.subr.bf16.mxu0 0
    %911 = vmatpush1.bf16.xpose.msra.mxu0 %v889
    %912 = vmatprep.subr.bf16.mxu0 0
    %913 = vmatpush1.bf16.xpose.msra.mxu0 %v892
    %914 = vmatprep.subr.bf16.mxu0 0
    %915 = vmatpush1.bf16.xpose.msra.mxu0 %v895
    %916 = vmatprep.subr.bf16.mxu0 0
    %917 = vmatpush1.bf16.xpose.msra.mxu0 %v898
    %918 = vmatprep.subr.bf16.mxu0 0
    %919 = vmatpush1.bf16.xpose.msra.mxu0 %v901
    %920 = vmatprep.subr.bf16.mxu0 0
    %921 = vmatpush1.bf16.xpose.msra.mxu0 %v904
    %922 = vmatprep.subr.bf16.mxu0 0
    %923 = vmatpush1.bf16.xpose.msra.mxu0 0
    %924 = vmatprep.subr.bf16.mxu0 0
    %925 = vmatpush1.bf16.xpose.msra.mxu0 0
    %926 = vmatprep.subr.bf16.mxu0 0
    %927 = vmatpush1.bf16.xpose.msra.mxu0 0
    %928 = vmatprep.subr.bf16.mxu0 0
    %929 = vmatpush1.bf16.xpose.msra.mxu0 0
    %930 = vmatprep.subr.bf16.mxu0 0
    %931 = vmatpush1.bf16.xpose.msra.mxu0 0
    %932 = vmatprep.subr.bf16.mxu0 0
    %933 = vmatpush1.bf16.xpose.msra.mxu0 0
    %934 = vmatprep.subr.bf16.mxu0 0
    %935 = vmatpush1.bf16.xpose.msra.mxu0 0
    %936 = vmatprep.subr.bf16.mxu0 0
    %937 = vmatpush1.bf16.xpose.msra.mxu0 0
    %938 = vmatprep.mubr.bf16.mxu0 0
    %939 = vmatmul.mubr.bf16.gmra.mrb[0].mxu0 %v859
    %v940 = vpop.f32.mrb[0].mxu0
    %v941 = vadd.f32 %v351, %v940
    %v942 = vpop.f32.mrb[0].mxu0
    %v943 = vpop.f32.mrb[0].mxu0
    %v944 = vadd.f32 %v352, %v943
    %v945 = vpop.f32.mrb[0].mxu0
    %946 = vmatprep.mubr.bf16.mxu0 0
    %947 = vmatmul.mubr.bf16.gmra.mrb[0].mxu0 %v862
    %v948 = vpop.f32.mrb[0].mxu0
    %v949 = vadd.f32 %v353, %v948
    %v950 = vpop.f32.mrb[0].mxu0
    %v951 = vpop.f32.mrb[0].mxu0
    %v952 = vadd.f32 %v354, %v951
    %v953 = vpop.f32.mrb[0].mxu0
    %954 = vmatprep.mubr.bf16.mxu0 0
    %955 = vmatmul.mubr.bf16.gmra.mrb[0].mxu0 %v865
    %v956 = vpop.f32.mrb[0].mxu0
    %v957 = vadd.f32 %v355, %v956
    %v958 = vpop.f32.mrb[0].mxu0
    %v959 = vpop.f32.mrb[0].mxu0
    %v960 = vadd.f32 %v356, %v959
    %v961 = vpop.f32.mrb[0].mxu0
    %962 = vmatprep.mubr.bf16.mxu0 0
    %963 = vmatmul.mubr.bf16.gmra.mrb[0].mxu0 %v868
    %v964 = vpop.f32.mrb[0].mxu0
    %v965 = vadd.f32 %v357, %v964
    %v966 = vpop.f32.mrb[0].mxu0
    %v967 = vpop.f32.mrb[0].mxu0
    %v968 = vadd.f32 %v358, %v967
    %v969 = vpop.f32.mrb[0].mxu0
    %970 = vmatprep.mubr.bf16.mxu0 0
    %971 = vmatmul.mubr.bf16.gmra.mrb[0].mxu0 %v871
    %v972 = vpop.f32.mrb[0].mxu0
    %v973 = vadd.f32 %v359, %v972
    %v974 = vpop.f32.mrb[0].mxu0
    %v975 = vpop.f32.mrb[0].mxu0
    %v976 = vadd.f32 %v360, %v975
    %v977 = vpop.f32.mrb[0].mxu0
    %978 = vmatprep.mubr.bf16.mxu0 0
    %979 = vmatmul.mubr.bf16.gmra.mrb[0].mxu0 %v874
    %v980 = vpop.f32.mrb[0].mxu0
    %v981 = vadd.f32 %v361, %v980
    %v982 = vpop.f32.mrb[0].mxu0
    %v983 = vpop.f32.mrb[0].mxu0
    %v984 = vadd.f32 %v362, %v983
    %v985 = vpop.f32.mrb[0].mxu0
    %986 = vmatprep.mubr.bf16.mxu0 0
    %987 = vmatmul.mubr.bf16.gmra.mrb[0].mxu0 %v877
    %v988 = vpop.f32.mrb[0].mxu0
    %v989 = vadd.f32 %v363, %v988
    %v990 = vpop.f32.mrb[0].mxu0
    %v991 = vpop.f32.mrb[0].mxu0
    %v992 = vadd.f32 %v364, %v991
    %v993 = vpop.f32.mrb[0].mxu0
    %994 = vmatprep.mubr.bf16.mxu0 0
    %995 = vmatmul.mubr.bf16.gmra.mrb[0].mxu0 %v880
    %v996 = vpop.f32.mrb[0].mxu0
    %v997 = vadd.f32 %v365, %v996
    %v998 = vpop.f32.mrb[0].mxu0
    %v999 = vpop.f32.mrb[0].mxu0
    %v1000 = vadd.f32 %v366, %v999
    %v1001 = vpop.f32.mrb[0].mxu0
    %1002 = vdwg.mxu0
    %1003 = vmax.xlane.f32.xlu0 %v941
    %v1004 = vpop.xlane.xlu0 %1003
    %1005 = vmax.xlane.f32.xlu0 %v944
    %v1006 = vpop.xlane.xlu0 %1005
    %1007 = vmax.xlane.f32.xlu0 %v949
    %v1008 = vpop.xlane.xlu0 %1007
    %1009 = vmax.xlane.f32.xlu0 %v952
    %v1010 = vpop.xlane.xlu0 %1009
    %1011 = vmax.xlane.f32.xlu0 %v957
    %v1012 = vpop.xlane.xlu0 %1011
    %1013 = vmax.xlane.f32.xlu0 %v960
    %v1014 = vpop.xlane.xlu0 %1013
    %1015 = vmax.xlane.f32.xlu0 %v965
    %v1016 = vpop.xlane.xlu0 %1015
    %1017 = vmax.xlane.f32.xlu0 %v968
    %v1018 = vpop.xlane.xlu0 %1017
    %1019 = vmax.xlane.f32.xlu0 %v973
    %v1020 = vpop.xlane.xlu0 %1019
    %1021 = vmax.xlane.f32.xlu0 %v976
    %v1022 = vpop.xlane.xlu0 %1021
    %1023 = vmax.xlane.f32.xlu0 %v981
    %v1024 = vpop.xlane.xlu0 %1023
    %1025 = vmax.xlane.f32.xlu0 %v984
    %v1026 = vpop.xlane.xlu0 %1025
    %1027 = vmax.xlane.f32.xlu0 %v989
    %v1028 = vpop.xlane.xlu0 %1027
    %1029 = vmax.xlane.f32.xlu0 %v992
    %v1030 = vpop.xlane.xlu0 %1029
    %1031 = vmax.xlane.f32.xlu0 %v997
    %v1032 = vpop.xlane.xlu0 %1031
    %1033 = vmax.xlane.f32.xlu0 %v1000
    %v1034 = vpop.xlane.xlu0 %1033
    %v1035 = vsub.f32 %v941, %v1004
    %v1036 = vsub.f32 %v944, %v1006
    %v1037 = vsub.f32 %v949, %v1008
    %v1038 = vsub.f32 %v952, %v1010
    %v1039 = vsub.f32 %v957, %v1012
    %v1040 = vsub.f32 %v960, %v1014
    %v1041 = vsub.f32 %v965, %v1016
    %v1042 = vsub.f32 %v968, %v1018
    %v1043 = vsub.f32 %v973, %v1020
    %v1044 = vsub.f32 %v976, %v1022
    %v1045 = vsub.f32 %v981, %v1024
    %v1046 = vsub.f32 %v984, %v1026
    %v1047 = vsub.f32 %v989, %v1028
    %v1048 = vsub.f32 %v992, %v1030
    %v1049 = vsub.f32 %v997, %v1032
    %v1050 = vsub.f32 %v1000, %v1034
    %v1051 = vmul.f32 %v1035, 1.442695
    %v1052 = vpow.pop %v1051
    %v1053 = vmul.f32 %v1036, 1.442695
    %v1054 = vpow.pop %v1053
    %v1055 = vmul.f32 %v1037, 1.442695
    %v1056 = vpow.pop %v1055
    %v1057 = vmul.f32 %v1038, 1.442695
    %v1058 = vpow.pop %v1057
    %v1059 = vmul.f32 %v1039, 1.442695
    %v1060 = vpow.pop %v1059
    %v1061 = vmul.f32 %v1040, 1.442695
    %v1062 = vpow.pop %v1061
    %v1063 = vmul.f32 %v1041, 1.442695
    %v1064 = vpow.pop %v1063
    %v1065 = vmul.f32 %v1042, 1.442695
    %v1066 = vpow.pop %v1065
    %v1067 = vmul.f32 %v1043, 1.442695
    %v1068 = vpow.pop %v1067
    %v1069 = vmul.f32 %v1044, 1.442695
    %v1070 = vpow.pop %v1069
    %v1071 = vmul.f32 %v1045, 1.442695
    %v1072 = vpow.pop %v1071
    %v1073 = vmul.f32 %v1046, 1.442695
    %v1074 = vpow.pop %v1073
    %v1075 = vmul.f32 %v1047, 1.442695
    %v1076 = vpow.pop %v1075
    %v1077 = vmul.f32 %v1048, 1.442695
    %v1078 = vpow.pop %v1077
    %v1079 = vmul.f32 %v1049, 1.442695
    %v1080 = vpow.pop %v1079
    %v1081 = vmul.f32 %v1050, 1.442695
    %v1082 = vpow.pop %v1081
    %1083 = vadd.xlane.f32.xlu0 %v1052
    %v1084 = vpop.xlane.xlu0 %1083
    %1085 = vadd.xlane.f32.xlu0 %v1054
    %v1086 = vpop.xlane.xlu0 %1085
    %1087 = vadd.xlane.f32.xlu0 %v1056
    %v1088 = vpop.xlane.xlu0 %1087
    %1089 = vadd.xlane.f32.xlu0 %v1058
    %v1090 = vpop.xlane.xlu0 %1089
    %1091 = vadd.xlane.f32.xlu0 %v1060
    %v1092 = vpop.xlane.xlu0 %1091
    %1093 = vadd.xlane.f32.xlu0 %v1062
    %v1094 = vpop.xlane.xlu0 %1093
    %1095 = vadd.xlane.f32.xlu0 %v1064
    %v1096 = vpop.xlane.xlu0 %1095
    %1097 = vadd.xlane.f32.xlu0 %v1066
    %v1098 = vpop.xlane.xlu0 %1097
    %1099 = vadd.xlane.f32.xlu0 %v1068
    %v1100 = vpop.xlane.xlu0 %1099
    %1101 = vadd.xlane.f32.xlu0 %v1070
    %v1102 = vpop.xlane.xlu0 %1101
    %1103 = vadd.xlane.f32.xlu0 %v1072
    %v1104 = vpop.xlane.xlu0 %1103
    %1105 = vadd.xlane.f32.xlu0 %v1074
    %v1106 = vpop.xlane.xlu0 %1105
    %1107 = vadd.xlane.f32.xlu0 %v1076
    %v1108 = vpop.xlane.xlu0 %1107
    %1109 = vadd.xlane.f32.xlu0 %v1078
    %v1110 = vpop.xlane.xlu0 %1109
    %1111 = vadd.xlane.f32.xlu0 %v1080
    %v1112 = vpop.xlane.xlu0 %1111
    %1113 = vadd.xlane.f32.xlu0 %v1082
    %v1114 = vpop.xlane.xlu0 %1113
    %v1115 = vrcp.pop %v1084
    %v1116 = vrcp.pop %v1086
    %v1117 = vrcp.pop %v1088
    %v1118 = vrcp.pop %v1090
    %v1119 = vrcp.pop %v1092
    %v1120 = vrcp.pop %v1094
    %v1121 = vrcp.pop %v1096
    %v1122 = vrcp.pop %v1098
    %v1123 = vrcp.pop %v1100
    %v1124 = vrcp.pop %v1102
    %v1125 = vrcp.pop %v1104
    %v1126 = vrcp.pop %v1106
    %v1127 = vrcp.pop %v1108
    %v1128 = vrcp.pop %v1110
    %v1129 = vrcp.pop %v1112
    %v1130 = vrcp.pop %v1114
    %v1131 = vmul.f32 %v1052, %v1115
    %v1132 = vmul.f32 %v1054, %v1116
    %v1133 = vmul.f32 %v1056, %v1117
    %v1134 = vmul.f32 %v1058, %v1118
    %v1135 = vmul.f32 %v1060, %v1119
    %v1136 = vmul.f32 %v1062, %v1120
    %v1137 = vmul.f32 %v1064, %v1121
    %v1138 = vmul.f32 %v1066, %v1122
    %v1139 = vmul.f32 %v1068, %v1123
    %v1140 = vmul.f32 %v1070, %v1124
    %v1141 = vmul.f32 %v1072, %v1125
    %v1142 = vmul.f32 %v1074, %v1126
    %v1143 = vmul.f32 %v1076, %v1127
    %v1144 = vmul.f32 %v1078, %v1128
    %v1145 = vmul.f32 %v1080, %v1129
    %v1146 = vmul.f32 %v1082, %v1130
    %v1147 = vpack.c.bf16 %v1132, %v1131
    %v1148 = vpack.c.bf16 %v1134, %v1133
    %v1149 = vpack.c.bf16 %v1136, %v1135
    %v1150 = vpack.c.bf16 %v1138, %v1137
    %v1151 = vpack.c.bf16 %v1140, %v1139
    %v1152 = vpack.c.bf16 %v1142, %v1141
    %v1153 = vpack.c.bf16 %v1144, %v1143
    %v1154 = vpack.c.bf16 %v1146, %v1145
    %1155 = vrot.lane.b32.xlu0 %v224, 56
    %v1156 = vpop.permute.xlu0 %1155
    %1157 = vrot.lane.b32.xlu0 %v225, 56
    %v1158 = vpop.permute.xlu0 %1157
    %1159 = vrot.lane.b32.xlu0 %v226, 56
    %v1160 = vpop.permute.xlu0 %1159
    %1161 = vrot.lane.b32.xlu0 %v227, 56
    %v1162 = vpop.permute.xlu0 %1161
    %1163 = vrot.lane.b32.xlu0 %v228, 56
    %v1164 = vpop.permute.xlu0 %1163
    %1165 = vrot.lane.b32.xlu0 %v229, 56
    %v1166 = vpop.permute.xlu0 %1165
    %1167 = vrot.lane.b32.xlu0 %v230, 56
    %v1168 = vpop.permute.xlu0 %1167
    %1169 = vrot.lane.b32.xlu0 %v231, 56
    %v1170 = vpop.permute.xlu0 %1169
    %1179 = vmatprep.subr.bf16.mxu0 0
    %1180 = vmatpush1.bf16.msra.mxu0 %v1156
    %1181 = vmatprep.subr.bf16.mxu0 0
    %1182 = vmatpush1.bf16.msra.mxu0 %v1158
    %1183 = vmatprep.subr.bf16.mxu0 0
    %1184 = vmatpush1.bf16.msra.mxu0 %v1160
    %1185 = vmatprep.subr.bf16.mxu0 0
    %1186 = vmatpush1.bf16.msra.mxu0 %v1162
    %1187 = vmatprep.subr.bf16.mxu0 0
    %1188 = vmatpush1.bf16.msra.mxu0 %v1164
    %1189 = vmatprep.subr.bf16.mxu0 0
    %1190 = vmatpush1.bf16.msra.mxu0 %v1166
    %1191 = vmatprep.subr.bf16.mxu0 0
    %1192 = vmatpush1.bf16.msra.mxu0 %v1168
    %1193 = vmatprep.subr.bf16.mxu0 0
    %1194 = vmatpush1.bf16.msra.mxu0 %v1170
    %1195 = vmatprep.subr.bf16.mxu0 0
    %1196 = vmatpush1.bf16.msra.mxu0 0
    %1197 = vmatprep.subr.bf16.mxu0 0
    %1198 = vmatpush1.bf16.msra.mxu0 0
    %1199 = vmatprep.subr.bf16.mxu0 0
    %1200 = vmatpush1.bf16.msra.mxu0 0
    %1201 = vmatprep.subr.bf16.mxu0 0
    %1202 = vmatpush1.bf16.msra.mxu0 0
    %1203 = vmatprep.subr.bf16.mxu0 0
    %1204 = vmatpush1.bf16.msra.mxu0 0
    %1205 = vmatprep.subr.bf16.mxu0 0
    %1206 = vmatpush1.bf16.msra.mxu0 0
    %1207 = vmatprep.subr.bf16.mxu0 0
    %1208 = vmatpush1.bf16.msra.mxu0 0
    %1209 = vmatprep.subr.bf16.mxu0 0
    %1210 = vmatpush1.bf16.msra.mxu0 0
    %1211 = vmatprep.mubr.bf16.mxu0 0
    %1212 = vmatmul.mubr.bf16.gmra.mrb[0].mxu0 %v1147
    %v1213 = vpop.f32.mrb[0].mxu0
    %v1214 = vadd.f32 0.0, %v1213
    %v1215 = vpop.f32.mrb[0].mxu0
    %v1216 = vpop.f32.mrb[0].mxu0
    %v1217 = vadd.f32 0.0, %v1216
    %v1218 = vpop.f32.mrb[0].mxu0
    %1219 = vmatprep.mubr.bf16.mxu0 0
    %1220 = vmatmul.mubr.bf16.gmra.mrb[0].mxu0 %v1148
    %v1221 = vpop.f32.mrb[0].mxu0
    %v1222 = vadd.f32 0.0, %v1221
    %v1223 = vpop.f32.mrb[0].mxu0
    %v1224 = vpop.f32.mrb[0].mxu0
    %v1225 = vadd.f32 0.0, %v1224
    %v1226 = vpop.f32.mrb[0].mxu0
    %1227 = vmatprep.mubr.bf16.mxu0 0
    %1228 = vmatmul.mubr.bf16.gmra.mrb[0].mxu0 %v1149
    %v1229 = vpop.f32.mrb[0].mxu0
    %v1230 = vadd.f32 0.0, %v1229
    %v1231 = vpop.f32.mrb[0].mxu0
    %v1232 = vpop.f32.mrb[0].mxu0
    %v1233 = vadd.f32 0.0, %v1232
    %v1234 = vpop.f32.mrb[0].mxu0
    %1235 = vmatprep.mubr.bf16.mxu0 0
    %1236 = vmatmul.mubr.bf16.gmra.mrb[0].mxu0 %v1150
    %v1237 = vpop.f32.mrb[0].mxu0
    %v1238 = vadd.f32 0.0, %v1237
    %v1239 = vpop.f32.mrb[0].mxu0
    %v1240 = vpop.f32.mrb[0].mxu0
    %v1241 = vadd.f32 0.0, %v1240
    %v1242 = vpop.f32.mrb[0].mxu0
    %1243 = vmatprep.mubr.bf16.mxu0 0
    %1244 = vmatmul.mubr.bf16.gmra.mrb[0].mxu0 %v1151
    %v1245 = vpop.f32.mrb[0].mxu0
    %v1246 = vadd.f32 0.0, %v1245
    %v1247 = vpop.f32.mrb[0].mxu0
    %v1248 = vpop.f32.mrb[0].mxu0
    %v1249 = vadd.f32 0.0, %v1248
    %v1250 = vpop.f32.mrb[0].mxu0
    %1251 = vmatprep.mubr.bf16.mxu0 0
    %1252 = vmatmul.mubr.bf16.gmra.mrb[0].mxu0 %v1152
    %v1253 = vpop.f32.mrb[0].mxu0
    %v1254 = vadd.f32 0.0, %v1253
    %v1255 = vpop.f32.mrb[0].mxu0
    %v1256 = vpop.f32.mrb[0].mxu0
    %v1257 = vadd.f32 0.0, %v1256
    %v1258 = vpop.f32.mrb[0].mxu0
    %1259 = vmatprep.mubr.bf16.mxu0 0
    %1260 = vmatmul.mubr.bf16.gmra.mrb[0].mxu0 %v1153
    %v1261 = vpop.f32.mrb[0].mxu0
    %v1262 = vadd.f32 0.0, %v1261
    %v1263 = vpop.f32.mrb[0].mxu0
    %v1264 = vpop.f32.mrb[0].mxu0
    %v1265 = vadd.f32 0.0, %v1264
    %v1266 = vpop.f32.mrb[0].mxu0
    %1267 = vmatprep.mubr.bf16.mxu0 0
    %1268 = vmatmul.mubr.bf16.gmra.mrb[0].mxu0 %v1154
    %v1269 = vpop.f32.mrb[0].mxu0
    %v1270 = vadd.f32 0.0, %v1269
    %v1271 = vpop.f32.mrb[0].mxu0
    %v1272 = vpop.f32.mrb[0].mxu0
    %v1273 = vadd.f32 0.0, %v1272
    %v1274 = vpop.f32.mrb[0].mxu0
    %1275 = vdwg.mxu0
    %1292 = vrot.lane.b32.xlu0 %v1214, 8
    %v1293 = vpop.permute.xlu0 %1292
    %1294 = vrot.lane.b32.xlu0 %v1217, 8
    %v1295 = vpop.permute.xlu0 %1294
    %1296 = vrot.lane.b32.xlu0 %v1222, 8
    %v1297 = vpop.permute.xlu0 %1296
    %1298 = vrot.lane.b32.xlu0 %v1225, 8
    %v1299 = vpop.permute.xlu0 %1298
    %1300 = vrot.lane.b32.xlu0 %v1230, 8
    %v1301 = vpop.permute.xlu0 %1300
    %1302 = vrot.lane.b32.xlu0 %v1233, 8
    %v1303 = vpop.permute.xlu0 %1302
    %1304 = vrot.lane.b32.xlu0 %v1238, 8
    %v1305 = vpop.permute.xlu0 %1304
    %1306 = vrot.lane.b32.xlu0 %v1241, 8
    %v1307 = vpop.permute.xlu0 %1306
    %1308 = vrot.lane.b32.xlu0 %v1246, 8
    %v1309 = vpop.permute.xlu0 %1308
    %1310 = vrot.lane.b32.xlu0 %v1249, 8
    %v1311 = vpop.permute.xlu0 %1310
    %1312 = vrot.lane.b32.xlu0 %v1254, 8
    %v1313 = vpop.permute.xlu0 %1312
    %1314 = vrot.lane.b32.xlu0 %v1257, 8
    %v1315 = vpop.permute.xlu0 %1314
    %1316 = vrot.lane.b32.xlu0 %v1262, 8
    %v1317 = vpop.permute.xlu0 %1316
    %1318 = vrot.lane.b32.xlu0 %v1265, 8
    %v1319 = vpop.permute.xlu0 %1318
    %1320 = vrot.lane.b32.xlu0 %v1270, 8
    %v1321 = vpop.permute.xlu0 %1320
    %1322 = vrot.lane.b32.xlu0 %v1273, 8
    %v1323 = vpop.permute.xlu0 %1322
    %vm1340 = vcmask 130112
    %1341 = vst.msk [vmem:[#allocation2] sm:$0xff] %vm1340, %v1293
    %1342 = vst.msk [vmem:[#allocation2 + $0x8] sm:$0xff] %vm1340, %v1295
    %1343 = vst.msk [vmem:[#allocation2 + $0x10] sm:$0xff] %vm1340, %v1297
    %1344 = vst.msk [vmem:[#allocation2 + $0x18] sm:$0xff] %vm1340, %v1299
    %1345 = vst.msk [vmem:[#allocation2 + $0x20] sm:$0xff] %vm1340, %v1301
    %1346 = vst.msk [vmem:[#allocation2 + $0x28] sm:$0xff] %vm1340, %v1303
    %1347 = vst.msk [vmem:[#allocation2 + $0x30] sm:$0xff] %vm1340, %v1305
    %1348 = vst.msk [vmem:[#allocation2 + $0x38] sm:$0xff] %vm1340, %v1307
    %1349 = vst.msk [vmem:[#allocation2 + $0x40] sm:$0xff] %vm1340, %v1309
    %1350 = vst.msk [vmem:[#allocation2 + $0x48] sm:$0xff] %vm1340, %v1311
    %1351 = vst.msk [vmem:[#allocation2 + $0x50] sm:$0xff] %vm1340, %v1313
    %1352 = vst.msk [vmem:[#allocation2 + $0x58] sm:$0xff] %vm1340, %v1315
    %1353 = vst.msk [vmem:[#allocation2 + $0x60] sm:$0xff] %vm1340, %v1317
    %1354 = vst.msk [vmem:[#allocation2 + $0x68] sm:$0xff] %vm1340, %v1319
    %1355 = vst.msk [vmem:[#allocation2 + $0x70] sm:$0xff] %vm1340, %v1321
    %1356 = vst.msk [vmem:[#allocation2 + $0x78] sm:$0xff] %vm1340, %v1323
    %1357 = vrot.lane.b32.xlu0 %v224, 112
    %v1358 = vpop.permute.xlu0 %1357
    %1359 = vrot.lane.b32.xlu0 %v225, 112
    %v1360 = vpop.permute.xlu0 %1359
    %1361 = vrot.lane.b32.xlu0 %v226, 112
    %v1362 = vpop.permute.xlu0 %1361
    %1363 = vrot.lane.b32.xlu0 %v227, 112
    %v1364 = vpop.permute.xlu0 %1363
    %1365 = vrot.lane.b32.xlu0 %v228, 112
    %v1366 = vpop.permute.xlu0 %1365
    %1367 = vrot.lane.b32.xlu0 %v229, 112
    %v1368 = vpop.permute.xlu0 %1367
    %1369 = vrot.lane.b32.xlu0 %v230, 112
    %v1370 = vpop.permute.xlu0 %1369
    %1371 = vrot.lane.b32.xlu0 %v231, 112
    %v1372 = vpop.permute.xlu0 %1371
    %1373 = vrot.lane.b32.xlu0 %v224, 80
    %v1374 = vpop.permute.xlu0 %1373
    %1375 = vrot.lane.b32.xlu0 %v225, 80
    %v1376 = vpop.permute.xlu0 %1375
    %1377 = vrot.lane.b32.xlu0 %v226, 80
    %v1378 = vpop.permute.xlu0 %1377
    %1379 = vrot.lane.b32.xlu0 %v227, 80
    %v1380 = vpop.permute.xlu0 %1379
    %1381 = vrot.lane.b32.xlu0 %v228, 80
    %v1382 = vpop.permute.xlu0 %1381
    %1383 = vrot.lane.b32.xlu0 %v229, 80
    %v1384 = vpop.permute.xlu0 %1383
    %1385 = vrot.lane.b32.xlu0 %v230, 80
    %v1386 = vpop.permute.xlu0 %1385
    %1387 = vrot.lane.b32.xlu0 %v231, 80
    %v1388 = vpop.permute.xlu0 %1387
    %v1390 = vsel %vm391, %v1358, 0
    %v1393 = vsel %vm391, %v1360, 0
    %v1396 = vsel %vm391, %v1362, 0
    %v1399 = vsel %vm391, %v1364, 0
    %v1402 = vsel %vm391, %v1366, 0
    %v1405 = vsel %vm391, %v1368, 0
    %v1408 = vsel %vm391, %v1370, 0
    %v1411 = vsel %vm391, %v1372, 0
    %v1414 = vsel %vm391, %v1374, 0
    %v1417 = vsel %vm391, %v1376, 0
    %v1420 = vsel %vm391, %v1378, 0
    %v1423 = vsel %vm391, %v1380, 0
    %v1426 = vsel %vm391, %v1382, 0
    %v1429 = vsel %vm391, %v1384, 0
    %v1432 = vsel %vm391, %v1386, 0
    %v1435 = vsel %vm391, %v1388, 0
    %1437 = vmatprep.subr.bf16.mxu0 0
    %1438 = vmatpush1.bf16.xpose.msra.mxu0 %v1414
    %1439 = vmatprep.subr.bf16.mxu0 0
    %1440 = vmatpush1.bf16.xpose.msra.mxu0 %v1417
    %1441 = vmatprep.subr.bf16.mxu0 0
    %1442 = vmatpush1.bf16.xpose.msra.mxu0 %v1420
    %1443 = vmatprep.subr.bf16.mxu0 0
    %1444 = vmatpush1.bf16.xpose.msra.mxu0 %v1423
    %1445 = vmatprep.subr.bf16.mxu0 0
    %1446 = vmatpush1.bf16.xpose.msra.mxu0 %v1426
    %1447 = vmatprep.subr.bf16.mxu0 0
    %1448 = vmatpush1.bf16.xpose.msra.mxu0 %v1429
    %1449 = vmatprep.subr.bf16.mxu0 0
    %1450 = vmatpush1.bf16.xpose.msra.mxu0 %v1432
    %1451 = vmatprep.subr.bf16.mxu0 0
    %1452 = vmatpush1.bf16.xpose.msra.mxu0 %v1435
    %1453 = vmatprep.subr.bf16.mxu0 0
    %1454 = vmatpush1.bf16.xpose.msra.mxu0 0
    %1455 = vmatprep.subr.bf16.mxu0 0
    %1456 = vmatpush1.bf16.xpose.msra.mxu0 0
    %1457 = vmatprep.subr.bf16.mxu0 0
    %1458 = vmatpush1.bf16.xpose.msra.mxu0 0
    %1459 = vmatprep.subr.bf16.mxu0 0
    %1460 = vmatpush1.bf16.xpose.msra.mxu0 0
    %1461 = vmatprep.subr.bf16.mxu0 0
    %1462 = vmatpush1.bf16.xpose.msra.mxu0 0
    %1463 = vmatprep.subr.bf16.mxu0 0
    %1464 = vmatpush1.bf16.xpose.msra.mxu0 0
    %1465 = vmatprep.subr.bf16.mxu0 0
    %1466 = vmatpush1.bf16.xpose.msra.mxu0 0
    %1467 = vmatprep.subr.bf16.mxu0 0
    %1468 = vmatpush1.bf16.xpose.msra.mxu0 0
    %1469 = vmatprep.mubr.bf16.mxu0 0
    %1470 = vmatmul.mubr.bf16.gmra.mrb[0].mxu0 %v1390
    %v1471 = vpop.f32.mrb[0].mxu0
    %v1472 = vadd.f32 %v351, %v1471
    %v1473 = vpop.f32.mrb[0].mxu0
    %v1474 = vpop.f32.mrb[0].mxu0
    %v1475 = vadd.f32 %v352, %v1474
    %v1476 = vpop.f32.mrb[0].mxu0
    %1477 = vmatprep.mubr.bf16.mxu0 0
    %1478 = vmatmul.mubr.bf16.gmra.mrb[0].mxu0 %v1393
    %v1479 = vpop.f32.mrb[0].mxu0
    %v1480 = vadd.f32 %v353, %v1479
    %v1481 = vpop.f32.mrb[0].mxu0
    %v1482 = vpop.f32.mrb[0].mxu0
    %v1483 = vadd.f32 %v354, %v1482
    %v1484 = vpop.f32.mrb[0].mxu0
    %1485 = vmatprep.mubr.bf16.mxu0 0
    %1486 = vmatmul.mubr.bf16.gmra.mrb[0].mxu0 %v1396
    %v1487 = vpop.f32.mrb[0].mxu0
    %v1488 = vadd.f32 %v355, %v1487
    %v1489 = vpop.f32.mrb[0].mxu0
    %v1490 = vpop.f32.mrb[0].mxu0
    %v1491 = vadd.f32 %v356, %v1490
    %v1492 = vpop.f32.mrb[0].mxu0
    %1493 = vmatprep.mubr.bf16.mxu0 0
    %1494 = vmatmul.mubr.bf16.gmra.mrb[0].mxu0 %v1399
    %v1495 = vpop.f32.mrb[0].mxu0
    %v1496 = vadd.f32 %v357, %v1495
    %v1497 = vpop.f32.mrb[0].mxu0
    %v1498 = vpop.f32.mrb[0].mxu0
    %v1499 = vadd.f32 %v358, %v1498
    %v1500 = vpop.f32.mrb[0].mxu0
    %1501 = vmatprep.mubr.bf16.mxu0 0
    %1502 = vmatmul.mubr.bf16.gmra.mrb[0].mxu0 %v1402
    %v1503 = vpop.f32.mrb[0].mxu0
    %v1504 = vadd.f32 %v359, %v1503
    %v1505 = vpop.f32.mrb[0].mxu0
    %v1506 = vpop.f32.mrb[0].mxu0
    %v1507 = vadd.f32 %v360, %v1506
    %v1508 = vpop.f32.mrb[0].mxu0
    %1509 = vmatprep.mubr.bf16.mxu0 0
    %1510 = vmatmul.mubr.bf16.gmra.mrb[0].mxu0 %v1405
    %v1511 = vpop.f32.mrb[0].mxu0
    %v1512 = vadd.f32 %v361, %v1511
    %v1513 = vpop.f32.mrb[0].mxu0
    %v1514 = vpop.f32.mrb[0].mxu0
    %v1515 = vadd.f32 %v362, %v1514
    %v1516 = vpop.f32.mrb[0].mxu0
    %1517 = vmatprep.mubr.bf16.mxu0 0
    %1518 = vmatmul.mubr.bf16.gmra.mrb[0].mxu0 %v1408
    %v1519 = vpop.f32.mrb[0].mxu0
    %v1520 = vadd.f32 %v363, %v1519
    %v1521 = vpop.f32.mrb[0].mxu0
    %v1522 = vpop.f32.mrb[0].mxu0
    %v1523 = vadd.f32 %v364, %v1522
    %v1524 = vpop.f32.mrb[0].mxu0
    %1525 = vmatprep.mubr.bf16.mxu0 0
    %1526 = vmatmul.mubr.bf16.gmra.mrb[0].mxu0 %v1411
    %v1527 = vpop.f32.mrb[0].mxu0
    %v1528 = vadd.f32 %v365, %v1527
    %v1529 = vpop.f32.mrb[0].mxu0
    %v1530 = vpop.f32.mrb[0].mxu0
    %v1531 = vadd.f32 %v366, %v1530
    %v1532 = vpop.f32.mrb[0].mxu0
    %1533 = vdwg.mxu0
    %1534 = vmax.xlane.f32.xlu0 %v1472
    %v1535 = vpop.xlane.xlu0 %1534
    %1536 = vmax.xlane.f32.xlu0 %v1475
    %v1537 = vpop.xlane.xlu0 %1536
    %1538 = vmax.xlane.f32.xlu0 %v1480
    %v1539 = vpop.xlane.xlu0 %1538
    %1540 = vmax.xlane.f32.xlu0 %v1483
    %v1541 = vpop.xlane.xlu0 %1540
    %1542 = vmax.xlane.f32.xlu0 %v1488
    %v1543 = vpop.xlane.xlu0 %1542
    %1544 = vmax.xlane.f32.xlu0 %v1491
    %v1545 = vpop.xlane.xlu0 %1544
    %1546 = vmax.xlane.f32.xlu0 %v1496
    %v1547 = vpop.xlane.xlu0 %1546
    %1548 = vmax.xlane.f32.xlu0 %v1499
    %v1549 = vpop.xlane.xlu0 %1548
    %1550 = vmax.xlane.f32.xlu0 %v1504
    %v1551 = vpop.xlane.xlu0 %1550
    %1552 = vmax.xlane.f32.xlu0 %v1507
    %v1553 = vpop.xlane.xlu0 %1552
    %1554 = vmax.xlane.f32.xlu0 %v1512
    %v1555 = vpop.xlane.xlu0 %1554
    %1556 = vmax.xlane.f32.xlu0 %v1515
    %v1557 = vpop.xlane.xlu0 %1556
    %1558 = vmax.xlane.f32.xlu0 %v1520
    %v1559 = vpop.xlane.xlu0 %1558
    %1560 = vmax.xlane.f32.xlu0 %v1523
    %v1561 = vpop.xlane.xlu0 %1560
    %1562 = vmax.xlane.f32.xlu0 %v1528
    %v1563 = vpop.xlane.xlu0 %1562
    %1564 = vmax.xlane.f32.xlu0 %v1531
    %v1565 = vpop.xlane.xlu0 %1564
    %v1566 = vsub.f32 %v1472, %v1535
    %v1567 = vsub.f32 %v1475, %v1537
    %v1568 = vsub.f32 %v1480, %v1539
    %v1569 = vsub.f32 %v1483, %v1541
    %v1570 = vsub.f32 %v1488, %v1543
    %v1571 = vsub.f32 %v1491, %v1545
    %v1572 = vsub.f32 %v1496, %v1547
    %v1573 = vsub.f32 %v1499, %v1549
    %v1574 = vsub.f32 %v1504, %v1551
    %v1575 = vsub.f32 %v1507, %v1553
    %v1576 = vsub.f32 %v1512, %v1555
    %v1577 = vsub.f32 %v1515, %v1557
    %v1578 = vsub.f32 %v1520, %v1559
    %v1579 = vsub.f32 %v1523, %v1561
    %v1580 = vsub.f32 %v1528, %v1563
    %v1581 = vsub.f32 %v1531, %v1565
    %v1582 = vmul.f32 %v1566, 1.442695
    %v1583 = vpow.pop %v1582
    %v1584 = vmul.f32 %v1567, 1.442695
    %v1585 = vpow.pop %v1584
    %v1586 = vmul.f32 %v1568, 1.442695
    %v1587 = vpow.pop %v1586
    %v1588 = vmul.f32 %v1569, 1.442695
    %v1589 = vpow.pop %v1588
    %v1590 = vmul.f32 %v1570, 1.442695
    %v1591 = vpow.pop %v1590
    %v1592 = vmul.f32 %v1571, 1.442695
    %v1593 = vpow.pop %v1592
    %v1594 = vmul.f32 %v1572, 1.442695
    %v1595 = vpow.pop %v1594
    %v1596 = vmul.f32 %v1573, 1.442695
    %v1597 = vpow.pop %v1596
    %v1598 = vmul.f32 %v1574, 1.442695
    %v1599 = vpow.pop %v1598
    %v1600 = vmul.f32 %v1575, 1.442695
    %v1601 = vpow.pop %v1600
    %v1602 = vmul.f32 %v1576, 1.442695
    %v1603 = vpow.pop %v1602
    %v1604 = vmul.f32 %v1577, 1.442695
    %v1605 = vpow.pop %v1604
    %v1606 = vmul.f32 %v1578, 1.442695
    %v1607 = vpow.pop %v1606
    %v1608 = vmul.f32 %v1579, 1.442695
    %v1609 = vpow.pop %v1608
    %v1610 = vmul.f32 %v1580, 1.442695
    %v1611 = vpow.pop %v1610
    %v1612 = vmul.f32 %v1581, 1.442695
    %v1613 = vpow.pop %v1612
    %1614 = vadd.xlane.f32.xlu0 %v1583
    %v1615 = vpop.xlane.xlu0 %1614
    %1616 = vadd.xlane.f32.xlu0 %v1585
    %v1617 = vpop.xlane.xlu0 %1616
    %1618 = vadd.xlane.f32.xlu0 %v1587
    %v1619 = vpop.xlane.xlu0 %1618
    %1620 = vadd.xlane.f32.xlu0 %v1589
    %v1621 = vpop.xlane.xlu0 %1620
    %1622 = vadd.xlane.f32.xlu0 %v1591
    %v1623 = vpop.xlane.xlu0 %1622
    %1624 = vadd.xlane.f32.xlu0 %v1593
    %v1625 = vpop.xlane.xlu0 %1624
    %1626 = vadd.xlane.f32.xlu0 %v1595
    %v1627 = vpop.xlane.xlu0 %1626
    %1628 = vadd.xlane.f32.xlu0 %v1597
    %v1629 = vpop.xlane.xlu0 %1628
    %1630 = vadd.xlane.f32.xlu0 %v1599
    %v1631 = vpop.xlane.xlu0 %1630
    %1632 = vadd.xlane.f32.xlu0 %v1601
    %v1633 = vpop.xlane.xlu0 %1632
    %1634 = vadd.xlane.f32.xlu0 %v1603
    %v1635 = vpop.xlane.xlu0 %1634
    %1636 = vadd.xlane.f32.xlu0 %v1605
    %v1637 = vpop.xlane.xlu0 %1636
    %1638 = vadd.xlane.f32.xlu0 %v1607
    %v1639 = vpop.xlane.xlu0 %1638
    %1640 = vadd.xlane.f32.xlu0 %v1609
    %v1641 = vpop.xlane.xlu0 %1640
    %1642 = vadd.xlane.f32.xlu0 %v1611
    %v1643 = vpop.xlane.xlu0 %1642
    %1644 = vadd.xlane.f32.xlu0 %v1613
    %v1645 = vpop.xlane.xlu0 %1644
    %v1646 = vrcp.pop %v1615
    %v1647 = vrcp.pop %v1617
    %v1648 = vrcp.pop %v1619
    %v1649 = vrcp.pop %v1621
    %v1650 = vrcp.pop %v1623
    %v1651 = vrcp.pop %v1625
    %v1652 = vrcp.pop %v1627
    %v1653 = vrcp.pop %v1629
    %v1654 = vrcp.pop %v1631
    %v1655 = vrcp.pop %v1633
    %v1656 = vrcp.pop %v1635
    %v1657 = vrcp.pop %v1637
    %v1658 = vrcp.pop %v1639
    %v1659 = vrcp.pop %v1641
    %v1660 = vrcp.pop %v1643
    %v1661 = vrcp.pop %v1645
    %v1662 = vmul.f32 %v1583, %v1646
    %v1663 = vmul.f32 %v1585, %v1647
    %v1664 = vmul.f32 %v1587, %v1648
    %v1665 = vmul.f32 %v1589, %v1649
    %v1666 = vmul.f32 %v1591, %v1650
    %v1667 = vmul.f32 %v1593, %v1651
    %v1668 = vmul.f32 %v1595, %v1652
    %v1669 = vmul.f32 %v1597, %v1653
    %v1670 = vmul.f32 %v1599, %v1654
    %v1671 = vmul.f32 %v1601, %v1655
    %v1672 = vmul.f32 %v1603, %v1656
    %v1673 = vmul.f32 %v1605, %v1657
    %v1674 = vmul.f32 %v1607, %v1658
    %v1675 = vmul.f32 %v1609, %v1659
    %v1676 = vmul.f32 %v1611, %v1660
    %v1677 = vmul.f32 %v1613, %v1661
    %v1678 = vpack.c.bf16 %v1663, %v1662
    %v1679 = vpack.c.bf16 %v1665, %v1664
    %v1680 = vpack.c.bf16 %v1667, %v1666
    %v1681 = vpack.c.bf16 %v1669, %v1668
    %v1682 = vpack.c.bf16 %v1671, %v1670
    %v1683 = vpack.c.bf16 %v1673, %v1672
    %v1684 = vpack.c.bf16 %v1675, %v1674
    %v1685 = vpack.c.bf16 %v1677, %v1676
    %1686 = vrot.lane.b32.xlu0 %v224, 48
    %v1687 = vpop.permute.xlu0 %1686
    %1688 = vrot.lane.b32.xlu0 %v225, 48
    %v1689 = vpop.permute.xlu0 %1688
    %1690 = vrot.lane.b32.xlu0 %v226, 48
    %v1691 = vpop.permute.xlu0 %1690
    %1692 = vrot.lane.b32.xlu0 %v227, 48
    %v1693 = vpop.permute.xlu0 %1692
    %1694 = vrot.lane.b32.xlu0 %v228, 48
    %v1695 = vpop.permute.xlu0 %1694
    %1696 = vrot.lane.b32.xlu0 %v229, 48
    %v1697 = vpop.permute.xlu0 %1696
    %1698 = vrot.lane.b32.xlu0 %v230, 48
    %v1699 = vpop.permute.xlu0 %1698
    %1700 = vrot.lane.b32.xlu0 %v231, 48
    %v1701 = vpop.permute.xlu0 %1700
    %1710 = vmatprep.subr.bf16.mxu0 0
    %1711 = vmatpush1.bf16.msra.mxu0 %v1687
    %1712 = vmatprep.subr.bf16.mxu0 0
    %1713 = vmatpush1.bf16.msra.mxu0 %v1689
    %1714 = vmatprep.subr.bf16.mxu0 0
    %1715 = vmatpush1.bf16.msra.mxu0 %v1691
    %1716 = vmatprep.subr.bf16.mxu0 0
    %1717 = vmatpush1.bf16.msra.mxu0 %v1693
    %1718 = vmatprep.subr.bf16.mxu0 0
    %1719 = vmatpush1.bf16.msra.mxu0 %v1695
    %1720 = vmatprep.subr.bf16.mxu0 0
    %1721 = vmatpush1.bf16.msra.mxu0 %v1697
    %1722 = vmatprep.subr.bf16.mxu0 0
    %1723 = vmatpush1.bf16.msra.mxu0 %v1699
    %1724 = vmatprep.subr.bf16.mxu0 0
    %1725 = vmatpush1.bf16.msra.mxu0 %v1701
    %1726 = vmatprep.subr.bf16.mxu0 0
    %1727 = vmatpush1.bf16.msra.mxu0 0
    %1728 = vmatprep.subr.bf16.mxu0 0
    %1729 = vmatpush1.bf16.msra.mxu0 0
    %1730 = vmatprep.subr.bf16.mxu0 0
    %1731 = vmatpush1.bf16.msra.mxu0 0
    %1732 = vmatprep.subr.bf16.mxu0 0
    %1733 = vmatpush1.bf16.msra.mxu0 0
    %1734 = vmatprep.subr.bf16.mxu0 0
    %1735 = vmatpush1.bf16.msra.mxu0 0
    %1736 = vmatprep.subr.bf16.mxu0 0
    %1737 = vmatpush1.bf16.msra.mxu0 0
    %1738 = vmatprep.subr.bf16.mxu0 0
    %1739 = vmatpush1.bf16.msra.mxu0 0
    %1740 = vmatprep.subr.bf16.mxu0 0
    %1741 = vmatpush1.bf16.msra.mxu0 0
    %1742 = vmatprep.mubr.bf16.mxu0 0
    %1743 = vmatmul.mubr.bf16.gmra.mrb[0].mxu0 %v1678
    %v1744 = vpop.f32.mrb[0].mxu0
    %v1745 = vadd.f32 0.0, %v1744
    %v1746 = vpop.f32.mrb[0].mxu0
    %v1747 = vpop.f32.mrb[0].mxu0
    %v1748 = vadd.f32 0.0, %v1747
    %v1749 = vpop.f32.mrb[0].mxu0
    %1750 = vmatprep.mubr.bf16.mxu0 0
    %1751 = vmatmul.mubr.bf16.gmra.mrb[0].mxu0 %v1679
    %v1752 = vpop.f32.mrb[0].mxu0
    %v1753 = vadd.f32 0.0, %v1752
    %v1754 = vpop.f32.mrb[0].mxu0
    %v1755 = vpop.f32.mrb[0].mxu0
    %v1756 = vadd.f32 0.0, %v1755
    %v1757 = vpop.f32.mrb[0].mxu0
    %1758 = vmatprep.mubr.bf16.mxu0 0
    %1759 = vmatmul.mubr.bf16.gmra.mrb[0].mxu0 %v1680
    %v1760 = vpop.f32.mrb[0].mxu0
    %v1761 = vadd.f32 0.0, %v1760
    %v1762 = vpop.f32.mrb[0].mxu0
    %v1763 = vpop.f32.mrb[0].mxu0
    %v1764 = vadd.f32 0.0, %v1763
    %v1765 = vpop.f32.mrb[0].mxu0
    %1766 = vmatprep.mubr.bf16.mxu0 0
    %1767 = vmatmul.mubr.bf16.gmra.mrb[0].mxu0 %v1681
    %v1768 = vpop.f32.mrb[0].mxu0
    %v1769 = vadd.f32 0.0, %v1768
    %v1770 = vpop.f32.mrb[0].mxu0
    %v1771 = vpop.f32.mrb[0].mxu0
    %v1772 = vadd.f32 0.0, %v1771
    %v1773 = vpop.f32.mrb[0].mxu0
    %1774 = vmatprep.mubr.bf16.mxu0 0
    %1775 = vmatmul.mubr.bf16.gmra.mrb[0].mxu0 %v1682
    %v1776 = vpop.f32.mrb[0].mxu0
    %v1777 = vadd.f32 0.0, %v1776
    %v1778 = vpop.f32.mrb[0].mxu0
    %v1779 = vpop.f32.mrb[0].mxu0
    %v1780 = vadd.f32 0.0, %v1779
    %v1781 = vpop.f32.mrb[0].mxu0
    %1782 = vmatprep.mubr.bf16.mxu0 0
    %1783 = vmatmul.mubr.bf16.gmra.mrb[0].mxu0 %v1683
    %v1784 = vpop.f32.mrb[0].mxu0
    %v1785 = vadd.f32 0.0, %v1784
    %v1786 = vpop.f32.mrb[0].mxu0
    %v1787 = vpop.f32.mrb[0].mxu0
    %v1788 = vadd.f32 0.0, %v1787
    %v1789 = vpop.f32.mrb[0].mxu0
    %1790 = vmatprep.mubr.bf16.mxu0 0
    %1791 = vmatmul.mubr.bf16.gmra.mrb[0].mxu0 %v1684
    %v1792 = vpop.f32.mrb[0].mxu0
    %v1793 = vadd.f32 0.0, %v1792
    %v1794 = vpop.f32.mrb[0].mxu0
    %v1795 = vpop.f32.mrb[0].mxu0
    %v1796 = vadd.f32 0.0, %v1795
    %v1797 = vpop.f32.mrb[0].mxu0
    %1798 = vmatprep.mubr.bf16.mxu0 0
    %1799 = vmatmul.mubr.bf16.gmra.mrb[0].mxu0 %v1685
    %v1800 = vpop.f32.mrb[0].mxu0
    %v1801 = vadd.f32 0.0, %v1800
    %v1802 = vpop.f32.mrb[0].mxu0
    %v1803 = vpop.f32.mrb[0].mxu0
    %v1804 = vadd.f32 0.0, %v1803
    %v1805 = vpop.f32.mrb[0].mxu0
    %1806 = vdwg.mxu0
    %1823 = vrot.lane.b32.xlu0 %v1745, 16
    %v1824 = vpop.permute.xlu0 %1823
    %1825 = vrot.lane.b32.xlu0 %v1748, 16
    %v1826 = vpop.permute.xlu0 %1825
    %1827 = vrot.lane.b32.xlu0 %v1753, 16
    %v1828 = vpop.permute.xlu0 %1827
    %1829 = vrot.lane.b32.xlu0 %v1756, 16
    %v1830 = vpop.permute.xlu0 %1829
    %1831 = vrot.lane.b32.xlu0 %v1761, 16
    %v1832 = vpop.permute.xlu0 %1831
    %1833 = vrot.lane.b32.xlu0 %v1764, 16
    %v1834 = vpop.permute.xlu0 %1833
    %1835 = vrot.lane.b32.xlu0 %v1769, 16
    %v1836 = vpop.permute.xlu0 %1835
    %1837 = vrot.lane.b32.xlu0 %v1772, 16
    %v1838 = vpop.permute.xlu0 %1837
    %1839 = vrot.lane.b32.xlu0 %v1777, 16
    %v1840 = vpop.permute.xlu0 %1839
    %1841 = vrot.lane.b32.xlu0 %v1780, 16
    %v1842 = vpop.permute.xlu0 %1841
    %1843 = vrot.lane.b32.xlu0 %v1785, 16
    %v1844 = vpop.permute.xlu0 %1843
    %1845 = vrot.lane.b32.xlu0 %v1788, 16
    %v1846 = vpop.permute.xlu0 %1845
    %1847 = vrot.lane.b32.xlu0 %v1793, 16
    %v1848 = vpop.permute.xlu0 %1847
    %1849 = vrot.lane.b32.xlu0 %v1796, 16
    %v1850 = vpop.permute.xlu0 %1849
    %1851 = vrot.lane.b32.xlu0 %v1801, 16
    %v1852 = vpop.permute.xlu0 %1851
    %1853 = vrot.lane.b32.xlu0 %v1804, 16
    %v1854 = vpop.permute.xlu0 %1853
    %vm1871 = vcmask 195712
    %1872 = vst.msk [vmem:[#allocation2] sm:$0xff] %vm1871, %v1824
    %1873 = vst.msk [vmem:[#allocation2 + $0x8] sm:$0xff] %vm1871, %v1826
    %1874 = vst.msk [vmem:[#allocation2 + $0x10] sm:$0xff] %vm1871, %v1828
    %1875 = vst.msk [vmem:[#allocation2 + $0x18] sm:$0xff] %vm1871, %v1830
    %1876 = vst.msk [vmem:[#allocation2 + $0x20] sm:$0xff] %vm1871, %v1832
    %1877 = vst.msk [vmem:[#allocation2 + $0x28] sm:$0xff] %vm1871, %v1834
    %1878 = vst.msk [vmem:[#allocation2 + $0x30] sm:$0xff] %vm1871, %v1836
    %1879 = vst.msk [vmem:[#allocation2 + $0x38] sm:$0xff] %vm1871, %v1838
    %1880 = vst.msk [vmem:[#allocation2 + $0x40] sm:$0xff] %vm1871, %v1840
    %1881 = vst.msk [vmem:[#allocation2 + $0x48] sm:$0xff] %vm1871, %v1842
    %1882 = vst.msk [vmem:[#allocation2 + $0x50] sm:$0xff] %vm1871, %v1844
    %1883 = vst.msk [vmem:[#allocation2 + $0x58] sm:$0xff] %vm1871, %v1846
    %1884 = vst.msk [vmem:[#allocation2 + $0x60] sm:$0xff] %vm1871, %v1848
    %1885 = vst.msk [vmem:[#allocation2 + $0x68] sm:$0xff] %vm1871, %v1850
    %1886 = vst.msk [vmem:[#allocation2 + $0x70] sm:$0xff] %vm1871, %v1852
    %1887 = vst.msk [vmem:[#allocation2 + $0x78] sm:$0xff] %vm1871, %v1854
    %1888 = vrot.lane.b32.xlu0 %v224, 104
    %v1889 = vpop.permute.xlu0 %1888
    %1890 = vrot.lane.b32.xlu0 %v225, 104
    %v1891 = vpop.permute.xlu0 %1890
    %1892 = vrot.lane.b32.xlu0 %v226, 104
    %v1893 = vpop.permute.xlu0 %1892
    %1894 = vrot.lane.b32.xlu0 %v227, 104
    %v1895 = vpop.permute.xlu0 %1894
    %1896 = vrot.lane.b32.xlu0 %v228, 104
    %v1897 = vpop.permute.xlu0 %1896
    %1898 = vrot.lane.b32.xlu0 %v229, 104
    %v1899 = vpop.permute.xlu0 %1898
    %1900 = vrot.lane.b32.xlu0 %v230, 104
    %v1901 = vpop.permute.xlu0 %1900
    %1902 = vrot.lane.b32.xlu0 %v231, 104
    %v1903 = vpop.permute.xlu0 %1902
    %1904 = vrot.lane.b32.xlu0 %v224, 72
    %v1905 = vpop.permute.xlu0 %1904
    %1906 = vrot.lane.b32.xlu0 %v225, 72
    %v1907 = vpop.permute.xlu0 %1906
    %1908 = vrot.lane.b32.xlu0 %v226, 72
    %v1909 = vpop.permute.xlu0 %1908
    %1910 = vrot.lane.b32.xlu0 %v227, 72
    %v1911 = vpop.permute.xlu0 %1910
    %1912 = vrot.lane.b32.xlu0 %v228, 72
    %v1913 = vpop.permute.xlu0 %1912
    %1914 = vrot.lane.b32.xlu0 %v229, 72
    %v1915 = vpop.permute.xlu0 %1914
    %1916 = vrot.lane.b32.xlu0 %v230, 72
    %v1917 = vpop.permute.xlu0 %1916
    %1918 = vrot.lane.b32.xlu0 %v231, 72
    %v1919 = vpop.permute.xlu0 %1918
    %v1921 = vsel %vm391, %v1889, 0
    %v1924 = vsel %vm391, %v1891, 0
    %v1927 = vsel %vm391, %v1893, 0
    %v1930 = vsel %vm391, %v1895, 0
    %v1933 = vsel %vm391, %v1897, 0
    %v1936 = vsel %vm391, %v1899, 0
    %v1939 = vsel %vm391, %v1901, 0
    %v1942 = vsel %vm391, %v1903, 0
    %v1945 = vsel %vm391, %v1905, 0
    %v1948 = vsel %vm391, %v1907, 0
    %v1951 = vsel %vm391, %v1909, 0
    %v1954 = vsel %vm391, %v1911, 0
    %v1957 = vsel %vm391, %v1913, 0
    %v1960 = vsel %vm391, %v1915, 0
    %v1963 = vsel %vm391, %v1917, 0
    %v1966 = vsel %vm391, %v1919, 0
    %1968 = vmatprep.subr.bf16.mxu0 0
    %1969 = vmatpush1.bf16.xpose.msra.mxu0 %v1945
    %1970 = vmatprep.subr.bf16.mxu0 0
    %1971 = vmatpush1.bf16.xpose.msra.mxu0 %v1948
    %1972 = vmatprep.subr.bf16.mxu0 0
    %1973 = vmatpush1.bf16.xpose.msra.mxu0 %v1951
    %1974 = vmatprep.subr.bf16.mxu0 0
    %1975 = vmatpush1.bf16.xpose.msra.mxu0 %v1954
    %1976 = vmatprep.subr.bf16.mxu0 0
    %1977 = vmatpush1.bf16.xpose.msra.mxu0 %v1957
    %1978 = vmatprep.subr.bf16.mxu0 0
    %1979 = vmatpush1.bf16.xpose.msra.mxu0 %v1960
    %1980 = vmatprep.subr.bf16.mxu0 0
    %1981 = vmatpush1.bf16.xpose.msra.mxu0 %v1963
    %1982 = vmatprep.subr.bf16.mxu0 0
    %1983 = vmatpush1.bf16.xpose.msra.mxu0 %v1966
    %1984 = vmatprep.subr.bf16.mxu0 0
    %1985 = vmatpush1.bf16.xpose.msra.mxu0 0
    %1986 = vmatprep.subr.bf16.mxu0 0
    %1987 = vmatpush1.bf16.xpose.msra.mxu0 0
    %1988 = vmatprep.subr.bf16.mxu0 0
    %1989 = vmatpush1.bf16.xpose.msra.mxu0 0
    %1990 = vmatprep.subr.bf16.mxu0 0
    %1991 = vmatpush1.bf16.xpose.msra.mxu0 0
    %1992 = vmatprep.subr.bf16.mxu0 0
    %1993 = vmatpush1.bf16.xpose.msra.mxu0 0
    %1994 = vmatprep.subr.bf16.mxu0 0
    %1995 = vmatpush1.bf16.xpose.msra.mxu0 0
    %1996 = vmatprep.subr.bf16.mxu0 0
    %1997 = vmatpush1.bf16.xpose.msra.mxu0 0
    %1998 = vmatprep.subr.bf16.mxu0 0
    %1999 = vmatpush1.bf16.xpose.msra.mxu0 0
    %2000 = vmatprep.mubr.bf16.mxu0 0
    %2001 = vmatmul.mubr.bf16.gmra.mrb[0].mxu0 %v1921
    %v2002 = vpop.f32.mrb[0].mxu0
    %v2003 = vadd.f32 %v351, %v2002
    %v2004 = vpop.f32.mrb[0].mxu0
    %v2005 = vpop.f32.mrb[0].mxu0
    %v2006 = vadd.f32 %v352, %v2005
    %v2007 = vpop.f32.mrb[0].mxu0
    %2008 = vmatprep.mubr.bf16.mxu0 0
    %2009 = vmatmul.mubr.bf16.gmra.mrb[0].mxu0 %v1924
    %v2010 = vpop.f32.mrb[0].mxu0
    %v2011 = vadd.f32 %v353, %v2010
    %v2012 = vpop.f32.mrb[0].mxu0
    %v2013 = vpop.f32.mrb[0].mxu0
    %v2014 = vadd.f32 %v354, %v2013
    %v2015 = vpop.f32.mrb[0].mxu0
    %2016 = vmatprep.mubr.bf16.mxu0 0
    %2017 = vmatmul.mubr.bf16.gmra.mrb[0].mxu0 %v1927
    %v2018 = vpop.f32.mrb[0].mxu0
    %v2019 = vadd.f32 %v355, %v2018
    %v2020 = vpop.f32.mrb[0].mxu0
    %v2021 = vpop.f32.mrb[0].mxu0
    %v2022 = vadd.f32 %v356, %v2021
    %v2023 = vpop.f32.mrb[0].mxu0
    %2024 = vmatprep.mubr.bf16.mxu0 0
    %2025 = vmatmul.mubr.bf16.gmra.mrb[0].mxu0 %v1930
    %v2026 = vpop.f32.mrb[0].mxu0
    %v2027 = vadd.f32 %v357, %v2026
    %v2028 = vpop.f32.mrb[0].mxu0
    %v2029 = vpop.f32.mrb[0].mxu0
    %v2030 = vadd.f32 %v358, %v2029
    %v2031 = vpop.f32.mrb[0].mxu0
    %2032 = vmatprep.mubr.bf16.mxu0 0
    %2033 = vmatmul.mubr.bf16.gmra.mrb[0].mxu0 %v1933
    %v2034 = vpop.f32.mrb[0].mxu0
    %v2035 = vadd.f32 %v359, %v2034
    %v2036 = vpop.f32.mrb[0].mxu0
    %v2037 = vpop.f32.mrb[0].mxu0
    %v2038 = vadd.f32 %v360, %v2037
    %v2039 = vpop.f32.mrb[0].mxu0
    %2040 = vmatprep.mubr.bf16.mxu0 0
    %2041 = vmatmul.mubr.bf16.gmra.mrb[0].mxu0 %v1936
    %v2042 = vpop.f32.mrb[0].mxu0
    %v2043 = vadd.f32 %v361, %v2042
    %v2044 = vpop.f32.mrb[0].mxu0
    %v2045 = vpop.f32.mrb[0].mxu0
    %v2046 = vadd.f32 %v362, %v2045
    %v2047 = vpop.f32.mrb[0].mxu0
    %2048 = vmatprep.mubr.bf16.mxu0 0
    %2049 = vmatmul.mubr.bf16.gmra.mrb[0].mxu0 %v1939
    %v2050 = vpop.f32.mrb[0].mxu0
    %v2051 = vadd.f32 %v363, %v2050
    %v2052 = vpop.f32.mrb[0].mxu0
    %v2053 = vpop.f32.mrb[0].mxu0
    %v2054 = vadd.f32 %v364, %v2053
    %v2055 = vpop.f32.mrb[0].mxu0
    %2056 = vmatprep.mubr.bf16.mxu0 0
    %2057 = vmatmul.mubr.bf16.gmra.mrb[0].mxu0 %v1942
    %v2058 = vpop.f32.mrb[0].mxu0
    %v2059 = vadd.f32 %v365, %v2058
    %v2060 = vpop.f32.mrb[0].mxu0
    %v2061 = vpop.f32.mrb[0].mxu0
    %v2062 = vadd.f32 %v366, %v2061
    %v2063 = vpop.f32.mrb[0].mxu0
    %2064 = vdwg.mxu0
    %2065 = vmax.xlane.f32.xlu0 %v2003
    %v2066 = vpop.xlane.xlu0 %2065
    %2067 = vmax.xlane.f32.xlu0 %v2006
    %v2068 = vpop.xlane.xlu0 %2067
    %2069 = vmax.xlane.f32.xlu0 %v2011
    %v2070 = vpop.xlane.xlu0 %2069
    %2071 = vmax.xlane.f32.xlu0 %v2014
    %v2072 = vpop.xlane.xlu0 %2071
    %2073 = vmax.xlane.f32.xlu0 %v2019
    %v2074 = vpop.xlane.xlu0 %2073
    %2075 = vmax.xlane.f32.xlu0 %v2022
    %v2076 = vpop.xlane.xlu0 %2075
    %2077 = vmax.xlane.f32.xlu0 %v2027
    %v2078 = vpop.xlane.xlu0 %2077
    %2079 = vmax.xlane.f32.xlu0 %v2030
    %v2080 = vpop.xlane.xlu0 %2079
    %2081 = vmax.xlane.f32.xlu0 %v2035
    %v2082 = vpop.xlane.xlu0 %2081
    %2083 = vmax.xlane.f32.xlu0 %v2038
    %v2084 = vpop.xlane.xlu0 %2083
    %2085 = vmax.xlane.f32.xlu0 %v2043
    %v2086 = vpop.xlane.xlu0 %2085
    %2087 = vmax.xlane.f32.xlu0 %v2046
    %v2088 = vpop.xlane.xlu0 %2087
    %2089 = vmax.xlane.f32.xlu0 %v2051
    %v2090 = vpop.xlane.xlu0 %2089
    %2091 = vmax.xlane.f32.xlu0 %v2054
    %v2092 = vpop.xlane.xlu0 %2091
    %2093 = vmax.xlane.f32.xlu0 %v2059
    %v2094 = vpop.xlane.xlu0 %2093
    %2095 = vmax.xlane.f32.xlu0 %v2062
    %v2096 = vpop.xlane.xlu0 %2095
    %v2097 = vsub.f32 %v2003, %v2066
    %v2098 = vsub.f32 %v2006, %v2068
    %v2099 = vsub.f32 %v2011, %v2070
    %v2100 = vsub.f32 %v2014, %v2072
    %v2101 = vsub.f32 %v2019, %v2074
    %v2102 = vsub.f32 %v2022, %v2076
    %v2103 = vsub.f32 %v2027, %v2078
    %v2104 = vsub.f32 %v2030, %v2080
    %v2105 = vsub.f32 %v2035, %v2082
    %v2106 = vsub.f32 %v2038, %v2084
    %v2107 = vsub.f32 %v2043, %v2086
    %v2108 = vsub.f32 %v2046, %v2088
    %v2109 = vsub.f32 %v2051, %v2090
    %v2110 = vsub.f32 %v2054, %v2092
    %v2111 = vsub.f32 %v2059, %v2094
    %v2112 = vsub.f32 %v2062, %v2096
    %v2113 = vmul.f32 %v2097, 1.442695
    %v2114 = vpow.pop %v2113
    %v2115 = vmul.f32 %v2098, 1.442695
    %v2116 = vpow.pop %v2115
    %v2117 = vmul.f32 %v2099, 1.442695
    %v2118 = vpow.pop %v2117
    %v2119 = vmul.f32 %v2100, 1.442695
    %v2120 = vpow.pop %v2119
    %v2121 = vmul.f32 %v2101, 1.442695
    %v2122 = vpow.pop %v2121
    %v2123 = vmul.f32 %v2102, 1.442695
    %v2124 = vpow.pop %v2123
    %v2125 = vmul.f32 %v2103, 1.442695
    %v2126 = vpow.pop %v2125
    %v2127 = vmul.f32 %v2104, 1.442695
    %v2128 = vpow.pop %v2127
    %v2129 = vmul.f32 %v2105, 1.442695
    %v2130 = vpow.pop %v2129
    %v2131 = vmul.f32 %v2106, 1.442695
    %v2132 = vpow.pop %v2131
    %v2133 = vmul.f32 %v2107, 1.442695
    %v2134 = vpow.pop %v2133
    %v2135 = vmul.f32 %v2108, 1.442695
    %v2136 = vpow.pop %v2135
    %v2137 = vmul.f32 %v2109, 1.442695
    %v2138 = vpow.pop %v2137
    %v2139 = vmul.f32 %v2110, 1.442695
    %v2140 = vpow.pop %v2139
    %v2141 = vmul.f32 %v2111, 1.442695
    %v2142 = vpow.pop %v2141
    %v2143 = vmul.f32 %v2112, 1.442695
    %v2144 = vpow.pop %v2143
    %2145 = vadd.xlane.f32.xlu0 %v2114
    %v2146 = vpop.xlane.xlu0 %2145
    %2147 = vadd.xlane.f32.xlu0 %v2116
    %v2148 = vpop.xlane.xlu0 %2147
    %2149 = vadd.xlane.f32.xlu0 %v2118
    %v2150 = vpop.xlane.xlu0 %2149
    %2151 = vadd.xlane.f32.xlu0 %v2120
    %v2152 = vpop.xlane.xlu0 %2151
    %2153 = vadd.xlane.f32.xlu0 %v2122
    %v2154 = vpop.xlane.xlu0 %2153
    %2155 = vadd.xlane.f32.xlu0 %v2124
    %v2156 = vpop.xlane.xlu0 %2155
    %2157 = vadd.xlane.f32.xlu0 %v2126
    %v2158 = vpop.xlane.xlu0 %2157
    %2159 = vadd.xlane.f32.xlu0 %v2128
    %v2160 = vpop.xlane.xlu0 %2159
    %2161 = vadd.xlane.f32.xlu0 %v2130
    %v2162 = vpop.xlane.xlu0 %2161
    %2163 = vadd.xlane.f32.xlu0 %v2132
    %v2164 = vpop.xlane.xlu0 %2163
    %2165 = vadd.xlane.f32.xlu0 %v2134
    %v2166 = vpop.xlane.xlu0 %2165
    %2167 = vadd.xlane.f32.xlu0 %v2136
    %v2168 = vpop.xlane.xlu0 %2167
    %2169 = vadd.xlane.f32.xlu0 %v2138
    %v2170 = vpop.xlane.xlu0 %2169
    %2171 = vadd.xlane.f32.xlu0 %v2140
    %v2172 = vpop.xlane.xlu0 %2171
    %2173 = vadd.xlane.f32.xlu0 %v2142
    %v2174 = vpop.xlane.xlu0 %2173
    %2175 = vadd.xlane.f32.xlu0 %v2144
    %v2176 = vpop.xlane.xlu0 %2175
    %v2177 = vrcp.pop %v2146
    %v2178 = vrcp.pop %v2148
    %v2179 = vrcp.pop %v2150
    %v2180 = vrcp.pop %v2152
    %v2181 = vrcp.pop %v2154
    %v2182 = vrcp.pop %v2156
    %v2183 = vrcp.pop %v2158
    %v2184 = vrcp.pop %v2160
    %v2185 = vrcp.pop %v2162
    %v2186 = vrcp.pop %v2164
    %v2187 = vrcp.pop %v2166
    %v2188 = vrcp.pop %v2168
    %v2189 = vrcp.pop %v2170
    %v2190 = vrcp.pop %v2172
    %v2191 = vrcp.pop %v2174
    %v2192 = vrcp.pop %v2176
    %v2193 = vmul.f32 %v2114, %v2177
    %v2194 = vmul.f32 %v2116, %v2178
    %v2195 = vmul.f32 %v2118, %v2179
    %v2196 = vmul.f32 %v2120, %v2180
    %v2197 = vmul.f32 %v2122, %v2181
    %v2198 = vmul.f32 %v2124, %v2182
    %v2199 = vmul.f32 %v2126, %v2183
    %v2200 = vmul.f32 %v2128, %v2184
    %v2201 = vmul.f32 %v2130, %v2185
    %v2202 = vmul.f32 %v2132, %v2186
    %v2203 = vmul.f32 %v2134, %v2187
    %v2204 = vmul.f32 %v2136, %v2188
    %v2205 = vmul.f32 %v2138, %v2189
    %v2206 = vmul.f32 %v2140, %v2190
    %v2207 = vmul.f32 %v2142, %v2191
    %v2208 = vmul.f32 %v2144, %v2192
    %v2209 = vpack.c.bf16 %v2194, %v2193
    %v2210 = vpack.c.bf16 %v2196, %v2195
    %v2211 = vpack.c.bf16 %v2198, %v2197
    %v2212 = vpack.c.bf16 %v2200, %v2199
    %v2213 = vpack.c.bf16 %v2202, %v2201
    %v2214 = vpack.c.bf16 %v2204, %v2203
    %v2215 = vpack.c.bf16 %v2206, %v2205
    %v2216 = vpack.c.bf16 %v2208, %v2207
    %2217 = vrot.lane.b32.xlu0 %v224, 40
    %v2218 = vpop.permute.xlu0 %2217
    %2219 = vrot.lane.b32.xlu0 %v225, 40
    %v2220 = vpop.permute.xlu0 %2219
    %2221 = vrot.lane.b32.xlu0 %v226, 40
    %v2222 = vpop.permute.xlu0 %2221
    %2223 = vrot.lane.b32.xlu0 %v227, 40
    %v2224 = vpop.permute.xlu0 %2223
    %2225 = vrot.lane.b32.xlu0 %v228, 40
    %v2226 = vpop.permute.xlu0 %2225
    %2227 = vrot.lane.b32.xlu0 %v229, 40
    %v2228 = vpop.permute.xlu0 %2227
    %2229 = vrot.lane.b32.xlu0 %v230, 40
    %v2230 = vpop.permute.xlu0 %2229
    %2231 = vrot.lane.b32.xlu0 %v231, 40
    %v2232 = vpop.permute.xlu0 %2231
    %2241 = vmatprep.subr.bf16.mxu0 0
    %2242 = vmatpush1.bf16.msra.mxu0 %v2218
    %2243 = vmatprep.subr.bf16.mxu0 0
    %2244 = vmatpush1.bf16.msra.mxu0 %v2220
    %2245 = vmatprep.subr.bf16.mxu0 0
    %2246 = vmatpush1.bf16.msra.mxu0 %v2222
    %2247 = vmatprep.subr.bf16.mxu0 0
    %2248 = vmatpush1.bf16.msra.mxu0 %v2224
    %2249 = vmatprep.subr.bf16.mxu0 0
    %2250 = vmatpush1.bf16.msra.mxu0 %v2226
    %2251 = vmatprep.subr.bf16.mxu0 0
    %2252 = vmatpush1.bf16.msra.mxu0 %v2228
    %2253 = vmatprep.subr.bf16.mxu0 0
    %2254 = vmatpush1.bf16.msra.mxu0 %v2230
    %2255 = vmatprep.subr.bf16.mxu0 0
    %2256 = vmatpush1.bf16.msra.mxu0 %v2232
    %2257 = vmatprep.subr.bf16.mxu0 0
    %2258 = vmatpush1.bf16.msra.mxu0 0
    %2259 = vmatprep.subr.bf16.mxu0 0
    %2260 = vmatpush1.bf16.msra.mxu0 0
    %2261 = vmatprep.subr.bf16.mxu0 0
    %2262 = vmatpush1.bf16.msra.mxu0 0
    %2263 = vmatprep.subr.bf16.mxu0 0
    %2264 = vmatpush1.bf16.msra.mxu0 0
    %2265 = vmatprep.subr.bf16.mxu0 0
    %2266 = vmatpush1.bf16.msra.mxu0 0
    %2267 = vmatprep.subr.bf16.mxu0 0
    %2268 = vmatpush1.bf16.msra.mxu0 0
    %2269 = vmatprep.subr.bf16.mxu0 0
    %2270 = vmatpush1.bf16.msra.mxu0 0
    %2271 = vmatprep.subr.bf16.mxu0 0
    %2272 = vmatpush1.bf16.msra.mxu0 0
    %2273 = vmatprep.mubr.bf16.mxu0 0
    %2274 = vmatmul.mubr.bf16.gmra.mrb[0].mxu0 %v2209
    %v2275 = vpop.f32.mrb[0].mxu0
    %v2276 = vadd.f32 0.0, %v2275
    %v2277 = vpop.f32.mrb[0].mxu0
    %v2278 = vpop.f32.mrb[0].mxu0
    %v2279 = vadd.f32 0.0, %v2278
    %v2280 = vpop.f32.mrb[0].mxu0
    %2281 = vmatprep.mubr.bf16.mxu0 0
    %2282 = vmatmul.mubr.bf16.gmra.mrb[0].mxu0 %v2210
    %v2283 = vpop.f32.mrb[0].mxu0
    %v2284 = vadd.f32 0.0, %v2283
    %v2285 = vpop.f32.mrb[0].mxu0
    %v2286 = vpop.f32.mrb[0].mxu0
    %v2287 = vadd.f32 0.0, %v2286
    %v2288 = vpop.f32.mrb[0].mxu0
    %2289 = vmatprep.mubr.bf16.mxu0 0
    %2290 = vmatmul.mubr.bf16.gmra.mrb[0].mxu0 %v2211
    %v2291 = vpop.f32.mrb[0].mxu0
    %v2292 = vadd.f32 0.0, %v2291
    %v2293 = vpop.f32.mrb[0].mxu0
    %v2294 = vpop.f32.mrb[0].mxu0
    %v2295 = vadd.f32 0.0, %v2294
    %v2296 = vpop.f32.mrb[0].mxu0
    %2297 = vmatprep.mubr.bf16.mxu0 0
    %2298 = vmatmul.mubr.bf16.gmra.mrb[0].mxu0 %v2212
    %v2299 = vpop.f32.mrb[0].mxu0
    %v2300 = vadd.f32 0.0, %v2299
    %v2301 = vpop.f32.mrb[0].mxu0
    %v2302 = vpop.f32.mrb[0].mxu0
    %v2303 = vadd.f32 0.0, %v2302
    %v2304 = vpop.f32.mrb[0].mxu0
    %2305 = vmatprep.mubr.bf16.mxu0 0
    %2306 = vmatmul.mubr.bf16.gmra.mrb[0].mxu0 %v2213
    %v2307 = vpop.f32.mrb[0].mxu0
    %v2308 = vadd.f32 0.0, %v2307
    %v2309 = vpop.f32.mrb[0].mxu0
    %v2310 = vpop.f32.mrb[0].mxu0
    %v2311 = vadd.f32 0.0, %v2310
    %v2312 = vpop.f32.mrb[0].mxu0
    %2313 = vmatprep.mubr.bf16.mxu0 0
    %2314 = vmatmul.mubr.bf16.gmra.mrb[0].mxu0 %v2214
    %v2315 = vpop.f32.mrb[0].mxu0
    %v2316 = vadd.f32 0.0, %v2315
    %v2317 = vpop.f32.mrb[0].mxu0
    %v2318 = vpop.f32.mrb[0].mxu0
    %v2319 = vadd.f32 0.0, %v2318
    %v2320 = vpop.f32.mrb[0].mxu0
    %2321 = vmatprep.mubr.bf16.mxu0 0
    %2322 = vmatmul.mubr.bf16.gmra.mrb[0].mxu0 %v2215
    %v2323 = vpop.f32.mrb[0].mxu0
    %v2324 = vadd.f32 0.0, %v2323
    %v2325 = vpop.f32.mrb[0].mxu0
    %v2326 = vpop.f32.mrb[0].mxu0
    %v2327 = vadd.f32 0.0, %v2326
    %v2328 = vpop.f32.mrb[0].mxu0
    %2329 = vmatprep.mubr.bf16.mxu0 0
    %2330 = vmatmul.mubr.bf16.gmra.mrb[0].mxu0 %v2216
    %v2331 = vpop.f32.mrb[0].mxu0
    %v2332 = vadd.f32 0.0, %v2331
    %v2333 = vpop.f32.mrb[0].mxu0
    %v2334 = vpop.f32.mrb[0].mxu0
    %v2335 = vadd.f32 0.0, %v2334
    %v2336 = vpop.f32.mrb[0].mxu0
    %2337 = vdwg.mxu0
    %2354 = vrot.lane.b32.xlu0 %v2276, 24
    %v2355 = vpop.permute.xlu0 %2354
    %2356 = vrot.lane.b32.xlu0 %v2279, 24
    %v2357 = vpop.permute.xlu0 %2356
    %2358 = vrot.lane.b32.xlu0 %v2284, 24
    %v2359 = vpop.permute.xlu0 %2358
    %2360 = vrot.lane.b32.xlu0 %v2287, 24
    %v2361 = vpop.permute.xlu0 %2360
    %2362 = vrot.lane.b32.xlu0 %v2292, 24
    %v2363 = vpop.permute.xlu0 %2362
    %2364 = vrot.lane.b32.xlu0 %v2295, 24
    %v2365 = vpop.permute.xlu0 %2364
    %2366 = vrot.lane.b32.xlu0 %v2300, 24
    %v2367 = vpop.permute.xlu0 %2366
    %2368 = vrot.lane.b32.xlu0 %v2303, 24
    %v2369 = vpop.permute.xlu0 %2368
    %2370 = vrot.lane.b32.xlu0 %v2308, 24
    %v2371 = vpop.permute.xlu0 %2370
    %2372 = vrot.lane.b32.xlu0 %v2311, 24
    %v2373 = vpop.permute.xlu0 %2372
    %2374 = vrot.lane.b32.xlu0 %v2316, 24
    %v2375 = vpop.permute.xlu0 %2374
    %2376 = vrot.lane.b32.xlu0 %v2319, 24
    %v2377 = vpop.permute.xlu0 %2376
    %2378 = vrot.lane.b32.xlu0 %v2324, 24
    %v2379 = vpop.permute.xlu0 %2378
    %2380 = vrot.lane.b32.xlu0 %v2327, 24
    %v2381 = vpop.permute.xlu0 %2380
    %2382 = vrot.lane.b32.xlu0 %v2332, 24
    %v2383 = vpop.permute.xlu0 %2382
    %2384 = vrot.lane.b32.xlu0 %v2335, 24
    %v2385 = vpop.permute.xlu0 %2384
    %vm2402 = vcmask 261312
    %2403 = vst.msk [vmem:[#allocation2] sm:$0xff] %vm2402, %v2355
    %2404 = vst.msk [vmem:[#allocation2 + $0x8] sm:$0xff] %vm2402, %v2357
    %2405 = vst.msk [vmem:[#allocation2 + $0x10] sm:$0xff] %vm2402, %v2359
    %2406 = vst.msk [vmem:[#allocation2 + $0x18] sm:$0xff] %vm2402, %v2361
    %2407 = vst.msk [vmem:[#allocation2 + $0x20] sm:$0xff] %vm2402, %v2363
    %2408 = vst.msk [vmem:[#allocation2 + $0x28] sm:$0xff] %vm2402, %v2365
    %2409 = vst.msk [vmem:[#allocation2 + $0x30] sm:$0xff] %vm2402, %v2367
    %2410 = vst.msk [vmem:[#allocation2 + $0x38] sm:$0xff] %vm2402, %v2369
    %2411 = vst.msk [vmem:[#allocation2 + $0x40] sm:$0xff] %vm2402, %v2371
    %2412 = vst.msk [vmem:[#allocation2 + $0x48] sm:$0xff] %vm2402, %v2373
    %2413 = vst.msk [vmem:[#allocation2 + $0x50] sm:$0xff] %vm2402, %v2375
    %2414 = vst.msk [vmem:[#allocation2 + $0x58] sm:$0xff] %vm2402, %v2377
    %2415 = vst.msk [vmem:[#allocation2 + $0x60] sm:$0xff] %vm2402, %v2379
    %2416 = vst.msk [vmem:[#allocation2 + $0x68] sm:$0xff] %vm2402, %v2381
    %2417 = vst.msk [vmem:[#allocation2 + $0x70] sm:$0xff] %vm2402, %v2383
    %2418 = vst.msk [vmem:[#allocation2 + $0x78] sm:$0xff] %vm2402, %v2385
    %v2419 = vld [vmem:[#allocation2] sm:$0xff]
    %v2420 = vld [vmem:[#allocation2 + $0x8] sm:$0xff]
    %v2421 = vld [vmem:[#allocation2 + $0x10] sm:$0xff]
    %v2422 = vld [vmem:[#allocation2 + $0x18] sm:$0xff]
    %v2423 = vld [vmem:[#allocation2 + $0x20] sm:$0xff]
    %v2424 = vld [vmem:[#allocation2 + $0x28] sm:$0xff]
    %v2425 = vld [vmem:[#allocation2 + $0x30] sm:$0xff]
    %v2426 = vld [vmem:[#allocation2 + $0x38] sm:$0xff]
    %v2427 = vld [vmem:[#allocation2 + $0x40] sm:$0xff]
    %v2428 = vld [vmem:[#allocation2 + $0x48] sm:$0xff]
    %v2429 = vld [vmem:[#allocation2 + $0x50] sm:$0xff]
    %v2430 = vld [vmem:[#allocation2 + $0x58] sm:$0xff]
    %v2431 = vld [vmem:[#allocation2 + $0x60] sm:$0xff]
    %v2432 = vld [vmem:[#allocation2 + $0x68] sm:$0xff]
    %v2433 = vld [vmem:[#allocation2 + $0x70] sm:$0xff]
    %v2434 = vld [vmem:[#allocation2 + $0x78] sm:$0xff]
    %v2435 = vld [vmem:[%s6] sm:$0x1]
    %v2437 = vlaneseq
    %v2438 = vshrl.u32 %v2437, 7
    %v2439 = vsub.s32 0, %v2438
    %v2440 = vrot.slane %v2435, %v2439
    %v2442 = vadd.f32 %v32, %v2440
    %v2443 = vadd.f32 %v33, %v2440
    %v2444 = vadd.f32 %v34, %v2440
    %v2445 = vadd.f32 %v35, %v2440
    %v2446 = vadd.f32 %v36, %v2440
    %v2447 = vadd.f32 %v37, %v2440
    %v2448 = vadd.f32 %v38, %v2440
    %v2449 = vadd.f32 %v39, %v2440
    %v2450 = vadd.f32 %v40, %v2440
    %v2451 = vadd.f32 %v41, %v2440
    %v2452 = vadd.f32 %v42, %v2440
    %v2453 = vadd.f32 %v43, %v2440
    %v2454 = vadd.f32 %v44, %v2440
    %v2455 = vadd.f32 %v45, %v2440
    %v2456 = vadd.f32 %v46, %v2440
    %v2457 = vadd.f32 %v47, %v2440
    %v2458 = vpack.c.bf16 %v2420, %v2419
    %v2459 = vpack.c.bf16 %v2422, %v2421
    %v2460 = vpack.c.bf16 %v2424, %v2423
    %v2461 = vpack.c.bf16 %v2426, %v2425
    %v2462 = vpack.c.bf16 %v2428, %v2427
    %v2463 = vpack.c.bf16 %v2430, %v2429
    %v2464 = vpack.c.bf16 %v2432, %v2431
    %v2465 = vpack.c.bf16 %v2434, %v2433
    %v2466 = vld [vmem:[%s5] sm:$0xf]
    %v2467 = vld [vmem:[%s5 + $0x4] sm:$0xf]
    %v2468 = vld [vmem:[%s5 + $0x8] sm:$0xf]
    %v2469 = vld [vmem:[%s5 + $0xc] sm:$0xf]
    %v2474 = vunpack.c.l.b16 %v2466
    %v2475 = vunpack.c.l.b16 %v2467
    %v2476 = vunpack.c.l.b16 %v2468
    %v2477 = vunpack.c.l.b16 %v2469
    %v2478 = vpack.c.b16 %v2475, %v2474
    %v2479 = vpack.c.b16 %v2477, %v2476
    %vm2482 = vcmask 261120
    %v2484 = vsel %vm2482, %v2458, 0
    %v2487 = vsel %vm2482, %v2459, 0
    %v2490 = vsel %vm2482, %v2460, 0
    %v2493 = vsel %vm2482, %v2461, 0
    %v2496 = vsel %vm2482, %v2462, 0
    %v2499 = vsel %vm2482, %v2463, 0
    %v2502 = vsel %vm2482, %v2464, 0
    %v2505 = vsel %vm2482, %v2465, 0
    %2507 = vmatprep.subr.bf16.mxu0 0
    %2508 = vmatpush1.bf16.msra.mxu0 %v2478
    %2509 = vmatprep.subr.bf16.mxu0 0
    %2510 = vmatpush1.bf16.msra.mxu0 %v2479
    %2511 = vmatprep.subr.bf16.mxu0 0
    %2512 = vmatpush1.bf16.msra.mxu0 0
    %2513 = vmatprep.subr.bf16.mxu0 0
    %2514 = vmatpush1.bf16.msra.mxu0 0
    %2515 = vmatprep.subr.bf16.mxu0 0
    %2516 = vmatpush1.bf16.msra.mxu0 0
    %2517 = vmatprep.subr.bf16.mxu0 0
    %2518 = vmatpush1.bf16.msra.mxu0 0
    %2519 = vmatprep.subr.bf16.mxu0 0
    %2520 = vmatpush1.bf16.msra.mxu0 0
    %2521 = vmatprep.subr.bf16.mxu0 0
    %2522 = vmatpush1.bf16.msra.mxu0 0
    %2523 = vmatprep.subr.bf16.mxu0 0
    %2524 = vmatpush1.bf16.msra.mxu0 0
    %2525 = vmatprep.subr.bf16.mxu0 0
    %2526 = vmatpush1.bf16.msra.mxu0 0
    %2527 = vmatprep.subr.bf16.mxu0 0
    %2528 = vmatpush1.bf16.msra.mxu0 0
    %2529 = vmatprep.subr.bf16.mxu0 0
    %2530 = vmatpush1.bf16.msra.mxu0 0
    %2531 = vmatprep.subr.bf16.mxu0 0
    %2532 = vmatpush1.bf16.msra.mxu0 0
    %2533 = vmatprep.subr.bf16.mxu0 0
    %2534 = vmatpush1.bf16.msra.mxu0 0
    %2535 = vmatprep.subr.bf16.mxu0 0
    %2536 = vmatpush1.bf16.msra.mxu0 0
    %2537 = vmatprep.subr.bf16.mxu0 0
    %2538 = vmatpush1.bf16.msra.mxu0 0
    %2539 = vmatprep.mubr.bf16.mxu0 0
    %2540 = vmatmul.mubr.bf16.gmra.mrb[0].mxu0 %v2484
    %v2541 = vpop.f32.mrb[0].mxu0
    %v2542 = vadd.f32 0.0, %v2541
    %v2543 = vpop.f32.mrb[0].mxu0
    %v2544 = vpop.f32.mrb[0].mxu0
    %v2545 = vadd.f32 0.0, %v2544
    %v2546 = vpop.f32.mrb[0].mxu0
    %2547 = vmatprep.mubr.bf16.mxu0 0
    %2548 = vmatmul.mubr.bf16.gmra.mrb[0].mxu0 %v2487
    %v2549 = vpop.f32.mrb[0].mxu0
    %v2550 = vadd.f32 0.0, %v2549
    %v2551 = vpop.f32.mrb[0].mxu0
    %v2552 = vpop.f32.mrb[0].mxu0
    %v2553 = vadd.f32 0.0, %v2552
    %v2554 = vpop.f32.mrb[0].mxu0
    %2555 = vmatprep.mubr.bf16.mxu0 0
    %2556 = vmatmul.mubr.bf16.gmra.mrb[0].mxu0 %v2490
    %v2557 = vpop.f32.mrb[0].mxu0
    %v2558 = vadd.f32 0.0, %v2557
    %v2559 = vpop.f32.mrb[0].mxu0
    %v2560 = vpop.f32.mrb[0].mxu0
    %v2561 = vadd.f32 0.0, %v2560
    %v2562 = vpop.f32.mrb[0].mxu0
    %2563 = vmatprep.mubr.bf16.mxu0 0
    %2564 = vmatmul.mubr.bf16.gmra.mrb[0].mxu0 %v2493
    %v2565 = vpop.f32.mrb[0].mxu0
    %v2566 = vadd.f32 0.0, %v2565
    %v2567 = vpop.f32.mrb[0].mxu0
    %v2568 = vpop.f32.mrb[0].mxu0
    %v2569 = vadd.f32 0.0, %v2568
    %v2570 = vpop.f32.mrb[0].mxu0
    %2571 = vmatprep.mubr.bf16.mxu0 0
    %2572 = vmatmul.mubr.bf16.gmra.mrb[0].mxu0 %v2496
    %v2573 = vpop.f32.mrb[0].mxu0
    %v2574 = vadd.f32 0.0, %v2573
    %v2575 = vpop.f32.mrb[0].mxu0
    %v2576 = vpop.f32.mrb[0].mxu0
    %v2577 = vadd.f32 0.0, %v2576
    %v2578 = vpop.f32.mrb[0].mxu0
    %2579 = vmatprep.mubr.bf16.mxu0 0
    %2580 = vmatmul.mubr.bf16.gmra.mrb[0].mxu0 %v2499
    %v2581 = vpop.f32.mrb[0].mxu0
    %v2582 = vadd.f32 0.0, %v2581
    %v2583 = vpop.f32.mrb[0].mxu0
    %v2584 = vpop.f32.mrb[0].mxu0
    %v2585 = vadd.f32 0.0, %v2584
    %v2586 = vpop.f32.mrb[0].mxu0
    %2587 = vmatprep.mubr.bf16.mxu0 0
    %2588 = vmatmul.mubr.bf16.gmra.mrb[0].mxu0 %v2502
    %v2589 = vpop.f32.mrb[0].mxu0
    %v2590 = vadd.f32 0.0, %v2589
    %v2591 = vpop.f32.mrb[0].mxu0
    %v2592 = vpop.f32.mrb[0].mxu0
    %v2593 = vadd.f32 0.0, %v2592
    %v2594 = vpop.f32.mrb[0].mxu0
    %2595 = vmatprep.mubr.bf16.mxu0 0
    %2596 = vmatmul.mubr.bf16.gmra.mrb[0].mxu0 %v2505
    %v2597 = vpop.f32.mrb[0].mxu0
    %v2598 = vadd.f32 0.0, %v2597
    %v2599 = vpop.f32.mrb[0].mxu0
    %v2600 = vpop.f32.mrb[0].mxu0
    %v2601 = vadd.f32 0.0, %v2600
    %v2602 = vpop.f32.mrb[0].mxu0
    %2603 = vdwg.mxu0
    %v2604 = vadd.f32 %v2442, %v2542
    %v2605 = vadd.f32 %v2443, %v2545
    %v2606 = vadd.f32 %v2444, %v2550
    %v2607 = vadd.f32 %v2445, %v2553
    %v2608 = vadd.f32 %v2446, %v2558
    %v2609 = vadd.f32 %v2447, %v2561
    %v2610 = vadd.f32 %v2448, %v2566
    %v2611 = vadd.f32 %v2449, %v2569
    %v2612 = vadd.f32 %v2450, %v2574
    %v2613 = vadd.f32 %v2451, %v2577
    %v2614 = vadd.f32 %v2452, %v2582
    %v2615 = vadd.f32 %v2453, %v2585
    %v2616 = vadd.f32 %v2454, %v2590
    %v2617 = vadd.f32 %v2455, %v2593
    %v2618 = vadd.f32 %v2456, %v2598
    %v2619 = vadd.f32 %v2457, %v2601
    %2620 = vst [vmem:[#allocation3] sm:$0xff] %v2604
    %2621 = vst [vmem:[#allocation3 + $0x8] sm:$0xff] %v2605
    %2622 = vst [vmem:[#allocation3 + $0x10] sm:$0xff] %v2606
    %2623 = vst [vmem:[#allocation3 + $0x18] sm:$0xff] %v2607
    %2624 = vst [vmem:[#allocation3 + $0x20] sm:$0xff] %v2608
    %2625 = vst [vmem:[#allocation3 + $0x28] sm:$0xff] %v2609
    %2626 = vst [vmem:[#allocation3 + $0x30] sm:$0xff] %v2610
    %2627 = vst [vmem:[#allocation3 + $0x38] sm:$0xff] %v2611
    %2628 = vst [vmem:[#allocation3 + $0x40] sm:$0xff] %v2612
    %2629 = vst [vmem:[#allocation3 + $0x48] sm:$0xff] %v2613
    %2630 = vst [vmem:[#allocation3 + $0x50] sm:$0xff] %v2614
    %2631 = vst [vmem:[#allocation3 + $0x58] sm:$0xff] %v2615
    %2632 = vst [vmem:[#allocation3 + $0x60] sm:$0xff] %v2616
    %2633 = vst [vmem:[#allocation3 + $0x68] sm:$0xff] %v2617
    %2634 = vst [vmem:[#allocation3 + $0x70] sm:$0xff] %v2618
    %2635 = vst [vmem:[#allocation3 + $0x78] sm:$0xff] %v2619
    %vm2636 = vcmp.ge.f32.partialorder %v232, 0.0
    %vm2637 = vcmp.ge.f32.partialorder %v233, 0.0
    %vm2638 = vcmp.ge.f32.partialorder %v234, 0.0
    %vm2639 = vcmp.ge.f32.partialorder %v235, 0.0
    %vm2640 = vcmp.ge.f32.partialorder %v236, 0.0
    %vm2641 = vcmp.ge.f32.partialorder %v237, 0.0
    %vm2642 = vcmp.ge.f32.partialorder %v238, 0.0
    %vm2643 = vcmp.ge.f32.partialorder %v239, 0.0
    %vm2644 = vcmp.ge.f32.partialorder %v240, 0.0
    %vm2645 = vcmp.ge.f32.partialorder %v241, 0.0
    %vm2646 = vcmp.ge.f32.partialorder %v242, 0.0
    %vm2647 = vcmp.ge.f32.partialorder %v243, 0.0
    %vm2648 = vcmp.ge.f32.partialorder %v244, 0.0
    %vm2649 = vcmp.ge.f32.partialorder %v245, 0.0
    %vm2650 = vcmp.ge.f32.partialorder %v246, 0.0
    %vm2651 = vcmp.ge.f32.partialorder %v247, 0.0
    %v2652 = vsel %vm2636, 1, 0
    %v2653 = vsel %vm2637, 1, 0
    %v2654 = vsel %vm2638, 1, 0
    %v2655 = vsel %vm2639, 1, 0
    %v2656 = vsel %vm2640, 1, 0
    %v2657 = vsel %vm2641, 1, 0
    %v2658 = vsel %vm2642, 1, 0
    %v2659 = vsel %vm2643, 1, 0
    %v2660 = vsel %vm2644, 1, 0
    %v2661 = vsel %vm2645, 1, 0
    %v2662 = vsel %vm2646, 1, 0
    %v2663 = vsel %vm2647, 1, 0
    %v2664 = vsel %vm2648, 1, 0
    %v2665 = vsel %vm2649, 1, 0
    %v2666 = vsel %vm2650, 1, 0
    %v2667 = vsel %vm2651, 1, 0
    %v2668 = vcvt.s32.f32 %v2652
    %v2669 = vcvt.s32.f32 %v2653
    %v2670 = vcvt.s32.f32 %v2654
    %v2671 = vcvt.s32.f32 %v2655
    %v2672 = vcvt.s32.f32 %v2656
    %v2673 = vcvt.s32.f32 %v2657
    %v2674 = vcvt.s32.f32 %v2658
    %v2675 = vcvt.s32.f32 %v2659
    %v2676 = vcvt.s32.f32 %v2660
    %v2677 = vcvt.s32.f32 %v2661
    %v2678 = vcvt.s32.f32 %v2662
    %v2679 = vcvt.s32.f32 %v2663
    %v2680 = vcvt.s32.f32 %v2664
    %v2681 = vcvt.s32.f32 %v2665
    %v2682 = vcvt.s32.f32 %v2666
    %v2683 = vcvt.s32.f32 %v2667
    %2685 = vset.pattern.permute.xlu0 0
    %2686 = vperm.xlu0 %2685, %v2668
    %v2687 = vpop.permute.xlu0 %2686
    %2690 = vset.pattern.permute.xlu0 0
    %2691 = vperm.xlu0 %2690, %v2669
    %v2692 = vpop.permute.xlu0 %2691
    %2695 = vset.pattern.permute.xlu0 0
    %2696 = vperm.xlu0 %2695, %v2670
    %v2697 = vpop.permute.xlu0 %2696
    %2700 = vset.pattern.permute.xlu0 0
    %2701 = vperm.xlu0 %2700, %v2671
    %v2702 = vpop.permute.xlu0 %2701
    %2705 = vset.pattern.permute.xlu0 0
    %2706 = vperm.xlu0 %2705, %v2672
    %v2707 = vpop.permute.xlu0 %2706
    %2710 = vset.pattern.permute.xlu0 0
    %2711 = vperm.xlu0 %2710, %v2673
    %v2712 = vpop.permute.xlu0 %2711
    %2715 = vset.pattern.permute.xlu0 0
    %2716 = vperm.xlu0 %2715, %v2674
    %v2717 = vpop.permute.xlu0 %2716
    %2720 = vset.pattern.permute.xlu0 0
    %2721 = vperm.xlu0 %2720, %v2675
    %v2722 = vpop.permute.xlu0 %2721
    %2725 = vset.pattern.permute.xlu0 0
    %2726 = vperm.xlu0 %2725, %v2676
    %v2727 = vpop.permute.xlu0 %2726
    %2730 = vset.pattern.permute.xlu0 0
    %2731 = vperm.xlu0 %2730, %v2677
    %v2732 = vpop.permute.xlu0 %2731
    %2735 = vset.pattern.permute.xlu0 0
    %2736 = vperm.xlu0 %2735, %v2678
    %v2737 = vpop.permute.xlu0 %2736
    %2740 = vset.pattern.permute.xlu0 0
    %2741 = vperm.xlu0 %2740, %v2679
    %v2742 = vpop.permute.xlu0 %2741
    %2745 = vset.pattern.permute.xlu0 0
    %2746 = vperm.xlu0 %2745, %v2680
    %v2747 = vpop.permute.xlu0 %2746
    %2750 = vset.pattern.permute.xlu0 0
    %2751 = vperm.xlu0 %2750, %v2681
    %v2752 = vpop.permute.xlu0 %2751
    %2755 = vset.pattern.permute.xlu0 0
    %2756 = vperm.xlu0 %2755, %v2682
    %v2757 = vpop.permute.xlu0 %2756
    %2760 = vset.pattern.permute.xlu0 0
    %2761 = vperm.xlu0 %2760, %v2683
    %v2762 = vpop.permute.xlu0 %2761
    %v2764 = vmul.f32 %v2604, %v2687
    %v2765 = vmul.f32 %v2605, %v2692
    %v2766 = vmul.f32 %v2606, %v2697
    %v2767 = vmul.f32 %v2607, %v2702
    %v2768 = vmul.f32 %v2608, %v2707
    %v2769 = vmul.f32 %v2609, %v2712
    %v2770 = vmul.f32 %v2610, %v2717
    %v2771 = vmul.f32 %v2611, %v2722
    %v2772 = vmul.f32 %v2612, %v2727
    %v2773 = vmul.f32 %v2613, %v2732
    %v2774 = vmul.f32 %v2614, %v2737
    %v2775 = vmul.f32 %v2615, %v2742
    %v2776 = vmul.f32 %v2616, %v2747
    %v2777 = vmul.f32 %v2617, %v2752
    %v2778 = vmul.f32 %v2618, %v2757
    %v2779 = vmul.f32 %v2619, %v2762
    %v2780 = vadd.f32 %v2764, %v2765
    %v2781 = vadd.f32 %v2780, %v2766
    %v2782 = vadd.f32 %v2781, %v2767
    %v2783 = vadd.f32 %v2782, %v2768
    %v2784 = vadd.f32 %v2783, %v2769
    %v2785 = vadd.f32 %v2784, %v2770
    %v2786 = vadd.f32 %v2785, %v2771
    %v2787 = vadd.f32 %v2786, %v2772
    %v2788 = vadd.f32 %v2787, %v2773
    %v2789 = vadd.f32 %v2788, %v2774
    %v2790 = vadd.f32 %v2789, %v2775
    %v2791 = vadd.f32 %v2790, %v2776
    %v2792 = vadd.f32 %v2791, %v2777
    %v2793 = vadd.f32 %v2792, %v2778
    %v2794 = vadd.f32 %v2793, %v2779
    %v2795 = vrot.slane %v2794, 4
    %v2796 = vadd.f32 %v2794, %v2795
    %v2797 = vrot.slane %v2796, 2
    %v2798 = vadd.f32 %v2796, %v2797
    %v2799 = vrot.slane %v2798, 1
    %v2800 = vadd.f32 %v2798, %v2799
    %2801 = vst [vmem:[#allocation5] sm:$0x1] %v2800
    %v2802 = vmul.f32 %v2764, %v2764
    %v2803 = vmul.f32 %v2765, %v2765
    %v2804 = vmul.f32 %v2766, %v2766
    %v2805 = vmul.f32 %v2767, %v2767
    %v2806 = vmul.f32 %v2768, %v2768
    %v2807 = vmul.f32 %v2769, %v2769
    %v2808 = vmul.f32 %v2770, %v2770
    %v2809 = vmul.f32 %v2771, %v2771
    %v2810 = vmul.f32 %v2772, %v2772
    %v2811 = vmul.f32 %v2773, %v2773
    %v2812 = vmul.f32 %v2774, %v2774
    %v2813 = vmul.f32 %v2775, %v2775
    %v2814 = vmul.f32 %v2776, %v2776
    %v2815 = vmul.f32 %v2777, %v2777
    %v2816 = vmul.f32 %v2778, %v2778
    %v2817 = vmul.f32 %v2779, %v2779
    %v2818 = vadd.f32 %v2802, %v2803
    %v2819 = vadd.f32 %v2818, %v2804
    %v2820 = vadd.f32 %v2819, %v2805
    %v2821 = vadd.f32 %v2820, %v2806
    %v2822 = vadd.f32 %v2821, %v2807
    %v2823 = vadd.f32 %v2822, %v2808
    %v2824 = vadd.f32 %v2823, %v2809
    %v2825 = vadd.f32 %v2824, %v2810
    %v2826 = vadd.f32 %v2825, %v2811
    %v2827 = vadd.f32 %v2826, %v2812
    %v2828 = vadd.f32 %v2827, %v2813
    %v2829 = vadd.f32 %v2828, %v2814
    %v2830 = vadd.f32 %v2829, %v2815
    %v2831 = vadd.f32 %v2830, %v2816
    %v2832 = vadd.f32 %v2831, %v2817
    %v2833 = vrot.slane %v2832, 4
    %v2834 = vadd.f32 %v2832, %v2833
    %v2835 = vrot.slane %v2834, 2
    %v2836 = vadd.f32 %v2834, %v2835
    %v2837 = vrot.slane %v2836, 1
    %v2838 = vadd.f32 %v2836, %v2837
    %2839 = vst [vmem:[#allocation7] sm:$0x1] %v2838
    // Predicated region
    $region30: #{tpu_custom_call.1} parent=1 // pred_check
      _
    $region31: #{tpu_custom_call.1} parent=1 // pred_check_branch
      %2841 = sbr.rel (0) target = $region33
    $region32: #{tpu_custom_call.1} parent=1 // pred_region
      %s2843 = ssub.s32 2048, 2048
      %2844 = vsyncadd [#allocation4], %s2843
      %s2845 = sshll.u32 [#allocation3], 4
      %s2846 = int_to_ptr.vmem [resolvable:$true] %s2845
      %2851 = dma.vmem_to_hbm [thread:$0]  %s2846, 2048, %s7, [#allocation4], 128, 128, 8
    $region33: #{tpu_custom_call.1} parent=1 // pred_fallthru
      _
    // Predicated region
    $region34: #{tpu_custom_call.1} parent=1 // pred_check
      _
    $region35: #{tpu_custom_call.1} parent=1 // pred_check_branch
      %2853 = sbr.rel (0) target = $region37
    $region36: #{tpu_custom_call.1} parent=1 // pred_region
      %s2855 = ssub.s32 16, 16
      %2856 = vsyncadd [#allocation6], %s2855
      %s2858 = sshll.u32 [#allocation5], 4
      %s2859 = int_to_ptr.vmem [resolvable:$true] %s2858
      %2861 = dma.vmem_to_hbm [thread:$0]  %s2859, 16, %s8, [#allocation6]
    $region37: #{tpu_custom_call.1} parent=1 // pred_fallthru
      _
    // Predicated region
    $region38: #{tpu_custom_call.1} parent=1 // pred_check
      _
    $region39: #{tpu_custom_call.1} parent=1 // pred_check_branch
      %2863 = sbr.rel (0) target = $region41
    $region40: #{tpu_custom_call.1} parent=1 // pred_region
      %s2865 = ssub.s32 16, 16
      %2866 = vsyncadd [#allocation6], %s2865
      %s2868 = sshll.u32 [#allocation7], 4
      %s2869 = int_to_ptr.vmem [resolvable:$true] %s2868
      %2871 = dma.vmem_to_hbm [thread:$0]  %s2869, 16, %s9, [#allocation6]
    $region41: #{tpu_custom_call.1} parent=1 // pred_fallthru
      _
    // Predicated region
    $region42: #{tpu_custom_call.1} parent=1 // pred_check
      _
    $region43: #{tpu_custom_call.1} parent=1 // pred_check_branch
      %2873 = sbr.rel (0) target = $region45
    $region44: #{tpu_custom_call.1} parent=1 // pred_region
      %2874 = dma.done [#allocation4], 2048
    $region45: #{tpu_custom_call.1} parent=1 // pred_fallthru
      _
    // Predicated region
    $region46: #{tpu_custom_call.1} parent=1 // pred_check
      _
    $region47: #{tpu_custom_call.1} parent=1 // pred_check_branch
      %2876 = sbr.rel (0) target = $region49
    $region48: #{tpu_custom_call.1} parent=1 // pred_region
      %2877 = dma.done [#allocation6], 16
    $region49: #{tpu_custom_call.1} parent=1 // pred_fallthru
      _
    // Predicated region
    $region50: #{tpu_custom_call.1} parent=1 // pred_check
      _
    $region51: #{tpu_custom_call.1} parent=1 // pred_check_branch
      %2879 = sbr.rel (0) target = $region53
    $region52: #{tpu_custom_call.1} parent=1 // pred_region
      %2880 = dma.done [#allocation6], 16
    $region53: #{tpu_custom_call.1} parent=1 // pred_fallthru
      _
    %2881 = vsyncpa [#allocation4], 1
    %2882 = vsyncpa [#allocation6], 1

</llo_original>
